<compile_context>
chip_gen: v5e
topology: v5e:2x2
jax: 0.10.0
libtpu: 0.0.40
codegen_flags: <defaults>
</compile_context>

<pallas_src>
import functools

import jax
import jax.numpy as jnp
from jax import lax
from jax.experimental import pallas as pl
from jax.experimental.pallas import tpu as pltpu


# ----------------------------------------------------------------------------
# In-kernel helpers (all operate on (C, H*W) lane-dense f32 values)
# ----------------------------------------------------------------------------
def _shift_read(x, k):
    """y[..., p] = x[..., (p + k) % n] for static int k (circular lane shift)."""
    n = x.shape[-1]
    s = (-k) % n                      # pltpu.roll follows jnp.roll semantics
    if s == 0:
        return x
    return pltpu.roll(x, s, 1)


def _conv3x3_cin1(xrow, w_ref, b_ref, mask_ref, col_ref, offsets, relu):
    """3x3 conv, Cin=1. xrow (1,HW); w_ref (cout,9); b_ref (cout,1); mask (9,HW)."""
    for t, k in enumerate(offsets):
        col_ref[t:t + 1, :] = _shift_read(xrow, k) * mask_ref[t:t + 1, :]
    out = jnp.dot(w_ref[...], col_ref[0:9, :],
                  preferred_element_type=jnp.float32) + b_ref[...]
    return jnp.maximum(out, 0.0) if relu else out


def _conv3x3_cin16(act, w_ref, b_ref, mask_ref, col_ref, offsets, relu):
    """3x3 conv, Cin=16, as ONE K=144 matmul. act (16,HW); w_ref (cout,144)."""
    for t, k in enumerate(offsets):
        col_ref[t * 16:(t + 1) * 16, :] = (
            _shift_read(act, k) * mask_ref[t:t + 1, :])
    out = jnp.dot(w_ref[...], col_ref[...],
                  preferred_element_type=jnp.float32) + b_ref[...]
    return jnp.maximum(out, 0.0) if relu else out


def _maxpool2x2_dilated(a, W):
    """2x2 max pool kept on the full grid: valid values sit at even (h, w)."""
    m = jnp.maximum(a, _shift_read(a, 1))          # pair max along w
    return jnp.maximum(m, _shift_read(m, W))       # pair max along h


def _upsample2x_from_dilated(a, par_ref, W):
    """Nearest 2x upsample of a dilated (even-position) activation."""
    up = a * par_ref[0:1, :]
    up = up + _shift_read(a, -1) * par_ref[1:2, :]
    up = up + _shift_read(a, -W) * par_ref[2:3, :]
    up = up + _shift_read(a, -(W + 1)) * par_ref[3:4, :]
    return up


def _cae_kernel(x_ref,
                w1, b1, w2, b2, w3, b3, w4, b4, w5, b5, w6, b6,
                m_std, m_dil, m_par,
                o_ref,
                col_ref,
                *, W, B):
    # Flattened-index deltas for the 9 taps of a 3x3 "same" conv.
    off_std = tuple((t // 3 - 1) * W + (t % 3 - 1) for t in range(9))
    off_dil = tuple(2 * o for o in off_std)

    for b in range(B):                                              # unrolled
        x_b = x_ref[b]                                              # (1, HW)
        # ------------------------------ encoder -------------------------------
        a1 = _conv3x3_cin1(x_b, w1, b1, m_std, col_ref, off_std, True)   # (16,HW)
        a2 = _conv3x3_cin16(a1, w2, b2, m_std, col_ref, off_std, True)   # (16,HW)
        pd = _maxpool2x2_dilated(a2, W)                                   # dilated
        a3 = _conv3x3_cin16(pd, w3, b3, m_dil, col_ref, off_dil, False)  # (1,HW)
        # ------------------------------ decoder -------------------------------
        a4 = _conv3x3_cin1(a3, w4, b4, m_dil, col_ref, off_dil, True)    # (16,HW)
        up = _upsample2x_from_dilated(a4, m_par, W)                       # (16,HW)
        a5 = _conv3x3_cin16(up, w5, b5, m_std, col_ref, off_std, True)   # (16,HW)
        a6 = _conv3x3_cin16(a5, w6, b6, m_std, col_ref, off_std, False)  # (1,HW)
        o_ref[b] = a6.astype(o_ref.dtype)


# ----------------------------------------------------------------------------
# Host-side constants: padding / parity masks (tiny: O(H*W) each)
# ----------------------------------------------------------------------------
def _tap_masks(H, W, dil):
    p = jnp.arange(H * W)
    h, w = p // W, p % W
    rows = []
    for t in range(9):
        dh, dw = t // 3 - 1, t % 3 - 1
        hh, ww = h + dil * dh, w + dil * dw
        rows.append(((hh >= 0) & (hh < H) & (ww >= 0) & (ww < W))
                    .astype(jnp.float32))
    return jnp.stack(rows)                      # (9, H*W)


def _parity_masks(H, W):
    p = jnp.arange(H * W)
    h, w = p // W, p % W
    rows = [((h % 2 == r) & (w % 2 == s)).astype(jnp.float32)
            for r in range(2) for s in range(2)]
    return jnp.stack(rows)                      # (4, H*W)


def _pick_batch_block(n):
    """>=2 grid steps when possible (keeps both v7x TensorCores busy)."""
    target = max(1, min(8, n // 2))
    for b in range(target, 0, -1):
        if n % b == 0:
            return b
    return 1


# ----------------------------------------------------------------------------
# Parameters (deterministic, PyTorch-default-style uniform init), HWIO layout
# ----------------------------------------------------------------------------
def _init_conv(key, cin, cout):
    kw, kb = jax.random.split(key)
    bound = 1.0 / jnp.sqrt(jnp.float32(cin * 9))
    w = jax.random.uniform(kw, (3, 3, cin, cout), jnp.float32, -bound, bound)
    b = jax.random.uniform(kb, (cout,), jnp.float32, -bound, bound)
    return w, b


def init_cae_params(key):
    ks = jax.random.split(key, 6)
    return {
        "enc1": _init_conv(ks[0], 1, 16),
        "enc2": _init_conv(ks[1], 16, 16),
        "enc3": _init_conv(ks[2], 16, 1),
        "dec1": _init_conv(ks[3], 1, 16),
        "dec2": _init_conv(ks[4], 16, 16),
        "dec3": _init_conv(ks[5], 16, 1),
    }


def _flat_w(params, name):
    w, b = params[name]
    cin, cout = w.shape[2], w.shape[3]
    wT = w.reshape(9 * cin, cout).T             # (cout, 9*cin), col = t*cin + ci
    return wT, b.reshape(cout, 1)


# ----------------------------------------------------------------------------
# Forward pass (matches CAE.forward), one fused pallas_call
# ----------------------------------------------------------------------------
def cae_forward(params, x_nchw, *, batch_block=None):
    """x_nchw: (N, 1, H, W) float32 like the PyTorch module. Returns (N, 1, H, W)."""
    N, C, H, W = x_nchw.shape
    assert C == 1 and H % 2 == 0 and W % 2 == 0
    HW = H * W
    assert HW % 128 == 0, "this fused kernel requires H*W to be a multiple of 128"
    B = batch_block if batch_block is not None else _pick_batch_block(N)
    assert N % B == 0

    x = x_nchw.reshape(N, 1, HW)                # lane-dense: H*W on the lane axis

    w1, b1 = _flat_w(params, "enc1"); w2, b2 = _flat_w(params, "enc2")
    w3, b3 = _flat_w(params, "enc3"); w4, b4 = _flat_w(params, "dec1")
    w5, b5 = _flat_w(params, "dec2"); w6, b6 = _flat_w(params, "dec3")

    m_std = _tap_masks(H, W, 1)                 # (9, HW) zero-padding masks
    m_dil = _tap_masks(H, W, 2)                 # (9, HW) dilated (half-res) masks
    m_par = _parity_masks(H, W)                 # (4, HW) parity masks for upsample

    def const_spec(a):
        nd = a.ndim
        return pl.BlockSpec(a.shape, lambda i, _nd=nd: (0,) * _nd)

    img_spec = pl.BlockSpec((B, 1, HW), lambda i: (i, 0, 0))

    inputs = (x, w1, b1, w2, b2, w3, b3, w4, b4, w5, b5, w6, b6,
              m_std, m_dil, m_par)

    # Real conv FLOPs only (conv3/conv4 are evaluated dilated on the full grid).
    flops = 2 * N * HW * (9 * 16 + 144 * 16 + 144 + 9 * 16 + 144 * 16 + 144)
    bytes_accessed = sum(int(a.size) * 4 for a in inputs) + N * HW * 4

    kernel = functools.partial(_cae_kernel, W=W, B=B)
    out = pl.pallas_call(
        kernel,
        out_shape=jax.ShapeDtypeStruct((N, 1, HW), x.dtype),
        grid=(N // B,),
        in_specs=[img_spec] + [const_spec(a) for a in inputs[1:]],
        out_specs=img_spec,
        scratch_shapes=[pltpu.VMEM((144, HW), jnp.float32)],   # shared im2col slab
        compiler_params=pltpu.CompilerParams(
            dimension_semantics=("parallel",),
            vmem_limit_bytes=16 * 1024 * 1024),
        cost_estimate=pl.CostEstimate(flops=flops, transcendentals=0,
                                      bytes_accessed=bytes_accessed),
    )(*inputs)
    return out.reshape(N, 1, H, W)


# ----------------------------------------------------------------------------
# Pure-JAX reference for correctness checking
# ----------------------------------------------------------------------------
def _ref_conv(x, w, b, relu):
    y = lax.conv_general_dilated(
        x, w, window_strides=(1, 1), padding="SAME",
        dimension_numbers=("NHWC", "HWIO", "NHWC"))
    y = y + b[None, None, None, :]
    return jnp.maximum(y, 0.0) if relu else y


def cae_reference(params, x_nchw):
    x = jnp.transpose(x_nchw, (0, 2, 3, 1))
    h = _ref_conv(x, *params["enc1"], True)
    h = _ref_conv(h, *params["enc2"], True)
    h = lax.reduce_window(h, -jnp.inf, lax.max,
                          (1, 2, 2, 1), (1, 2, 2, 1), "VALID")
    h = _ref_conv(h, *params["enc3"], False)
    h = _ref_conv(h, *params["dec1"], True)
    h = jnp.repeat(jnp.repeat(h, 2, axis=1), 2, axis=2)
    h = _ref_conv(h, *params["dec2"], True)
    h = _ref_conv(h, *params["dec3"], False)
    return jnp.transpose(h, (0, 3, 1, 2))


# ----------------------------------------------------------------------------
if __name__ == "__main__":
    key = jax.random.PRNGKey(0)
    kp, kx = jax.random.split(key)
    params = init_cae_params(kp)
    x = jax.random.normal(kx, (2, 1, 16, 16), dtype=jnp.float32)

    out = jax.jit(cae_forward)(params, x)
    out = jax.block_until_ready(out)

    assert out.shape == (2, 1, 16, 16), out.shape
    ref = cae_reference(params, x)
    assert jnp.allclose(out, ref, atol=1e-4, rtol=1e-4), "mismatch vs reference"

    print("KERNEL_OK")
</pallas_src>

<mosaic_0001>
module attributes {stable_mosaic.version = 11 : i64} {
  func.func @_cae_kernel(%arg0: i32, %arg1: memref<1x1x256xf32, #tpu.memory_space<vmem>>, %arg2: memref<16x9xf32, #tpu.memory_space<vmem>>, %arg3: memref<16x1xf32, #tpu.memory_space<vmem>>, %arg4: memref<16x144xf32, #tpu.memory_space<vmem>>, %arg5: memref<16x1xf32, #tpu.memory_space<vmem>>, %arg6: memref<1x144xf32, #tpu.memory_space<vmem>>, %arg7: memref<1x1xf32, #tpu.memory_space<vmem>>, %arg8: memref<16x9xf32, #tpu.memory_space<vmem>>, %arg9: memref<16x1xf32, #tpu.memory_space<vmem>>, %arg10: memref<16x144xf32, #tpu.memory_space<vmem>>, %arg11: memref<16x1xf32, #tpu.memory_space<vmem>>, %arg12: memref<1x144xf32, #tpu.memory_space<vmem>>, %arg13: memref<1x1xf32, #tpu.memory_space<vmem>>, %arg14: memref<9x256xf32, #tpu.memory_space<vmem>>, %arg15: memref<9x256xf32, #tpu.memory_space<vmem>>, %arg16: memref<4x256xf32, #tpu.memory_space<vmem>>, %arg17: memref<1x1x256xf32, #tpu.memory_space<vmem>>, %arg18: memref<144x256xf32, #tpu.memory_space<vmem>>) attributes {dimension_semantics = [#tpu.dimension_semantics<parallel>], iteration_bounds = array<i64: 2>, scalar_prefetch = 0 : i64, scratch_operands = 1 : i64, tpu.core_type = #tpu.core_type<tc>, window_params = [{transform_indices = @transform_0, window_bounds = array<i64: 1, 1, 256>}, {pipeline_mode = #tpu.pipeline_mode<synchronous>, transform_indices = @transform_1, window_bounds = array<i64: 16, 9>}, {pipeline_mode = #tpu.pipeline_mode<synchronous>, transform_indices = @transform_2, window_bounds = array<i64: 16, 1>}, {pipeline_mode = #tpu.pipeline_mode<synchronous>, transform_indices = @transform_3, window_bounds = array<i64: 16, 144>}, {pipeline_mode = #tpu.pipeline_mode<synchronous>, transform_indices = @transform_4, window_bounds = array<i64: 16, 1>}, {pipeline_mode = #tpu.pipeline_mode<synchronous>, transform_indices = @transform_5, window_bounds = array<i64: 1, 144>}, {pipeline_mode = #tpu.pipeline_mode<synchronous>, transform_indices = @transform_6, window_bounds = array<i64: 1, 1>}, {pipeline_mode = #tpu.pipeline_mode<synchronous>, transform_indices = @transform_7, window_bounds = array<i64: 16, 9>}, {pipeline_mode = #tpu.pipeline_mode<synchronous>, transform_indices = @transform_8, window_bounds = array<i64: 16, 1>}, {pipeline_mode = #tpu.pipeline_mode<synchronous>, transform_indices = @transform_9, window_bounds = array<i64: 16, 144>}, {pipeline_mode = #tpu.pipeline_mode<synchronous>, transform_indices = @transform_10, window_bounds = array<i64: 16, 1>}, {pipeline_mode = #tpu.pipeline_mode<synchronous>, transform_indices = @transform_11, window_bounds = array<i64: 1, 144>}, {pipeline_mode = #tpu.pipeline_mode<synchronous>, transform_indices = @transform_12, window_bounds = array<i64: 1, 1>}, {pipeline_mode = #tpu.pipeline_mode<synchronous>, transform_indices = @transform_13, window_bounds = array<i64: 9, 256>}, {pipeline_mode = #tpu.pipeline_mode<synchronous>, transform_indices = @transform_14, window_bounds = array<i64: 9, 256>}, {pipeline_mode = #tpu.pipeline_mode<synchronous>, transform_indices = @transform_15, window_bounds = array<i64: 4, 256>}, {transform_indices = @transform_16, window_bounds = array<i64: 1, 1, 256>}]} {
    %c0 = arith.constant 0 : index
    %c0_0 = arith.constant 0 : index
    %c0_1 = arith.constant 0 : index
    %0 = vector.load %arg1[%c0, %c0_0, %c0_1] : memref<1x1x256xf32, #tpu.memory_space<vmem>>, vector<1x1x256xf32>
    %1 = vector.shape_cast %0 : vector<1x1x256xf32> to vector<1x256xf32>
    %c17_i32 = arith.constant 17 : i32
    %2 = tpu.dynamic_rotate %1 by %c17_i32 dim 1 : vector<1x256xf32>, i32 -> vector<1x256xf32>
    %c0_2 = arith.constant 0 : index
    %c0_3 = arith.constant 0 : index
    %3 = vector.load %arg14[%c0_2, %c0_3] : memref<9x256xf32, #tpu.memory_space<vmem>>, vector<1x256xf32>
    %4 = arith.mulf %2, %3 : vector<1x256xf32>
    %c0_4 = arith.constant 0 : index
    %c0_5 = arith.constant 0 : index
    %5 = vector.load %arg18[%c0_4, %c0_5] : memref<144x256xf32, #tpu.memory_space<vmem>>, vector<1x256xf32>
    tpu.vector_store %arg18[%c0_4, %c0_5], %4 {strides = array<i32>} : memref<144x256xf32, #tpu.memory_space<vmem>>, vector<1x256xf32>,
    %c16_i32 = arith.constant 16 : i32
    %6 = tpu.dynamic_rotate %1 by %c16_i32 dim 1 : vector<1x256xf32>, i32 -> vector<1x256xf32>
    %c1 = arith.constant 1 : index
    %c0_6 = arith.constant 0 : index
    %7 = vector.load %arg14[%c1, %c0_6] : memref<9x256xf32, #tpu.memory_space<vmem>>, vector<1x256xf32>
    %8 = arith.mulf %6, %7 : vector<1x256xf32>
    %c1_7 = arith.constant 1 : index
    %c0_8 = arith.constant 0 : index
    %9 = vector.load %arg18[%c1_7, %c0_8] : memref<144x256xf32, #tpu.memory_space<vmem>>, vector<1x256xf32>
    tpu.vector_store %arg18[%c1_7, %c0_8], %8 {strides = array<i32>} : memref<144x256xf32, #tpu.memory_space<vmem>>, vector<1x256xf32>,
    %c15_i32 = arith.constant 15 : i32
    %10 = tpu.dynamic_rotate %1 by %c15_i32 dim 1 : vector<1x256xf32>, i32 -> vector<1x256xf32>
    %c2 = arith.constant 2 : index
    %c0_9 = arith.constant 0 : index
    %11 = vector.load %arg14[%c2, %c0_9] : memref<9x256xf32, #tpu.memory_space<vmem>>, vector<1x256xf32>
    %12 = arith.mulf %10, %11 : vector<1x256xf32>
    %c2_10 = arith.constant 2 : index
    %c0_11 = arith.constant 0 : index
    %13 = vector.load %arg18[%c2_10, %c0_11] : memref<144x256xf32, #tpu.memory_space<vmem>>, vector<1x256xf32>
    tpu.vector_store %arg18[%c2_10, %c0_11], %12 {strides = array<i32>} : memref<144x256xf32, #tpu.memory_space<vmem>>, vector<1x256xf32>,
    %c1_i32 = arith.constant 1 : i32
    %14 = tpu.dynamic_rotate %1 by %c1_i32 dim 1 : vector<1x256xf32>, i32 -> vector<1x256xf32>
    %c3 = arith.constant 3 : index
    %c0_12 = arith.constant 0 : index
    %15 = vector.load %arg14[%c3, %c0_12] : memref<9x256xf32, #tpu.memory_space<vmem>>, vector<1x256xf32>
    %16 = arith.mulf %14, %15 : vector<1x256xf32>
    %c3_13 = arith.constant 3 : index
    %c0_14 = arith.constant 0 : index
    %17 = vector.load %arg18[%c3_13, %c0_14] : memref<144x256xf32, #tpu.memory_space<vmem>>, vector<1x256xf32>
    tpu.vector_store %arg18[%c3_13, %c0_14], %16 {strides = array<i32>} : memref<144x256xf32, #tpu.memory_space<vmem>>, vector<1x256xf32>,
    %c4 = arith.constant 4 : index
    %c0_15 = arith.constant 0 : index
    %18 = vector.load %arg14[%c4, %c0_15] : memref<9x256xf32, #tpu.memory_space<vmem>>, vector<1x256xf32>
    %19 = arith.mulf %1, %18 : vector<1x256xf32>
    %c4_16 = arith.constant 4 : index
    %c0_17 = arith.constant 0 : index
    %20 = vector.load %arg18[%c4_16, %c0_17] : memref<144x256xf32, #tpu.memory_space<vmem>>, vector<1x256xf32>
    tpu.vector_store %arg18[%c4_16, %c0_17], %19 {strides = array<i32>} : memref<144x256xf32, #tpu.memory_space<vmem>>, vector<1x256xf32>,
    %c255_i32 = arith.constant 255 : i32
    %21 = tpu.dynamic_rotate %1 by %c255_i32 dim 1 : vector<1x256xf32>, i32 -> vector<1x256xf32>
    %c5 = arith.constant 5 : index
    %c0_18 = arith.constant 0 : index
    %22 = vector.load %arg14[%c5, %c0_18] : memref<9x256xf32, #tpu.memory_space<vmem>>, vector<1x256xf32>
    %23 = arith.mulf %21, %22 : vector<1x256xf32>
    %c5_19 = arith.constant 5 : index
    %c0_20 = arith.constant 0 : index
    %24 = vector.load %arg18[%c5_19, %c0_20] : memref<144x256xf32, #tpu.memory_space<vmem>>, vector<1x256xf32>
    tpu.vector_store %arg18[%c5_19, %c0_20], %23 {strides = array<i32>} : memref<144x256xf32, #tpu.memory_space<vmem>>, vector<1x256xf32>,
    %c241_i32 = arith.constant 241 : i32
    %25 = tpu.dynamic_rotate %1 by %c241_i32 dim 1 : vector<1x256xf32>, i32 -> vector<1x256xf32>
    %c6 = arith.constant 6 : index
    %c0_21 = arith.constant 0 : index
    %26 = vector.load %arg14[%c6, %c0_21] : memref<9x256xf32, #tpu.memory_space<vmem>>, vector<1x256xf32>
    %27 = arith.mulf %25, %26 : vector<1x256xf32>
    %c6_22 = arith.constant 6 : index
    %c0_23 = arith.constant 0 : index
    %28 = vector.load %arg18[%c6_22, %c0_23] : memref<144x256xf32, #tpu.memory_space<vmem>>, vector<1x256xf32>
    tpu.vector_store %arg18[%c6_22, %c0_23], %27 {strides = array<i32>} : memref<144x256xf32, #tpu.memory_space<vmem>>, vector<1x256xf32>,
    %c240_i32 = arith.constant 240 : i32
    %29 = tpu.dynamic_rotate %1 by %c240_i32 dim 1 : vector<1x256xf32>, i32 -> vector<1x256xf32>
    %c7 = arith.constant 7 : index
    %c0_24 = arith.constant 0 : index
    %30 = vector.load %arg14[%c7, %c0_24] : memref<9x256xf32, #tpu.memory_space<vmem>>, vector<1x256xf32>
    %31 = arith.mulf %29, %30 : vector<1x256xf32>
    %c7_25 = arith.constant 7 : index
    %c0_26 = arith.constant 0 : index
    %32 = vector.load %arg18[%c7_25, %c0_26] : memref<144x256xf32, #tpu.memory_space<vmem>>, vector<1x256xf32>
    tpu.vector_store %arg18[%c7_25, %c0_26], %31 {strides = array<i32>} : memref<144x256xf32, #tpu.memory_space<vmem>>, vector<1x256xf32>,
    %c239_i32 = arith.constant 239 : i32
    %33 = tpu.dynamic_rotate %1 by %c239_i32 dim 1 : vector<1x256xf32>, i32 -> vector<1x256xf32>
    %c8 = arith.constant 8 : index
    %c0_27 = arith.constant 0 : index
    %34 = vector.load %arg14[%c8, %c0_27] : memref<9x256xf32, #tpu.memory_space<vmem>>, vector<1x256xf32>
    %35 = arith.mulf %33, %34 : vector<1x256xf32>
    %c8_28 = arith.constant 8 : index
    %c0_29 = arith.constant 0 : index
    %36 = vector.load %arg18[%c8_28, %c0_29] : memref<144x256xf32, #tpu.memory_space<vmem>>, vector<1x256xf32>
    tpu.vector_store %arg18[%c8_28, %c0_29], %35 {strides = array<i32>} : memref<144x256xf32, #tpu.memory_space<vmem>>, vector<1x256xf32>,
    %c0_30 = arith.constant 0 : index
    %c0_31 = arith.constant 0 : index
    %37 = vector.load %arg2[%c0_30, %c0_31] : memref<16x9xf32, #tpu.memory_space<vmem>>, vector<16x9xf32>
    %c0_32 = arith.constant 0 : index
    %c0_33 = arith.constant 0 : index
    %38 = vector.load %arg18[%c0_32, %c0_33] : memref<144x256xf32, #tpu.memory_space<vmem>>, vector<9x256xf32>
    %cst = arith.constant dense<0.000000e+00> : vector<16x256xf32>
    %39 = tpu.matmul %37, %38, %cst {dimension_numbers = #tpu.dot_dimension_numbers<[1], [0], [0], [1], [0, 0, 1, 1], [], []>} : vector<16x9xf32>, vector<9x256xf32>, vector<16x256xf32> -> vector<16x256xf32>
    %c0_34 = arith.constant 0 : index
    %c0_35 = arith.constant 0 : index
    %40 = vector.load %arg3[%c0_34, %c0_35] : memref<16x1xf32, #tpu.memory_space<vmem>>, vector<16x1xf32>
    %41 = vector.broadcast %40 : vector<16x1xf32> to vector<16x256xf32>
    %42 = arith.addf %39, %41 : vector<16x256xf32>
    %cst_36 = arith.constant 0.000000e+00 : f32
    %43 = vector.broadcast %cst_36 : f32 to vector<16x256xf32>
    %44 = arith.maximumf %42, %43 : vector<16x256xf32>
    %c17_i32_37 = arith.constant 17 : i32
    %45 = tpu.dynamic_rotate %44 by %c17_i32_37 dim 1 : vector<16x256xf32>, i32 -> vector<16x256xf32>
    %c0_38 = arith.constant 0 : index
    %c0_39 = arith.constant 0 : index
    %46 = vector.load %arg14[%c0_38, %c0_39] : memref<9x256xf32, #tpu.memory_space<vmem>>, vector<1x256xf32>
    %47 = vector.broadcast %46 : vector<1x256xf32> to vector<16x256xf32>
    %48 = arith.mulf %45, %47 : vector<16x256xf32>
    %c0_40 = arith.constant 0 : index
    %c0_41 = arith.constant 0 : index
    %49 = vector.load %arg18[%c0_40, %c0_41] : memref<144x256xf32, #tpu.memory_space<vmem>>, vector<16x256xf32>
    tpu.vector_store %arg18[%c0_40, %c0_41], %48 {strides = array<i32>} : memref<144x256xf32, #tpu.memory_space<vmem>>, vector<16x256xf32>,
    %c16_i32_42 = arith.constant 16 : i32
    %50 = tpu.dynamic_rotate %44 by %c16_i32_42 dim 1 : vector<16x256xf32>, i32 -> vector<16x256xf32>
    %c1_43 = arith.constant 1 : index
    %c0_44 = arith.constant 0 : index
    %51 = vector.load %arg14[%c1_43, %c0_44] : memref<9x256xf32, #tpu.memory_space<vmem>>, vector<1x256xf32>
    %52 = vector.broadcast %51 : vector<1x256xf32> to vector<16x256xf32>
    %53 = arith.mulf %50, %52 : vector<16x256xf32>
    %c16 = arith.constant 16 : index
    %c0_45 = arith.constant 0 : index
    %54 = vector.load %arg18[%c16, %c0_45] : memref<144x256xf32, #tpu.memory_space<vmem>>, vector<16x256xf32>
    tpu.vector_store %arg18[%c16, %c0_45], %53 {strides = array<i32>} : memref<144x256xf32, #tpu.memory_space<vmem>>, vector<16x256xf32>,
    %c15_i32_46 = arith.constant 15 : i32
    %55 = tpu.dynamic_rotate %44 by %c15_i32_46 dim 1 : vector<16x256xf32>, i32 -> vector<16x256xf32>
    %c2_47 = arith.constant 2 : index
    %c0_48 = arith.constant 0 : index
    %56 = vector.load %arg14[%c2_47, %c0_48] : memref<9x256xf32, #tpu.memory_space<vmem>>, vector<1x256xf32>
    %57 = vector.broadcast %56 : vector<1x256xf32> to vector<16x256xf32>
    %58 = arith.mulf %55, %57 : vector<16x256xf32>
    %c32 = arith.constant 32 : index
    %c0_49 = arith.constant 0 : index
    %59 = vector.load %arg18[%c32, %c0_49] : memref<144x256xf32, #tpu.memory_space<vmem>>, vector<16x256xf32>
    tpu.vector_store %arg18[%c32, %c0_49], %58 {strides = array<i32>} : memref<144x256xf32, #tpu.memory_space<vmem>>, vector<16x256xf32>,
    %c1_i32_50 = arith.constant 1 : i32
    %60 = tpu.dynamic_rotate %44 by %c1_i32_50 dim 1 : vector<16x256xf32>, i32 -> vector<16x256xf32>
    %c3_51 = arith.constant 3 : index
    %c0_52 = arith.constant 0 : index
    %61 = vector.load %arg14[%c3_51, %c0_52] : memref<9x256xf32, #tpu.memory_space<vmem>>, vector<1x256xf32>
    %62 = vector.broadcast %61 : vector<1x256xf32> to vector<16x256xf32>
    %63 = arith.mulf %60, %62 : vector<16x256xf32>
    %c48 = arith.constant 48 : index
    %c0_53 = arith.constant 0 : index
    %64 = vector.load %arg18[%c48, %c0_53] : memref<144x256xf32, #tpu.memory_space<vmem>>, vector<16x256xf32>
    tpu.vector_store %arg18[%c48, %c0_53], %63 {strides = array<i32>} : memref<144x256xf32, #tpu.memory_space<vmem>>, vector<16x256xf32>,
    %c4_54 = arith.constant 4 : index
    %c0_55 = arith.constant 0 : index
    %65 = vector.load %arg14[%c4_54, %c0_55] : memref<9x256xf32, #tpu.memory_space<vmem>>, vector<1x256xf32>
    %66 = vector.broadcast %65 : vector<1x256xf32> to vector<16x256xf32>
    %67 = arith.mulf %44, %66 : vector<16x256xf32>
    %c64 = arith.constant 64 : index
    %c0_56 = arith.constant 0 : index
    %68 = vector.load %arg18[%c64, %c0_56] : memref<144x256xf32, #tpu.memory_space<vmem>>, vector<16x256xf32>
    tpu.vector_store %arg18[%c64, %c0_56], %67 {strides = array<i32>} : memref<144x256xf32, #tpu.memory_space<vmem>>, vector<16x256xf32>,
    %c255_i32_57 = arith.constant 255 : i32
    %69 = tpu.dynamic_rotate %44 by %c255_i32_57 dim 1 : vector<16x256xf32>, i32 -> vector<16x256xf32>
    %c5_58 = arith.constant 5 : index
    %c0_59 = arith.constant 0 : index
    %70 = vector.load %arg14[%c5_58, %c0_59] : memref<9x256xf32, #tpu.memory_space<vmem>>, vector<1x256xf32>
    %71 = vector.broadcast %70 : vector<1x256xf32> to vector<16x256xf32>
    %72 = arith.mulf %69, %71 : vector<16x256xf32>
    %c80 = arith.constant 80 : index
    %c0_60 = arith.constant 0 : index
    %73 = vector.load %arg18[%c80, %c0_60] : memref<144x256xf32, #tpu.memory_space<vmem>>, vector<16x256xf32>
    tpu.vector_store %arg18[%c80, %c0_60], %72 {strides = array<i32>} : memref<144x256xf32, #tpu.memory_space<vmem>>, vector<16x256xf32>,
    %c241_i32_61 = arith.constant 241 : i32
    %74 = tpu.dynamic_rotate %44 by %c241_i32_61 dim 1 : vector<16x256xf32>, i32 -> vector<16x256xf32>
    %c6_62 = arith.constant 6 : index
    %c0_63 = arith.constant 0 : index
    %75 = vector.load %arg14[%c6_62, %c0_63] : memref<9x256xf32, #tpu.memory_space<vmem>>, vector<1x256xf32>
    %76 = vector.broadcast %75 : vector<1x256xf32> to vector<16x256xf32>
    %77 = arith.mulf %74, %76 : vector<16x256xf32>
    %c96 = arith.constant 96 : index
    %c0_64 = arith.constant 0 : index
    %78 = vector.load %arg18[%c96, %c0_64] : memref<144x256xf32, #tpu.memory_space<vmem>>, vector<16x256xf32>
    tpu.vector_store %arg18[%c96, %c0_64], %77 {strides = array<i32>} : memref<144x256xf32, #tpu.memory_space<vmem>>, vector<16x256xf32>,
    %c240_i32_65 = arith.constant 240 : i32
    %79 = tpu.dynamic_rotate %44 by %c240_i32_65 dim 1 : vector<16x256xf32>, i32 -> vector<16x256xf32>
    %c7_66 = arith.constant 7 : index
    %c0_67 = arith.constant 0 : index
    %80 = vector.load %arg14[%c7_66, %c0_67] : memref<9x256xf32, #tpu.memory_space<vmem>>, vector<1x256xf32>
    %81 = vector.broadcast %80 : vector<1x256xf32> to vector<16x256xf32>
    %82 = arith.mulf %79, %81 : vector<16x256xf32>
    %c112 = arith.constant 112 : index
    %c0_68 = arith.constant 0 : index
    %83 = vector.load %arg18[%c112, %c0_68] : memref<144x256xf32, #tpu.memory_space<vmem>>, vector<16x256xf32>
    tpu.vector_store %arg18[%c112, %c0_68], %82 {strides = array<i32>} : memref<144x256xf32, #tpu.memory_space<vmem>>, vector<16x256xf32>,
    %c239_i32_69 = arith.constant 239 : i32
    %84 = tpu.dynamic_rotate %44 by %c239_i32_69 dim 1 : vector<16x256xf32>, i32 -> vector<16x256xf32>
    %c8_70 = arith.constant 8 : index
    %c0_71 = arith.constant 0 : index
    %85 = vector.load %arg14[%c8_70, %c0_71] : memref<9x256xf32, #tpu.memory_space<vmem>>, vector<1x256xf32>
    %86 = vector.broadcast %85 : vector<1x256xf32> to vector<16x256xf32>
    %87 = arith.mulf %84, %86 : vector<16x256xf32>
    %c128 = arith.constant 128 : index
    %c0_72 = arith.constant 0 : index
    %88 = vector.load %arg18[%c128, %c0_72] : memref<144x256xf32, #tpu.memory_space<vmem>>, vector<16x256xf32>
    tpu.vector_store %arg18[%c128, %c0_72], %87 {strides = array<i32>} : memref<144x256xf32, #tpu.memory_space<vmem>>, vector<16x256xf32>,
    %c0_73 = arith.constant 0 : index
    %c0_74 = arith.constant 0 : index
    %89 = vector.load %arg4[%c0_73, %c0_74] : memref<16x144xf32, #tpu.memory_space<vmem>>, vector<16x144xf32>
    %c0_75 = arith.constant 0 : index
    %c0_76 = arith.constant 0 : index
    %90 = vector.load %arg18[%c0_75, %c0_76] : memref<144x256xf32, #tpu.memory_space<vmem>>, vector<144x256xf32>
    %cst_77 = arith.constant dense<0.000000e+00> : vector<16x256xf32>
    %91 = tpu.matmul %89, %90, %cst_77 {dimension_numbers = #tpu.dot_dimension_numbers<[1], [0], [0], [1], [0, 0, 1, 1], [], []>} : vector<16x144xf32>, vector<144x256xf32>, vector<16x256xf32> -> vector<16x256xf32>
    %c0_78 = arith.constant 0 : index
    %c0_79 = arith.constant 0 : index
    %92 = vector.load %arg5[%c0_78, %c0_79] : memref<16x1xf32, #tpu.memory_space<vmem>>, vector<16x1xf32>
    %93 = vector.broadcast %92 : vector<16x1xf32> to vector<16x256xf32>
    %94 = arith.addf %91, %93 : vector<16x256xf32>
    %cst_80 = arith.constant 0.000000e+00 : f32
    %95 = vector.broadcast %cst_80 : f32 to vector<16x256xf32>
    %96 = arith.maximumf %94, %95 : vector<16x256xf32>
    %c255_i32_81 = arith.constant 255 : i32
    %97 = tpu.dynamic_rotate %96 by %c255_i32_81 dim 1 : vector<16x256xf32>, i32 -> vector<16x256xf32>
    %98 = arith.maximumf %96, %97 : vector<16x256xf32>
    %c240_i32_82 = arith.constant 240 : i32
    %99 = tpu.dynamic_rotate %98 by %c240_i32_82 dim 1 : vector<16x256xf32>, i32 -> vector<16x256xf32>
    %100 = arith.maximumf %98, %99 : vector<16x256xf32>
    %c34_i32 = arith.constant 34 : i32
    %101 = tpu.dynamic_rotate %100 by %c34_i32 dim 1 : vector<16x256xf32>, i32 -> vector<16x256xf32>
    %c0_83 = arith.constant 0 : index
    %c0_84 = arith.constant 0 : index
    %102 = vector.load %arg15[%c0_83, %c0_84] : memref<9x256xf32, #tpu.memory_space<vmem>>, vector<1x256xf32>
    %103 = vector.broadcast %102 : vector<1x256xf32> to vector<16x256xf32>
    %104 = arith.mulf %101, %103 : vector<16x256xf32>
    %c0_85 = arith.constant 0 : index
    %c0_86 = arith.constant 0 : index
    %105 = vector.load %arg18[%c0_85, %c0_86] : memref<144x256xf32, #tpu.memory_space<vmem>>, vector<16x256xf32>
    tpu.vector_store %arg18[%c0_85, %c0_86], %104 {strides = array<i32>} : memref<144x256xf32, #tpu.memory_space<vmem>>, vector<16x256xf32>,
    %c32_i32 = arith.constant 32 : i32
    %106 = tpu.dynamic_rotate %100 by %c32_i32 dim 1 : vector<16x256xf32>, i32 -> vector<16x256xf32>
    %c1_87 = arith.constant 1 : index
    %c0_88 = arith.constant 0 : index
    %107 = vector.load %arg15[%c1_87, %c0_88] : memref<9x256xf32, #tpu.memory_space<vmem>>, vector<1x256xf32>
    %108 = vector.broadcast %107 : vector<1x256xf32> to vector<16x256xf32>
    %109 = arith.mulf %106, %108 : vector<16x256xf32>
    %c16_89 = arith.constant 16 : index
    %c0_90 = arith.constant 0 : index
    %110 = vector.load %arg18[%c16_89, %c0_90] : memref<144x256xf32, #tpu.memory_space<vmem>>, vector<16x256xf32>
    tpu.vector_store %arg18[%c16_89, %c0_90], %109 {strides = array<i32>} : memref<144x256xf32, #tpu.memory_space<vmem>>, vector<16x256xf32>,
    %c30_i32 = arith.constant 30 : i32
    %111 = tpu.dynamic_rotate %100 by %c30_i32 dim 1 : vector<16x256xf32>, i32 -> vector<16x256xf32>
    %c2_91 = arith.constant 2 : index
    %c0_92 = arith.constant 0 : index
    %112 = vector.load %arg15[%c2_91, %c0_92] : memref<9x256xf32, #tpu.memory_space<vmem>>, vector<1x256xf32>
    %113 = vector.broadcast %112 : vector<1x256xf32> to vector<16x256xf32>
    %114 = arith.mulf %111, %113 : vector<16x256xf32>
    %c32_93 = arith.constant 32 : index
    %c0_94 = arith.constant 0 : index
    %115 = vector.load %arg18[%c32_93, %c0_94] : memref<144x256xf32, #tpu.memory_space<vmem>>, vector<16x256xf32>
    tpu.vector_store %arg18[%c32_93, %c0_94], %114 {strides = array<i32>} : memref<144x256xf32, #tpu.memory_space<vmem>>, vector<16x256xf32>,
    %c2_i32 = arith.constant 2 : i32
    %116 = tpu.dynamic_rotate %100 by %c2_i32 dim 1 : vector<16x256xf32>, i32 -> vector<16x256xf32>
    %c3_95 = arith.constant 3 : index
    %c0_96 = arith.constant 0 : index
    %117 = vector.load %arg15[%c3_95, %c0_96] : memref<9x256xf32, #tpu.memory_space<vmem>>, vector<1x256xf32>
    %118 = vector.broadcast %117 : vector<1x256xf32> to vector<16x256xf32>
    %119 = arith.mulf %116, %118 : vector<16x256xf32>
    %c48_97 = arith.constant 48 : index
    %c0_98 = arith.constant 0 : index
    %120 = vector.load %arg18[%c48_97, %c0_98] : memref<144x256xf32, #tpu.memory_space<vmem>>, vector<16x256xf32>
    tpu.vector_store %arg18[%c48_97, %c0_98], %119 {strides = array<i32>} : memref<144x256xf32, #tpu.memory_space<vmem>>, vector<16x256xf32>,
    %c4_99 = arith.constant 4 : index
    %c0_100 = arith.constant 0 : index
    %121 = vector.load %arg15[%c4_99, %c0_100] : memref<9x256xf32, #tpu.memory_space<vmem>>, vector<1x256xf32>
    %122 = vector.broadcast %121 : vector<1x256xf32> to vector<16x256xf32>
    %123 = arith.mulf %100, %122 : vector<16x256xf32>
    %c64_101 = arith.constant 64 : index
    %c0_102 = arith.constant 0 : index
    %124 = vector.load %arg18[%c64_101, %c0_102] : memref<144x256xf32, #tpu.memory_space<vmem>>, vector<16x256xf32>
    tpu.vector_store %arg18[%c64_101, %c0_102], %123 {strides = array<i32>} : memref<144x256xf32, #tpu.memory_space<vmem>>, vector<16x256xf32>,
    %c254_i32 = arith.constant 254 : i32
    %125 = tpu.dynamic_rotate %100 by %c254_i32 dim 1 : vector<16x256xf32>, i32 -> vector<16x256xf32>
    %c5_103 = arith.constant 5 : index
    %c0_104 = arith.constant 0 : index
    %126 = vector.load %arg15[%c5_103, %c0_104] : memref<9x256xf32, #tpu.memory_space<vmem>>, vector<1x256xf32>
    %127 = vector.broadcast %126 : vector<1x256xf32> to vector<16x256xf32>
    %128 = arith.mulf %125, %127 : vector<16x256xf32>
    %c80_105 = arith.constant 80 : index
    %c0_106 = arith.constant 0 : index
    %129 = vector.load %arg18[%c80_105, %c0_106] : memref<144x256xf32, #tpu.memory_space<vmem>>, vector<16x256xf32>
    tpu.vector_store %arg18[%c80_105, %c0_106], %128 {strides = array<i32>} : memref<144x256xf32, #tpu.memory_space<vmem>>, vector<16x256xf32>,
    %c226_i32 = arith.constant 226 : i32
    %130 = tpu.dynamic_rotate %100 by %c226_i32 dim 1 : vector<16x256xf32>, i32 -> vector<16x256xf32>
    %c6_107 = arith.constant 6 : index
    %c0_108 = arith.constant 0 : index
    %131 = vector.load %arg15[%c6_107, %c0_108] : memref<9x256xf32, #tpu.memory_space<vmem>>, vector<1x256xf32>
    %132 = vector.broadcast %131 : vector<1x256xf32> to vector<16x256xf32>
    %133 = arith.mulf %130, %132 : vector<16x256xf32>
    %c96_109 = arith.constant 96 : index
    %c0_110 = arith.constant 0 : index
    %134 = vector.load %arg18[%c96_109, %c0_110] : memref<144x256xf32, #tpu.memory_space<vmem>>, vector<16x256xf32>
    tpu.vector_store %arg18[%c96_109, %c0_110], %133 {strides = array<i32>} : memref<144x256xf32, #tpu.memory_space<vmem>>, vector<16x256xf32>,
    %c224_i32 = arith.constant 224 : i32
    %135 = tpu.dynamic_rotate %100 by %c224_i32 dim 1 : vector<16x256xf32>, i32 -> vector<16x256xf32>
    %c7_111 = arith.constant 7 : index
    %c0_112 = arith.constant 0 : index
    %136 = vector.load %arg15[%c7_111, %c0_112] : memref<9x256xf32, #tpu.memory_space<vmem>>, vector<1x256xf32>
    %137 = vector.broadcast %136 : vector<1x256xf32> to vector<16x256xf32>
    %138 = arith.mulf %135, %137 : vector<16x256xf32>
    %c112_113 = arith.constant 112 : index
    %c0_114 = arith.constant 0 : index
    %139 = vector.load %arg18[%c112_113, %c0_114] : memref<144x256xf32, #tpu.memory_space<vmem>>, vector<16x256xf32>
    tpu.vector_store %arg18[%c112_113, %c0_114], %138 {strides = array<i32>} : memref<144x256xf32, #tpu.memory_space<vmem>>, vector<16x256xf32>,
    %c222_i32 = arith.constant 222 : i32
    %140 = tpu.dynamic_rotate %100 by %c222_i32 dim 1 : vector<16x256xf32>, i32 -> vector<16x256xf32>
    %c8_115 = arith.constant 8 : index
    %c0_116 = arith.constant 0 : index
    %141 = vector.load %arg15[%c8_115, %c0_116] : memref<9x256xf32, #tpu.memory_space<vmem>>, vector<1x256xf32>
    %142 = vector.broadcast %141 : vector<1x256xf32> to vector<16x256xf32>
    %143 = arith.mulf %140, %142 : vector<16x256xf32>
    %c128_117 = arith.constant 128 : index
    %c0_118 = arith.constant 0 : index
    %144 = vector.load %arg18[%c128_117, %c0_118] : memref<144x256xf32, #tpu.memory_space<vmem>>, vector<16x256xf32>
    tpu.vector_store %arg18[%c128_117, %c0_118], %143 {strides = array<i32>} : memref<144x256xf32, #tpu.memory_space<vmem>>, vector<16x256xf32>,
    %c0_119 = arith.constant 0 : index
    %c0_120 = arith.constant 0 : index
    %145 = vector.load %arg6[%c0_119, %c0_120] : memref<1x144xf32, #tpu.memory_space<vmem>>, vector<1x144xf32>
    %c0_121 = arith.constant 0 : index
    %c0_122 = arith.constant 0 : index
    %146 = vector.load %arg18[%c0_121, %c0_122] : memref<144x256xf32, #tpu.memory_space<vmem>>, vector<144x256xf32>
    %cst_123 = arith.constant dense<0.000000e+00> : vector<1x256xf32>
    %147 = tpu.matmul %145, %146, %cst_123 {dimension_numbers = #tpu.dot_dimension_numbers<[1], [0], [0], [1], [0, 0, 1, 1], [], []>} : vector<1x144xf32>, vector<144x256xf32>, vector<1x256xf32> -> vector<1x256xf32>
    %c0_124 = arith.constant 0 : index
    %c0_125 = arith.constant 0 : index
    %148 = vector.load %arg7[%c0_124, %c0_125] : memref<1x1xf32, #tpu.memory_space<vmem>>, vector<1x1xf32>
    %149 = vector.broadcast %148 : vector<1x1xf32> to vector<1x256xf32>
    %150 = arith.addf %147, %149 : vector<1x256xf32>
    %c34_i32_126 = arith.constant 34 : i32
    %151 = tpu.dynamic_rotate %150 by %c34_i32_126 dim 1 : vector<1x256xf32>, i32 -> vector<1x256xf32>
    %c0_127 = arith.constant 0 : index
    %c0_128 = arith.constant 0 : index
    %152 = vector.load %arg15[%c0_127, %c0_128] : memref<9x256xf32, #tpu.memory_space<vmem>>, vector<1x256xf32>
    %153 = arith.mulf %151, %152 : vector<1x256xf32>
    %c0_129 = arith.constant 0 : index
    %c0_130 = arith.constant 0 : index
    %154 = vector.load %arg18[%c0_129, %c0_130] : memref<144x256xf32, #tpu.memory_space<vmem>>, vector<1x256xf32>
    tpu.vector_store %arg18[%c0_129, %c0_130], %153 {strides = array<i32>} : memref<144x256xf32, #tpu.memory_space<vmem>>, vector<1x256xf32>,
    %c32_i32_131 = arith.constant 32 : i32
    %155 = tpu.dynamic_rotate %150 by %c32_i32_131 dim 1 : vector<1x256xf32>, i32 -> vector<1x256xf32>
    %c1_132 = arith.constant 1 : index
    %c0_133 = arith.constant 0 : index
    %156 = vector.load %arg15[%c1_132, %c0_133] : memref<9x256xf32, #tpu.memory_space<vmem>>, vector<1x256xf32>
    %157 = arith.mulf %155, %156 : vector<1x256xf32>
    %c1_134 = arith.constant 1 : index
    %c0_135 = arith.constant 0 : index
    %158 = vector.load %arg18[%c1_134, %c0_135] : memref<144x256xf32, #tpu.memory_space<vmem>>, vector<1x256xf32>
    tpu.vector_store %arg18[%c1_134, %c0_135], %157 {strides = array<i32>} : memref<144x256xf32, #tpu.memory_space<vmem>>, vector<1x256xf32>,
    %c30_i32_136 = arith.constant 30 : i32
    %159 = tpu.dynamic_rotate %150 by %c30_i32_136 dim 1 : vector<1x256xf32>, i32 -> vector<1x256xf32>
    %c2_137 = arith.constant 2 : index
    %c0_138 = arith.constant 0 : index
    %160 = vector.load %arg15[%c2_137, %c0_138] : memref<9x256xf32, #tpu.memory_space<vmem>>, vector<1x256xf32>
    %161 = arith.mulf %159, %160 : vector<1x256xf32>
    %c2_139 = arith.constant 2 : index
    %c0_140 = arith.constant 0 : index
    %162 = vector.load %arg18[%c2_139, %c0_140] : memref<144x256xf32, #tpu.memory_space<vmem>>, vector<1x256xf32>
    tpu.vector_store %arg18[%c2_139, %c0_140], %161 {strides = array<i32>} : memref<144x256xf32, #tpu.memory_space<vmem>>, vector<1x256xf32>,
    %c2_i32_141 = arith.constant 2 : i32
    %163 = tpu.dynamic_rotate %150 by %c2_i32_141 dim 1 : vector<1x256xf32>, i32 -> vector<1x256xf32>
    %c3_142 = arith.constant 3 : index
    %c0_143 = arith.constant 0 : index
    %164 = vector.load %arg15[%c3_142, %c0_143] : memref<9x256xf32, #tpu.memory_space<vmem>>, vector<1x256xf32>
    %165 = arith.mulf %163, %164 : vector<1x256xf32>
    %c3_144 = arith.constant 3 : index
    %c0_145 = arith.constant 0 : index
    %166 = vector.load %arg18[%c3_144, %c0_145] : memref<144x256xf32, #tpu.memory_space<vmem>>, vector<1x256xf32>
    tpu.vector_store %arg18[%c3_144, %c0_145], %165 {strides = array<i32>} : memref<144x256xf32, #tpu.memory_space<vmem>>, vector<1x256xf32>,
    %c4_146 = arith.constant 4 : index
    %c0_147 = arith.constant 0 : index
    %167 = vector.load %arg15[%c4_146, %c0_147] : memref<9x256xf32, #tpu.memory_space<vmem>>, vector<1x256xf32>
    %168 = arith.mulf %150, %167 : vector<1x256xf32>
    %c4_148 = arith.constant 4 : index
    %c0_149 = arith.constant 0 : index
    %169 = vector.load %arg18[%c4_148, %c0_149] : memref<144x256xf32, #tpu.memory_space<vmem>>, vector<1x256xf32>
    tpu.vector_store %arg18[%c4_148, %c0_149], %168 {strides = array<i32>} : memref<144x256xf32, #tpu.memory_space<vmem>>, vector<1x256xf32>,
    %c254_i32_150 = arith.constant 254 : i32
    %170 = tpu.dynamic_rotate %150 by %c254_i32_150 dim 1 : vector<1x256xf32>, i32 -> vector<1x256xf32>
    %c5_151 = arith.constant 5 : index
    %c0_152 = arith.constant 0 : index
    %171 = vector.load %arg15[%c5_151, %c0_152] : memref<9x256xf32, #tpu.memory_space<vmem>>, vector<1x256xf32>
    %172 = arith.mulf %170, %171 : vector<1x256xf32>
    %c5_153 = arith.constant 5 : index
    %c0_154 = arith.constant 0 : index
    %173 = vector.load %arg18[%c5_153, %c0_154] : memref<144x256xf32, #tpu.memory_space<vmem>>, vector<1x256xf32>
    tpu.vector_store %arg18[%c5_153, %c0_154], %172 {strides = array<i32>} : memref<144x256xf32, #tpu.memory_space<vmem>>, vector<1x256xf32>,
    %c226_i32_155 = arith.constant 226 : i32
    %174 = tpu.dynamic_rotate %150 by %c226_i32_155 dim 1 : vector<1x256xf32>, i32 -> vector<1x256xf32>
    %c6_156 = arith.constant 6 : index
    %c0_157 = arith.constant 0 : index
    %175 = vector.load %arg15[%c6_156, %c0_157] : memref<9x256xf32, #tpu.memory_space<vmem>>, vector<1x256xf32>
    %176 = arith.mulf %174, %175 : vector<1x256xf32>
    %c6_158 = arith.constant 6 : index
    %c0_159 = arith.constant 0 : index
    %177 = vector.load %arg18[%c6_158, %c0_159] : memref<144x256xf32, #tpu.memory_space<vmem>>, vector<1x256xf32>
    tpu.vector_store %arg18[%c6_158, %c0_159], %176 {strides = array<i32>} : memref<144x256xf32, #tpu.memory_space<vmem>>, vector<1x256xf32>,
    %c224_i32_160 = arith.constant 224 : i32
    %178 = tpu.dynamic_rotate %150 by %c224_i32_160 dim 1 : vector<1x256xf32>, i32 -> vector<1x256xf32>
    %c7_161 = arith.constant 7 : index
    %c0_162 = arith.constant 0 : index
    %179 = vector.load %arg15[%c7_161, %c0_162] : memref<9x256xf32, #tpu.memory_space<vmem>>, vector<1x256xf32>
    %180 = arith.mulf %178, %179 : vector<1x256xf32>
    %c7_163 = arith.constant 7 : index
    %c0_164 = arith.constant 0 : index
    %181 = vector.load %arg18[%c7_163, %c0_164] : memref<144x256xf32, #tpu.memory_space<vmem>>, vector<1x256xf32>
    tpu.vector_store %arg18[%c7_163, %c0_164], %180 {strides = array<i32>} : memref<144x256xf32, #tpu.memory_space<vmem>>, vector<1x256xf32>,
    %c222_i32_165 = arith.constant 222 : i32
    %182 = tpu.dynamic_rotate %150 by %c222_i32_165 dim 1 : vector<1x256xf32>, i32 -> vector<1x256xf32>
    %c8_166 = arith.constant 8 : index
    %c0_167 = arith.constant 0 : index
    %183 = vector.load %arg15[%c8_166, %c0_167] : memref<9x256xf32, #tpu.memory_space<vmem>>, vector<1x256xf32>
    %184 = arith.mulf %182, %183 : vector<1x256xf32>
    %c8_168 = arith.constant 8 : index
    %c0_169 = arith.constant 0 : index
    %185 = vector.load %arg18[%c8_168, %c0_169] : memref<144x256xf32, #tpu.memory_space<vmem>>, vector<1x256xf32>
    tpu.vector_store %arg18[%c8_168, %c0_169], %184 {strides = array<i32>} : memref<144x256xf32, #tpu.memory_space<vmem>>, vector<1x256xf32>,
    %c0_170 = arith.constant 0 : index
    %c0_171 = arith.constant 0 : index
    %186 = vector.load %arg8[%c0_170, %c0_171] : memref<16x9xf32, #tpu.memory_space<vmem>>, vector<16x9xf32>
    %c0_172 = arith.constant 0 : index
    %c0_173 = arith.constant 0 : index
    %187 = vector.load %arg18[%c0_172, %c0_173] : memref<144x256xf32, #tpu.memory_space<vmem>>, vector<9x256xf32>
    %cst_174 = arith.constant dense<0.000000e+00> : vector<16x256xf32>
    %188 = tpu.matmul %186, %187, %cst_174 {dimension_numbers = #tpu.dot_dimension_numbers<[1], [0], [0], [1], [0, 0, 1, 1], [], []>} : vector<16x9xf32>, vector<9x256xf32>, vector<16x256xf32> -> vector<16x256xf32>
    %c0_175 = arith.constant 0 : index
    %c0_176 = arith.constant 0 : index
    %189 = vector.load %arg9[%c0_175, %c0_176] : memref<16x1xf32, #tpu.memory_space<vmem>>, vector<16x1xf32>
    %190 = vector.broadcast %189 : vector<16x1xf32> to vector<16x256xf32>
    %191 = arith.addf %188, %190 : vector<16x256xf32>
    %cst_177 = arith.constant 0.000000e+00 : f32
    %192 = vector.broadcast %cst_177 : f32 to vector<16x256xf32>
    %193 = arith.maximumf %191, %192 : vector<16x256xf32>
    %c0_178 = arith.constant 0 : index
    %c0_179 = arith.constant 0 : index
    %194 = vector.load %arg16[%c0_178, %c0_179] : memref<4x256xf32, #tpu.memory_space<vmem>>, vector<1x256xf32>
    %195 = vector.broadcast %194 : vector<1x256xf32> to vector<16x256xf32>
    %196 = arith.mulf %193, %195 : vector<16x256xf32>
    %c1_i32_180 = arith.constant 1 : i32
    %197 = tpu.dynamic_rotate %193 by %c1_i32_180 dim 1 : vector<16x256xf32>, i32 -> vector<16x256xf32>
    %c1_181 = arith.constant 1 : index
    %c0_182 = arith.constant 0 : index
    %198 = vector.load %arg16[%c1_181, %c0_182] : memref<4x256xf32, #tpu.memory_space<vmem>>, vector<1x256xf32>
    %199 = vector.broadcast %198 : vector<1x256xf32> to vector<16x256xf32>
    %200 = arith.mulf %197, %199 : vector<16x256xf32>
    %201 = arith.addf %196, %200 : vector<16x256xf32>
    %c16_i32_183 = arith.constant 16 : i32
    %202 = tpu.dynamic_rotate %193 by %c16_i32_183 dim 1 : vector<16x256xf32>, i32 -> vector<16x256xf32>
    %c2_184 = arith.constant 2 : index
    %c0_185 = arith.constant 0 : index
    %203 = vector.load %arg16[%c2_184, %c0_185] : memref<4x256xf32, #tpu.memory_space<vmem>>, vector<1x256xf32>
    %204 = vector.broadcast %203 : vector<1x256xf32> to vector<16x256xf32>
    %205 = arith.mulf %202, %204 : vector<16x256xf32>
    %206 = arith.addf %201, %205 : vector<16x256xf32>
    %c17_i32_186 = arith.constant 17 : i32
    %207 = tpu.dynamic_rotate %193 by %c17_i32_186 dim 1 : vector<16x256xf32>, i32 -> vector<16x256xf32>
    %c3_187 = arith.constant 3 : index
    %c0_188 = arith.constant 0 : index
    %208 = vector.load %arg16[%c3_187, %c0_188] : memref<4x256xf32, #tpu.memory_space<vmem>>, vector<1x256xf32>
    %209 = vector.broadcast %208 : vector<1x256xf32> to vector<16x256xf32>
    %210 = arith.mulf %207, %209 : vector<16x256xf32>
    %211 = arith.addf %206, %210 : vector<16x256xf32>
    %c17_i32_189 = arith.constant 17 : i32
    %212 = tpu.dynamic_rotate %211 by %c17_i32_189 dim 1 : vector<16x256xf32>, i32 -> vector<16x256xf32>
    %c0_190 = arith.constant 0 : index
    %c0_191 = arith.constant 0 : index
    %213 = vector.load %arg14[%c0_190, %c0_191] : memref<9x256xf32, #tpu.memory_space<vmem>>, vector<1x256xf32>
    %214 = vector.broadcast %213 : vector<1x256xf32> to vector<16x256xf32>
    %215 = arith.mulf %212, %214 : vector<16x256xf32>
    %c0_192 = arith.constant 0 : index
    %c0_193 = arith.constant 0 : index
    %216 = vector.load %arg18[%c0_192, %c0_193] : memref<144x256xf32, #tpu.memory_space<vmem>>, vector<16x256xf32>
    tpu.vector_store %arg18[%c0_192, %c0_193], %215 {strides = array<i32>} : memref<144x256xf32, #tpu.memory_space<vmem>>, vector<16x256xf32>,
    %c16_i32_194 = arith.constant 16 : i32
    %217 = tpu.dynamic_rotate %211 by %c16_i32_194 dim 1 : vector<16x256xf32>, i32 -> vector<16x256xf32>
    %c1_195 = arith.constant 1 : index
    %c0_196 = arith.constant 0 : index
    %218 = vector.load %arg14[%c1_195, %c0_196] : memref<9x256xf32, #tpu.memory_space<vmem>>, vector<1x256xf32>
    %219 = vector.broadcast %218 : vector<1x256xf32> to vector<16x256xf32>
    %220 = arith.mulf %217, %219 : vector<16x256xf32>
    %c16_197 = arith.constant 16 : index
    %c0_198 = arith.constant 0 : index
    %221 = vector.load %arg18[%c16_197, %c0_198] : memref<144x256xf32, #tpu.memory_space<vmem>>, vector<16x256xf32>
    tpu.vector_store %arg18[%c16_197, %c0_198], %220 {strides = array<i32>} : memref<144x256xf32, #tpu.memory_space<vmem>>, vector<16x256xf32>,
    %c15_i32_199 = arith.constant 15 : i32
    %222 = tpu.dynamic_rotate %211 by %c15_i32_199 dim 1 : vector<16x256xf32>, i32 -> vector<16x256xf32>
    %c2_200 = arith.constant 2 : index
    %c0_201 = arith.constant 0 : index
    %223 = vector.load %arg14[%c2_200, %c0_201] : memref<9x256xf32, #tpu.memory_space<vmem>>, vector<1x256xf32>
    %224 = vector.broadcast %223 : vector<1x256xf32> to vector<16x256xf32>
    %225 = arith.mulf %222, %224 : vector<16x256xf32>
    %c32_202 = arith.constant 32 : index
    %c0_203 = arith.constant 0 : index
    %226 = vector.load %arg18[%c32_202, %c0_203] : memref<144x256xf32, #tpu.memory_space<vmem>>, vector<16x256xf32>
    tpu.vector_store %arg18[%c32_202, %c0_203], %225 {strides = array<i32>} : memref<144x256xf32, #tpu.memory_space<vmem>>, vector<16x256xf32>,
    %c1_i32_204 = arith.constant 1 : i32
    %227 = tpu.dynamic_rotate %211 by %c1_i32_204 dim 1 : vector<16x256xf32>, i32 -> vector<16x256xf32>
    %c3_205 = arith.constant 3 : index
    %c0_206 = arith.constant 0 : index
    %228 = vector.load %arg14[%c3_205, %c0_206] : memref<9x256xf32, #tpu.memory_space<vmem>>, vector<1x256xf32>
    %229 = vector.broadcast %228 : vector<1x256xf32> to vector<16x256xf32>
    %230 = arith.mulf %227, %229 : vector<16x256xf32>
    %c48_207 = arith.constant 48 : index
    %c0_208 = arith.constant 0 : index
    %231 = vector.load %arg18[%c48_207, %c0_208] : memref<144x256xf32, #tpu.memory_space<vmem>>, vector<16x256xf32>
    tpu.vector_store %arg18[%c48_207, %c0_208], %230 {strides = array<i32>} : memref<144x256xf32, #tpu.memory_space<vmem>>, vector<16x256xf32>,
    %c4_209 = arith.constant 4 : index
    %c0_210 = arith.constant 0 : index
    %232 = vector.load %arg14[%c4_209, %c0_210] : memref<9x256xf32, #tpu.memory_space<vmem>>, vector<1x256xf32>
    %233 = vector.broadcast %232 : vector<1x256xf32> to vector<16x256xf32>
    %234 = arith.mulf %211, %233 : vector<16x256xf32>
    %c64_211 = arith.constant 64 : index
    %c0_212 = arith.constant 0 : index
    %235 = vector.load %arg18[%c64_211, %c0_212] : memref<144x256xf32, #tpu.memory_space<vmem>>, vector<16x256xf32>
    tpu.vector_store %arg18[%c64_211, %c0_212], %234 {strides = array<i32>} : memref<144x256xf32, #tpu.memory_space<vmem>>, vector<16x256xf32>,
    %c255_i32_213 = arith.constant 255 : i32
    %236 = tpu.dynamic_rotate %211 by %c255_i32_213 dim 1 : vector<16x256xf32>, i32 -> vector<16x256xf32>
    %c5_214 = arith.constant 5 : index
    %c0_215 = arith.constant 0 : index
    %237 = vector.load %arg14[%c5_214, %c0_215] : memref<9x256xf32, #tpu.memory_space<vmem>>, vector<1x256xf32>
    %238 = vector.broadcast %237 : vector<1x256xf32> to vector<16x256xf32>
    %239 = arith.mulf %236, %238 : vector<16x256xf32>
    %c80_216 = arith.constant 80 : index
    %c0_217 = arith.constant 0 : index
    %240 = vector.load %arg18[%c80_216, %c0_217] : memref<144x256xf32, #tpu.memory_space<vmem>>, vector<16x256xf32>
    tpu.vector_store %arg18[%c80_216, %c0_217], %239 {strides = array<i32>} : memref<144x256xf32, #tpu.memory_space<vmem>>, vector<16x256xf32>,
    %c241_i32_218 = arith.constant 241 : i32
    %241 = tpu.dynamic_rotate %211 by %c241_i32_218 dim 1 : vector<16x256xf32>, i32 -> vector<16x256xf32>
    %c6_219 = arith.constant 6 : index
    %c0_220 = arith.constant 0 : index
    %242 = vector.load %arg14[%c6_219, %c0_220] : memref<9x256xf32, #tpu.memory_space<vmem>>, vector<1x256xf32>
    %243 = vector.broadcast %242 : vector<1x256xf32> to vector<16x256xf32>
    %244 = arith.mulf %241, %243 : vector<16x256xf32>
    %c96_221 = arith.constant 96 : index
    %c0_222 = arith.constant 0 : index
    %245 = vector.load %arg18[%c96_221, %c0_222] : memref<144x256xf32, #tpu.memory_space<vmem>>, vector<16x256xf32>
    tpu.vector_store %arg18[%c96_221, %c0_222], %244 {strides = array<i32>} : memref<144x256xf32, #tpu.memory_space<vmem>>, vector<16x256xf32>,
    %c240_i32_223 = arith.constant 240 : i32
    %246 = tpu.dynamic_rotate %211 by %c240_i32_223 dim 1 : vector<16x256xf32>, i32 -> vector<16x256xf32>
    %c7_224 = arith.constant 7 : index
    %c0_225 = arith.constant 0 : index
    %247 = vector.load %arg14[%c7_224, %c0_225] : memref<9x256xf32, #tpu.memory_space<vmem>>, vector<1x256xf32>
    %248 = vector.broadcast %247 : vector<1x256xf32> to vector<16x256xf32>
    %249 = arith.mulf %246, %248 : vector<16x256xf32>
    %c112_226 = arith.constant 112 : index
    %c0_227 = arith.constant 0 : index
    %250 = vector.load %arg18[%c112_226, %c0_227] : memref<144x256xf32, #tpu.memory_space<vmem>>, vector<16x256xf32>
    tpu.vector_store %arg18[%c112_226, %c0_227], %249 {strides = array<i32>} : memref<144x256xf32, #tpu.memory_space<vmem>>, vector<16x256xf32>,
    %c239_i32_228 = arith.constant 239 : i32
    %251 = tpu.dynamic_rotate %211 by %c239_i32_228 dim 1 : vector<16x256xf32>, i32 -> vector<16x256xf32>
    %c8_229 = arith.constant 8 : index
    %c0_230 = arith.constant 0 : index
    %252 = vector.load %arg14[%c8_229, %c0_230] : memref<9x256xf32, #tpu.memory_space<vmem>>, vector<1x256xf32>
    %253 = vector.broadcast %252 : vector<1x256xf32> to vector<16x256xf32>
    %254 = arith.mulf %251, %253 : vector<16x256xf32>
    %c128_231 = arith.constant 128 : index
    %c0_232 = arith.constant 0 : index
    %255 = vector.load %arg18[%c128_231, %c0_232] : memref<144x256xf32, #tpu.memory_space<vmem>>, vector<16x256xf32>
    tpu.vector_store %arg18[%c128_231, %c0_232], %254 {strides = array<i32>} : memref<144x256xf32, #tpu.memory_space<vmem>>, vector<16x256xf32>,
    %c0_233 = arith.constant 0 : index
    %c0_234 = arith.constant 0 : index
    %256 = vector.load %arg10[%c0_233, %c0_234] : memref<16x144xf32, #tpu.memory_space<vmem>>, vector<16x144xf32>
    %c0_235 = arith.constant 0 : index
    %c0_236 = arith.constant 0 : index
    %257 = vector.load %arg18[%c0_235, %c0_236] : memref<144x256xf32, #tpu.memory_space<vmem>>, vector<144x256xf32>
    %cst_237 = arith.constant dense<0.000000e+00> : vector<16x256xf32>
    %258 = tpu.matmul %256, %257, %cst_237 {dimension_numbers = #tpu.dot_dimension_numbers<[1], [0], [0], [1], [0, 0, 1, 1], [], []>} : vector<16x144xf32>, vector<144x256xf32>, vector<16x256xf32> -> vector<16x256xf32>
    %c0_238 = arith.constant 0 : index
    %c0_239 = arith.constant 0 : index
    %259 = vector.load %arg11[%c0_238, %c0_239] : memref<16x1xf32, #tpu.memory_space<vmem>>, vector<16x1xf32>
    %260 = vector.broadcast %259 : vector<16x1xf32> to vector<16x256xf32>
    %261 = arith.addf %258, %260 : vector<16x256xf32>
    %cst_240 = arith.constant 0.000000e+00 : f32
    %262 = vector.broadcast %cst_240 : f32 to vector<16x256xf32>
    %263 = arith.maximumf %261, %262 : vector<16x256xf32>
    %c17_i32_241 = arith.constant 17 : i32
    %264 = tpu.dynamic_rotate %263 by %c17_i32_241 dim 1 : vector<16x256xf32>, i32 -> vector<16x256xf32>
    %c0_242 = arith.constant 0 : index
    %c0_243 = arith.constant 0 : index
    %265 = vector.load %arg14[%c0_242, %c0_243] : memref<9x256xf32, #tpu.memory_space<vmem>>, vector<1x256xf32>
    %266 = vector.broadcast %265 : vector<1x256xf32> to vector<16x256xf32>
    %267 = arith.mulf %264, %266 : vector<16x256xf32>
    %c0_244 = arith.constant 0 : index
    %c0_245 = arith.constant 0 : index
    %268 = vector.load %arg18[%c0_244, %c0_245] : memref<144x256xf32, #tpu.memory_space<vmem>>, vector<16x256xf32>
    tpu.vector_store %arg18[%c0_244, %c0_245], %267 {strides = array<i32>} : memref<144x256xf32, #tpu.memory_space<vmem>>, vector<16x256xf32>,
    %c16_i32_246 = arith.constant 16 : i32
    %269 = tpu.dynamic_rotate %263 by %c16_i32_246 dim 1 : vector<16x256xf32>, i32 -> vector<16x256xf32>
    %c1_247 = arith.constant 1 : index
    %c0_248 = arith.constant 0 : index
    %270 = vector.load %arg14[%c1_247, %c0_248] : memref<9x256xf32, #tpu.memory_space<vmem>>, vector<1x256xf32>
    %271 = vector.broadcast %270 : vector<1x256xf32> to vector<16x256xf32>
    %272 = arith.mulf %269, %271 : vector<16x256xf32>
    %c16_249 = arith.constant 16 : index
    %c0_250 = arith.constant 0 : index
    %273 = vector.load %arg18[%c16_249, %c0_250] : memref<144x256xf32, #tpu.memory_space<vmem>>, vector<16x256xf32>
    tpu.vector_store %arg18[%c16_249, %c0_250], %272 {strides = array<i32>} : memref<144x256xf32, #tpu.memory_space<vmem>>, vector<16x256xf32>,
    %c15_i32_251 = arith.constant 15 : i32
    %274 = tpu.dynamic_rotate %263 by %c15_i32_251 dim 1 : vector<16x256xf32>, i32 -> vector<16x256xf32>
    %c2_252 = arith.constant 2 : index
    %c0_253 = arith.constant 0 : index
    %275 = vector.load %arg14[%c2_252, %c0_253] : memref<9x256xf32, #tpu.memory_space<vmem>>, vector<1x256xf32>
    %276 = vector.broadcast %275 : vector<1x256xf32> to vector<16x256xf32>
    %277 = arith.mulf %274, %276 : vector<16x256xf32>
    %c32_254 = arith.constant 32 : index
    %c0_255 = arith.constant 0 : index
    %278 = vector.load %arg18[%c32_254, %c0_255] : memref<144x256xf32, #tpu.memory_space<vmem>>, vector<16x256xf32>
    tpu.vector_store %arg18[%c32_254, %c0_255], %277 {strides = array<i32>} : memref<144x256xf32, #tpu.memory_space<vmem>>, vector<16x256xf32>,
    %c1_i32_256 = arith.constant 1 : i32
    %279 = tpu.dynamic_rotate %263 by %c1_i32_256 dim 1 : vector<16x256xf32>, i32 -> vector<16x256xf32>
    %c3_257 = arith.constant 3 : index
    %c0_258 = arith.constant 0 : index
    %280 = vector.load %arg14[%c3_257, %c0_258] : memref<9x256xf32, #tpu.memory_space<vmem>>, vector<1x256xf32>
    %281 = vector.broadcast %280 : vector<1x256xf32> to vector<16x256xf32>
    %282 = arith.mulf %279, %281 : vector<16x256xf32>
    %c48_259 = arith.constant 48 : index
    %c0_260 = arith.constant 0 : index
    %283 = vector.load %arg18[%c48_259, %c0_260] : memref<144x256xf32, #tpu.memory_space<vmem>>, vector<16x256xf32>
    tpu.vector_store %arg18[%c48_259, %c0_260], %282 {strides = array<i32>} : memref<144x256xf32, #tpu.memory_space<vmem>>, vector<16x256xf32>,
    %c4_261 = arith.constant 4 : index
    %c0_262 = arith.constant 0 : index
    %284 = vector.load %arg14[%c4_261, %c0_262] : memref<9x256xf32, #tpu.memory_space<vmem>>, vector<1x256xf32>
    %285 = vector.broadcast %284 : vector<1x256xf32> to vector<16x256xf32>
    %286 = arith.mulf %263, %285 : vector<16x256xf32>
    %c64_263 = arith.constant 64 : index
    %c0_264 = arith.constant 0 : index
    %287 = vector.load %arg18[%c64_263, %c0_264] : memref<144x256xf32, #tpu.memory_space<vmem>>, vector<16x256xf32>
    tpu.vector_store %arg18[%c64_263, %c0_264], %286 {strides = array<i32>} : memref<144x256xf32, #tpu.memory_space<vmem>>, vector<16x256xf32>,
    %c255_i32_265 = arith.constant 255 : i32
    %288 = tpu.dynamic_rotate %263 by %c255_i32_265 dim 1 : vector<16x256xf32>, i32 -> vector<16x256xf32>
    %c5_266 = arith.constant 5 : index
    %c0_267 = arith.constant 0 : index
    %289 = vector.load %arg14[%c5_266, %c0_267] : memref<9x256xf32, #tpu.memory_space<vmem>>, vector<1x256xf32>
    %290 = vector.broadcast %289 : vector<1x256xf32> to vector<16x256xf32>
    %291 = arith.mulf %288, %290 : vector<16x256xf32>
    %c80_268 = arith.constant 80 : index
    %c0_269 = arith.constant 0 : index
    %292 = vector.load %arg18[%c80_268, %c0_269] : memref<144x256xf32, #tpu.memory_space<vmem>>, vector<16x256xf32>
    tpu.vector_store %arg18[%c80_268, %c0_269], %291 {strides = array<i32>} : memref<144x256xf32, #tpu.memory_space<vmem>>, vector<16x256xf32>,
    %c241_i32_270 = arith.constant 241 : i32
    %293 = tpu.dynamic_rotate %263 by %c241_i32_270 dim 1 : vector<16x256xf32>, i32 -> vector<16x256xf32>
    %c6_271 = arith.constant 6 : index
    %c0_272 = arith.constant 0 : index
    %294 = vector.load %arg14[%c6_271, %c0_272] : memref<9x256xf32, #tpu.memory_space<vmem>>, vector<1x256xf32>
    %295 = vector.broadcast %294 : vector<1x256xf32> to vector<16x256xf32>
    %296 = arith.mulf %293, %295 : vector<16x256xf32>
    %c96_273 = arith.constant 96 : index
    %c0_274 = arith.constant 0 : index
    %297 = vector.load %arg18[%c96_273, %c0_274] : memref<144x256xf32, #tpu.memory_space<vmem>>, vector<16x256xf32>
    tpu.vector_store %arg18[%c96_273, %c0_274], %296 {strides = array<i32>} : memref<144x256xf32, #tpu.memory_space<vmem>>, vector<16x256xf32>,
    %c240_i32_275 = arith.constant 240 : i32
    %298 = tpu.dynamic_rotate %263 by %c240_i32_275 dim 1 : vector<16x256xf32>, i32 -> vector<16x256xf32>
    %c7_276 = arith.constant 7 : index
    %c0_277 = arith.constant 0 : index
    %299 = vector.load %arg14[%c7_276, %c0_277] : memref<9x256xf32, #tpu.memory_space<vmem>>, vector<1x256xf32>
    %300 = vector.broadcast %299 : vector<1x256xf32> to vector<16x256xf32>
    %301 = arith.mulf %298, %300 : vector<16x256xf32>
    %c112_278 = arith.constant 112 : index
    %c0_279 = arith.constant 0 : index
    %302 = vector.load %arg18[%c112_278, %c0_279] : memref<144x256xf32, #tpu.memory_space<vmem>>, vector<16x256xf32>
    tpu.vector_store %arg18[%c112_278, %c0_279], %301 {strides = array<i32>} : memref<144x256xf32, #tpu.memory_space<vmem>>, vector<16x256xf32>,
    %c239_i32_280 = arith.constant 239 : i32
    %303 = tpu.dynamic_rotate %263 by %c239_i32_280 dim 1 : vector<16x256xf32>, i32 -> vector<16x256xf32>
    %c8_281 = arith.constant 8 : index
    %c0_282 = arith.constant 0 : index
    %304 = vector.load %arg14[%c8_281, %c0_282] : memref<9x256xf32, #tpu.memory_space<vmem>>, vector<1x256xf32>
    %305 = vector.broadcast %304 : vector<1x256xf32> to vector<16x256xf32>
    %306 = arith.mulf %303, %305 : vector<16x256xf32>
    %c128_283 = arith.constant 128 : index
    %c0_284 = arith.constant 0 : index
    %307 = vector.load %arg18[%c128_283, %c0_284] : memref<144x256xf32, #tpu.memory_space<vmem>>, vector<16x256xf32>
    tpu.vector_store %arg18[%c128_283, %c0_284], %306 {strides = array<i32>} : memref<144x256xf32, #tpu.memory_space<vmem>>, vector<16x256xf32>,
    %c0_285 = arith.constant 0 : index
    %c0_286 = arith.constant 0 : index
    %308 = vector.load %arg12[%c0_285, %c0_286] : memref<1x144xf32, #tpu.memory_space<vmem>>, vector<1x144xf32>
    %c0_287 = arith.constant 0 : index
    %c0_288 = arith.constant 0 : index
    %309 = vector.load %arg18[%c0_287, %c0_288] : memref<144x256xf32, #tpu.memory_space<vmem>>, vector<144x256xf32>
    %cst_289 = arith.constant dense<0.000000e+00> : vector<1x256xf32>
    %310 = tpu.matmul %308, %309, %cst_289 {dimension_numbers = #tpu.dot_dimension_numbers<[1], [0], [0], [1], [0, 0, 1, 1], [], []>} : vector<1x144xf32>, vector<144x256xf32>, vector<1x256xf32> -> vector<1x256xf32>
    %c0_290 = arith.constant 0 : index
    %c0_291 = arith.constant 0 : index
    %311 = vector.load %arg13[%c0_290, %c0_291] : memref<1x1xf32, #tpu.memory_space<vmem>>, vector<1x1xf32>
    %312 = vector.broadcast %311 : vector<1x1xf32> to vector<1x256xf32>
    %313 = arith.addf %310, %312 : vector<1x256xf32>
    %c0_292 = arith.constant 0 : index
    %c0_293 = arith.constant 0 : index
    %c0_294 = arith.constant 0 : index
    %314 = vector.load %arg17[%c0_292, %c0_293, %c0_294] : memref<1x1x256xf32, #tpu.memory_space<vmem>>, vector<1x1x256xf32>
    %315 = vector.shape_cast %314 : vector<1x1x256xf32> to vector<1x256xf32>
    %316 = vector.shape_cast %313 : vector<1x256xf32> to vector<1x1x256xf32>
    tpu.vector_store %arg17[%c0_292, %c0_293, %c0_294], %316 {strides = array<i32>} : memref<1x1x256xf32, #tpu.memory_space<vmem>>, vector<1x1x256xf32>,
    return
  }
  func.func @transform_0(%arg0: i32) -> (i32, i32, i32) {
    %c0_i32 = arith.constant 0 : i32
    %c0_i32_0 = arith.constant 0 : i32
    %c0_i32_1 = arith.constant 0 : i32
    return %arg0, %c0_i32, %c0_i32_0 : i32, i32, i32
  }
  func.func @transform_1(%arg0: i32) -> (i32, i32) {
    %c0_i32 = arith.constant 0 : i32
    %c0_i32_0 = arith.constant 0 : i32
    %c0_i32_1 = arith.constant 0 : i32
    return %c0_i32, %c0_i32_0 : i32, i32
  }
  func.func @transform_2(%arg0: i32) -> (i32, i32) {
    %c0_i32 = arith.constant 0 : i32
    %c0_i32_0 = arith.constant 0 : i32
    %c0_i32_1 = arith.constant 0 : i32
    return %c0_i32, %c0_i32_0 : i32, i32
  }
  func.func @transform_3(%arg0: i32) -> (i32, i32) {
    %c0_i32 = arith.constant 0 : i32
    %c0_i32_0 = arith.constant 0 : i32
    %c0_i32_1 = arith.constant 0 : i32
    return %c0_i32, %c0_i32_0 : i32, i32
  }
  func.func @transform_4(%arg0: i32) -> (i32, i32) {
    %c0_i32 = arith.constant 0 : i32
    %c0_i32_0 = arith.constant 0 : i32
    %c0_i32_1 = arith.constant 0 : i32
    return %c0_i32, %c0_i32_0 : i32, i32
  }
  func.func @transform_5(%arg0: i32) -> (i32, i32) {
    %c0_i32 = arith.constant 0 : i32
    %c0_i32_0 = arith.constant 0 : i32
    %c0_i32_1 = arith.constant 0 : i32
    return %c0_i32, %c0_i32_0 : i32, i32
  }
  func.func @transform_6(%arg0: i32) -> (i32, i32) {
    %c0_i32 = arith.constant 0 : i32
    %c0_i32_0 = arith.constant 0 : i32
    %c0_i32_1 = arith.constant 0 : i32
    return %c0_i32, %c0_i32_0 : i32, i32
  }
  func.func @transform_7(%arg0: i32) -> (i32, i32) {
    %c0_i32 = arith.constant 0 : i32
    %c0_i32_0 = arith.constant 0 : i32
    %c0_i32_1 = arith.constant 0 : i32
    return %c0_i32, %c0_i32_0 : i32, i32
  }
  func.func @transform_8(%arg0: i32) -> (i32, i32) {
    %c0_i32 = arith.constant 0 : i32
    %c0_i32_0 = arith.constant 0 : i32
    %c0_i32_1 = arith.constant 0 : i32
    return %c0_i32, %c0_i32_0 : i32, i32
  }
  func.func @transform_9(%arg0: i32) -> (i32, i32) {
    %c0_i32 = arith.constant 0 : i32
    %c0_i32_0 = arith.constant 0 : i32
    %c0_i32_1 = arith.constant 0 : i32
    return %c0_i32, %c0_i32_0 : i32, i32
  }
  func.func @transform_10(%arg0: i32) -> (i32, i32) {
    %c0_i32 = arith.constant 0 : i32
    %c0_i32_0 = arith.constant 0 : i32
    %c0_i32_1 = arith.constant 0 : i32
    return %c0_i32, %c0_i32_0 : i32, i32
  }
  func.func @transform_11(%arg0: i32) -> (i32, i32) {
    %c0_i32 = arith.constant 0 : i32
    %c0_i32_0 = arith.constant 0 : i32
    %c0_i32_1 = arith.constant 0 : i32
    return %c0_i32, %c0_i32_0 : i32, i32
  }
  func.func @transform_12(%arg0: i32) -> (i32, i32) {
    %c0_i32 = arith.constant 0 : i32
    %c0_i32_0 = arith.constant 0 : i32
    %c0_i32_1 = arith.constant 0 : i32
    return %c0_i32, %c0_i32_0 : i32, i32
  }
  func.func @transform_13(%arg0: i32) -> (i32, i32) {
    %c0_i32 = arith.constant 0 : i32
    %c0_i32_0 = arith.constant 0 : i32
    %c0_i32_1 = arith.constant 0 : i32
    return %c0_i32, %c0_i32_0 : i32, i32
  }
  func.func @transform_14(%arg0: i32) -> (i32, i32) {
    %c0_i32 = arith.constant 0 : i32
    %c0_i32_0 = arith.constant 0 : i32
    %c0_i32_1 = arith.constant 0 : i32
    return %c0_i32, %c0_i32_0 : i32, i32
  }
  func.func @transform_15(%arg0: i32) -> (i32, i32) {
    %c0_i32 = arith.constant 0 : i32
    %c0_i32_0 = arith.constant 0 : i32
    %c0_i32_1 = arith.constant 0 : i32
    return %c0_i32, %c0_i32_0 : i32, i32
  }
  func.func @transform_16(%arg0: i32) -> (i32, i32, i32) {
    %c0_i32 = arith.constant 0 : i32
    %c0_i32_0 = arith.constant 0 : i32
    %c0_i32_1 = arith.constant 0 : i32
    return %arg0, %c0_i32, %c0_i32_0 : i32, i32, i32
  }
}

</mosaic_0001>

<llo_original>
// kernel: cae_forward.1
$region0: #{cae_forward.1}
  #allocation0 [shape = 'u32[]', space=smem, size = 0x4, offset = 0x4, fixed_abs, tag = 'smem constant byte address 0x4 - core index']
  #allocation1 [shape = 'u32[72,128]{1,0:T(1,128)}', space=vmem, size = 0x9000, scoped, tag = 'internal scratch']
  #allocation2 [shape = 'f32[144,256]{1,0:T(8,128)}', space=vmem, size = 0x24000, scoped, tag = 'scratch operand']
  #allocation3 [shape = 'f32[1,1]{1,0:T(1,128)S(1)}', space=vmem, size = 0x200, scoped, tag = 'scoped memory for cae_forward.1']
  #allocation4 [shape = 'f32[1,1]{1,0:T(1,128)S(1)}', space=vmem, size = 0x200, scoped, tag = 'scoped memory for cae_forward.1']
  %s0 = inlined_call_operand.vmem [shape: f32[2,1,256], index: 0, kind: input, shape index: {}]
  %s1 = inlined_call_operand.vmem [shape: f32[16,9], index: 1, kind: input, shape index: {}]
  %s2 = inlined_call_operand.vmem [shape: f32[16,1], index: 2, kind: input, shape index: {}]
  %s3 = inlined_call_operand.vmem [shape: f32[16,144], index: 3, kind: input, shape index: {}]
  %s4 = inlined_call_operand.vmem [shape: f32[16,1], index: 4, kind: input, shape index: {}]
  %s5 = inlined_call_operand.vmem [shape: f32[1,144], index: 5, kind: input, shape index: {}]
  %s6 = inlined_call_operand.<no memory space> [shape: f32[1,1], index: 6, kind: input, shape index: {}]
  %s7 = inlined_call_operand.vmem [shape: f32[16,9], index: 7, kind: input, shape index: {}]
  %s8 = inlined_call_operand.vmem [shape: f32[16,1], index: 8, kind: input, shape index: {}]
  %s9 = inlined_call_operand.vmem [shape: f32[16,144], index: 9, kind: input, shape index: {}]
  %s10 = inlined_call_operand.vmem [shape: f32[16,1], index: 10, kind: input, shape index: {}]
  %s11 = inlined_call_operand.vmem [shape: f32[1,144], index: 11, kind: input, shape index: {}]
  %s12 = inlined_call_operand.<no memory space> [shape: f32[1,1], index: 12, kind: input, shape index: {}]
  %s13 = inlined_call_operand.vmem [shape: f32[9,256], index: 13, kind: input, shape index: {}]
  %s14 = inlined_call_operand.vmem [shape: f32[9,256], index: 14, kind: input, shape index: {}]
  %s15 = inlined_call_operand.vmem [shape: f32[4,256], index: 15, kind: input, shape index: {}]
  %s16 = inlined_call_operand.vmem [shape: f32[2,1,256], index: 16, kind: output, shape index: {}]
  %s17 = sld [smem:[#allocation0]]
  $region97: #{cae_forward.1} parent=0
    _
  %s19 = ssub.s32 1, %s17
  %s20 = scalar_select 0, %s19, %s17
  %v21 = vstv %s6
  %22 = vst [vmem:[#allocation3] sm:$0x1] %v21
  %v23 = vstv %s12
  %24 = vst [vmem:[#allocation4] sm:$0x1] %v23
  loop: start=0, step=1, limit=4
  $region2: #{cae_forward.1} parent=0 // loop_pre_header
    _
  $region3: #{cae_forward.1} parent=0 // loop_header
    %s26 = sphi 0, %s30
    %p27 = scmp.ge.s32.totalorder %s26, 4
    %s36 = sphi 0, %s38
    %s39 = sphi 0, %s36
    %s40 = sphi 0, %s39
    %s56 = sphi 0, %s40
    %s60 = sphi 0, %s60
    %s62 = sphi 0, %s60
    %s63 = sphi 0, %s62
    %s77 = sphi 0, %s63
    %s81 = sphi 0, %s81
    %s83 = sphi 0, %s81
    %s84 = sphi 0, %s83
    %s98 = sphi 0, %s84
    %s102 = sphi 0, %s102
    %s104 = sphi 0, %s102
    %s105 = sphi 0, %s104
    %s119 = sphi 0, %s105
    %s123 = sphi 0, %s123
    %s125 = sphi 0, %s123
    %s126 = sphi 0, %s125
    %s140 = sphi 0, %s126
    %s144 = sphi 0, %s144
    %s146 = sphi 0, %s144
    %s147 = sphi 0, %s146
    %s161 = sphi 0, %s147
    %s165 = sphi 0, %s165
    %s167 = sphi 0, %s165
    %s168 = sphi 0, %s167
    %s182 = sphi 0, %s168
    %s186 = sphi 0, %s186
    %s188 = sphi 0, %s186
    %s189 = sphi 0, %s188
    %s203 = sphi 0, %s189
    %s207 = sphi 0, %s207
    %s209 = sphi 0, %s207
    %s210 = sphi 0, %s209
    %s224 = sphi 0, %s210
    %s228 = sphi 0, %s228
    %s230 = sphi 0, %s228
    %s231 = sphi 0, %s230
    %s245 = sphi 0, %s231
    %s249 = sphi 0, %s249
    %s251 = sphi 0, %s249
    %s252 = sphi 0, %s251
    %s266 = sphi 0, %s252
    %s270 = sphi 0, %s270
    %s272 = sphi 0, %s270
    %s273 = sphi 0, %s272
    %s287 = sphi 0, %s273
    %s291 = sphi 0, %s291
    %s293 = sphi 0, %s291
    %s294 = sphi 0, %s293
    %s308 = sphi 0, %s294
    %s312 = sphi 0, %s312
    %s314 = sphi 0, %s312
    %s315 = sphi 0, %s314
    %s329 = sphi 0, %s315
    %s333 = sphi 0, %s333
    %s335 = sphi 0, %s333
    %s336 = sphi 0, %s335
    %s350 = sphi 0, %s336
    %s354 = sphi 0, %s354
    %s356 = sphi 0, %s354
    %s357 = sphi 0, %s356
    %s371 = sphi 0, %s357
    %s377 = sphi 0, %s379
    %s380 = sphi 0, %s377
    %s381 = sphi 0, %s380
    %s397 = sphi 0, %s381
  $region4: #{cae_forward.1} parent=0 // loop_header_branch
    %29 = sbr.rel (%p27) target = $region8
  $region5: #{cae_forward.1} parent=0 // loop_body
    %s31 = ssub.s32 %s26, 1
    %s32 = ssub.s32 %s26, 2
    %s33 = sadd.s32 %s26, 1
    %s34 = ssub.s32 %s26, %s33
    %p35 = scmp.eq.s32.totalorder %s34, 0
    %s37 = sadd.s32 %s36, 1
    %s38 = scalar_select %p35, %s36, %s37
    %p41 = pneg %p35
    %p42 = scmp.eq.s32.totalorder %s26, 1
    %p43 = por %p41, %p42
    %p44 = scmp.ne.s32.totalorder %s36, %s39
    %p45 = scmp.eq.s32.totalorder %s26, 0
    %p46 = por %p44, %p45
    %p47 = scmp.ne.s32.totalorder %s36, %s39
    %p48 = scmp.eq.s32.totalorder %s31, 1
    %p49 = por %p47, %p48
    %p50 = scmp.ne.s32.totalorder %s39, %s40
    %p51 = scmp.eq.s32.totalorder %s31, 0
    %p52 = por %p50, %p51
    %p53 = scmp.ne.s32.totalorder %s39, %s40
    %p54 = scmp.eq.s32.totalorder %s32, 1
    %p55 = por %p53, %p54
    %p57 = scmp.ne.s32.totalorder %s40, %s56
    %p58 = scmp.eq.s32.totalorder %s32, 0
    %p59 = por %p57, %p58
    %s61 = sadd.s32 %s60, 1
    %p64 = scmp.eq.s32.totalorder %s26, 1
    %p65 = scmp.ne.s32.totalorder %s60, %s62
    %p66 = scmp.eq.s32.totalorder %s26, 0
    %p67 = por %p65, %p66
    %p68 = scmp.ne.s32.totalorder %s60, %s62
    %p69 = scmp.eq.s32.totalorder %s31, 1
    %p70 = por %p68, %p69
    %p71 = scmp.ne.s32.totalorder %s62, %s63
    %p72 = scmp.eq.s32.totalorder %s31, 0
    %p73 = por %p71, %p72
    %p74 = scmp.ne.s32.totalorder %s62, %s63
    %p75 = scmp.eq.s32.totalorder %s32, 1
    %p76 = por %p74, %p75
    %p78 = scmp.ne.s32.totalorder %s63, %s77
    %p79 = scmp.eq.s32.totalorder %s32, 0
    %p80 = por %p78, %p79
    %s82 = sadd.s32 %s81, 1
    %p85 = scmp.eq.s32.totalorder %s26, 1
    %p86 = scmp.ne.s32.totalorder %s81, %s83
    %p87 = scmp.eq.s32.totalorder %s26, 0
    %p88 = por %p86, %p87
    %p89 = scmp.ne.s32.totalorder %s81, %s83
    %p90 = scmp.eq.s32.totalorder %s31, 1
    %p91 = por %p89, %p90
    %p92 = scmp.ne.s32.totalorder %s83, %s84
    %p93 = scmp.eq.s32.totalorder %s31, 0
    %p94 = por %p92, %p93
    %p95 = scmp.ne.s32.totalorder %s83, %s84
    %p96 = scmp.eq.s32.totalorder %s32, 1
    %p97 = por %p95, %p96
    %p99 = scmp.ne.s32.totalorder %s84, %s98
    %p100 = scmp.eq.s32.totalorder %s32, 0
    %p101 = por %p99, %p100
    %s103 = sadd.s32 %s102, 1
    %p106 = scmp.eq.s32.totalorder %s26, 1
    %p107 = scmp.ne.s32.totalorder %s102, %s104
    %p108 = scmp.eq.s32.totalorder %s26, 0
    %p109 = por %p107, %p108
    %p110 = scmp.ne.s32.totalorder %s102, %s104
    %p111 = scmp.eq.s32.totalorder %s31, 1
    %p112 = por %p110, %p111
    %p113 = scmp.ne.s32.totalorder %s104, %s105
    %p114 = scmp.eq.s32.totalorder %s31, 0
    %p115 = por %p113, %p114
    %p116 = scmp.ne.s32.totalorder %s104, %s105
    %p117 = scmp.eq.s32.totalorder %s32, 1
    %p118 = por %p116, %p117
    %p120 = scmp.ne.s32.totalorder %s105, %s119
    %p121 = scmp.eq.s32.totalorder %s32, 0
    %p122 = por %p120, %p121
    %s124 = sadd.s32 %s123, 1
    %p127 = scmp.eq.s32.totalorder %s26, 1
    %p128 = scmp.ne.s32.totalorder %s123, %s125
    %p129 = scmp.eq.s32.totalorder %s26, 0
    %p130 = por %p128, %p129
    %p131 = scmp.ne.s32.totalorder %s123, %s125
    %p132 = scmp.eq.s32.totalorder %s31, 1
    %p133 = por %p131, %p132
    %p134 = scmp.ne.s32.totalorder %s125, %s126
    %p135 = scmp.eq.s32.totalorder %s31, 0
    %p136 = por %p134, %p135
    %p137 = scmp.ne.s32.totalorder %s125, %s126
    %p138 = scmp.eq.s32.totalorder %s32, 1
    %p139 = por %p137, %p138
    %p141 = scmp.ne.s32.totalorder %s126, %s140
    %p142 = scmp.eq.s32.totalorder %s32, 0
    %p143 = por %p141, %p142
    %s145 = sadd.s32 %s144, 1
    %p148 = scmp.eq.s32.totalorder %s26, 1
    %p149 = scmp.ne.s32.totalorder %s144, %s146
    %p150 = scmp.eq.s32.totalorder %s26, 0
    %p151 = por %p149, %p150
    %p152 = scmp.ne.s32.totalorder %s144, %s146
    %p153 = scmp.eq.s32.totalorder %s31, 1
    %p154 = por %p152, %p153
    %p155 = scmp.ne.s32.totalorder %s146, %s147
    %p156 = scmp.eq.s32.totalorder %s31, 0
    %p157 = por %p155, %p156
    %p158 = scmp.ne.s32.totalorder %s146, %s147
    %p159 = scmp.eq.s32.totalorder %s32, 1
    %p160 = por %p158, %p159
    %p162 = scmp.ne.s32.totalorder %s147, %s161
    %p163 = scmp.eq.s32.totalorder %s32, 0
    %p164 = por %p162, %p163
    %s166 = sadd.s32 %s165, 1
    %p169 = scmp.eq.s32.totalorder %s26, 1
    %p170 = scmp.ne.s32.totalorder %s165, %s167
    %p171 = scmp.eq.s32.totalorder %s26, 0
    %p172 = por %p170, %p171
    %p173 = scmp.ne.s32.totalorder %s165, %s167
    %p174 = scmp.eq.s32.totalorder %s31, 1
    %p175 = por %p173, %p174
    %p176 = scmp.ne.s32.totalorder %s167, %s168
    %p177 = scmp.eq.s32.totalorder %s31, 0
    %p178 = por %p176, %p177
    %p179 = scmp.ne.s32.totalorder %s167, %s168
    %p180 = scmp.eq.s32.totalorder %s32, 1
    %p181 = por %p179, %p180
    %p183 = scmp.ne.s32.totalorder %s168, %s182
    %p184 = scmp.eq.s32.totalorder %s32, 0
    %p185 = por %p183, %p184
    %s187 = sadd.s32 %s186, 1
    %p190 = scmp.eq.s32.totalorder %s26, 1
    %p191 = scmp.ne.s32.totalorder %s186, %s188
    %p192 = scmp.eq.s32.totalorder %s26, 0
    %p193 = por %p191, %p192
    %p194 = scmp.ne.s32.totalorder %s186, %s188
    %p195 = scmp.eq.s32.totalorder %s31, 1
    %p196 = por %p194, %p195
    %p197 = scmp.ne.s32.totalorder %s188, %s189
    %p198 = scmp.eq.s32.totalorder %s31, 0
    %p199 = por %p197, %p198
    %p200 = scmp.ne.s32.totalorder %s188, %s189
    %p201 = scmp.eq.s32.totalorder %s32, 1
    %p202 = por %p200, %p201
    %p204 = scmp.ne.s32.totalorder %s189, %s203
    %p205 = scmp.eq.s32.totalorder %s32, 0
    %p206 = por %p204, %p205
    %s208 = sadd.s32 %s207, 1
    %p211 = scmp.eq.s32.totalorder %s26, 1
    %p212 = scmp.ne.s32.totalorder %s207, %s209
    %p213 = scmp.eq.s32.totalorder %s26, 0
    %p214 = por %p212, %p213
    %p215 = scmp.ne.s32.totalorder %s207, %s209
    %p216 = scmp.eq.s32.totalorder %s31, 1
    %p217 = por %p215, %p216
    %p218 = scmp.ne.s32.totalorder %s209, %s210
    %p219 = scmp.eq.s32.totalorder %s31, 0
    %p220 = por %p218, %p219
    %p221 = scmp.ne.s32.totalorder %s209, %s210
    %p222 = scmp.eq.s32.totalorder %s32, 1
    %p223 = por %p221, %p222
    %p225 = scmp.ne.s32.totalorder %s210, %s224
    %p226 = scmp.eq.s32.totalorder %s32, 0
    %p227 = por %p225, %p226
    %s229 = sadd.s32 %s228, 1
    %p232 = scmp.eq.s32.totalorder %s26, 1
    %p233 = scmp.ne.s32.totalorder %s228, %s230
    %p234 = scmp.eq.s32.totalorder %s26, 0
    %p235 = por %p233, %p234
    %p236 = scmp.ne.s32.totalorder %s228, %s230
    %p237 = scmp.eq.s32.totalorder %s31, 1
    %p238 = por %p236, %p237
    %p239 = scmp.ne.s32.totalorder %s230, %s231
    %p240 = scmp.eq.s32.totalorder %s31, 0
    %p241 = por %p239, %p240
    %p242 = scmp.ne.s32.totalorder %s230, %s231
    %p243 = scmp.eq.s32.totalorder %s32, 1
    %p244 = por %p242, %p243
    %p246 = scmp.ne.s32.totalorder %s231, %s245
    %p247 = scmp.eq.s32.totalorder %s32, 0
    %p248 = por %p246, %p247
    %s250 = sadd.s32 %s249, 1
    %p253 = scmp.eq.s32.totalorder %s26, 1
    %p254 = scmp.ne.s32.totalorder %s249, %s251
    %p255 = scmp.eq.s32.totalorder %s26, 0
    %p256 = por %p254, %p255
    %p257 = scmp.ne.s32.totalorder %s249, %s251
    %p258 = scmp.eq.s32.totalorder %s31, 1
    %p259 = por %p257, %p258
    %p260 = scmp.ne.s32.totalorder %s251, %s252
    %p261 = scmp.eq.s32.totalorder %s31, 0
    %p262 = por %p260, %p261
    %p263 = scmp.ne.s32.totalorder %s251, %s252
    %p264 = scmp.eq.s32.totalorder %s32, 1
    %p265 = por %p263, %p264
    %p267 = scmp.ne.s32.totalorder %s252, %s266
    %p268 = scmp.eq.s32.totalorder %s32, 0
    %p269 = por %p267, %p268
    %s271 = sadd.s32 %s270, 1
    %p274 = scmp.eq.s32.totalorder %s26, 1
    %p275 = scmp.ne.s32.totalorder %s270, %s272
    %p276 = scmp.eq.s32.totalorder %s26, 0
    %p277 = por %p275, %p276
    %p278 = scmp.ne.s32.totalorder %s270, %s272
    %p279 = scmp.eq.s32.totalorder %s31, 1
    %p280 = por %p278, %p279
    %p281 = scmp.ne.s32.totalorder %s272, %s273
    %p282 = scmp.eq.s32.totalorder %s31, 0
    %p283 = por %p281, %p282
    %p284 = scmp.ne.s32.totalorder %s272, %s273
    %p285 = scmp.eq.s32.totalorder %s32, 1
    %p286 = por %p284, %p285
    %p288 = scmp.ne.s32.totalorder %s273, %s287
    %p289 = scmp.eq.s32.totalorder %s32, 0
    %p290 = por %p288, %p289
    %s292 = sadd.s32 %s291, 1
    %p295 = scmp.eq.s32.totalorder %s26, 1
    %p296 = scmp.ne.s32.totalorder %s291, %s293
    %p297 = scmp.eq.s32.totalorder %s26, 0
    %p298 = por %p296, %p297
    %p299 = scmp.ne.s32.totalorder %s291, %s293
    %p300 = scmp.eq.s32.totalorder %s31, 1
    %p301 = por %p299, %p300
    %p302 = scmp.ne.s32.totalorder %s293, %s294
    %p303 = scmp.eq.s32.totalorder %s31, 0
    %p304 = por %p302, %p303
    %p305 = scmp.ne.s32.totalorder %s293, %s294
    %p306 = scmp.eq.s32.totalorder %s32, 1
    %p307 = por %p305, %p306
    %p309 = scmp.ne.s32.totalorder %s294, %s308
    %p310 = scmp.eq.s32.totalorder %s32, 0
    %p311 = por %p309, %p310
    %s313 = sadd.s32 %s312, 1
    %p316 = scmp.eq.s32.totalorder %s26, 1
    %p317 = scmp.ne.s32.totalorder %s312, %s314
    %p318 = scmp.eq.s32.totalorder %s26, 0
    %p319 = por %p317, %p318
    %p320 = scmp.ne.s32.totalorder %s312, %s314
    %p321 = scmp.eq.s32.totalorder %s31, 1
    %p322 = por %p320, %p321
    %p323 = scmp.ne.s32.totalorder %s314, %s315
    %p324 = scmp.eq.s32.totalorder %s31, 0
    %p325 = por %p323, %p324
    %p326 = scmp.ne.s32.totalorder %s314, %s315
    %p327 = scmp.eq.s32.totalorder %s32, 1
    %p328 = por %p326, %p327
    %p330 = scmp.ne.s32.totalorder %s315, %s329
    %p331 = scmp.eq.s32.totalorder %s32, 0
    %p332 = por %p330, %p331
    %s334 = sadd.s32 %s333, 1
    %p337 = scmp.eq.s32.totalorder %s26, 1
    %p338 = scmp.ne.s32.totalorder %s333, %s335
    %p339 = scmp.eq.s32.totalorder %s26, 0
    %p340 = por %p338, %p339
    %p341 = scmp.ne.s32.totalorder %s333, %s335
    %p342 = scmp.eq.s32.totalorder %s31, 1
    %p343 = por %p341, %p342
    %p344 = scmp.ne.s32.totalorder %s335, %s336
    %p345 = scmp.eq.s32.totalorder %s31, 0
    %p346 = por %p344, %p345
    %p347 = scmp.ne.s32.totalorder %s335, %s336
    %p348 = scmp.eq.s32.totalorder %s32, 1
    %p349 = por %p347, %p348
    %p351 = scmp.ne.s32.totalorder %s336, %s350
    %p352 = scmp.eq.s32.totalorder %s32, 0
    %p353 = por %p351, %p352
    %s355 = sadd.s32 %s354, 1
    %p358 = scmp.eq.s32.totalorder %s26, 1
    %p359 = scmp.ne.s32.totalorder %s354, %s356
    %p360 = scmp.eq.s32.totalorder %s26, 0
    %p361 = por %p359, %p360
    %p362 = scmp.ne.s32.totalorder %s354, %s356
    %p363 = scmp.eq.s32.totalorder %s31, 1
    %p364 = por %p362, %p363
    %p365 = scmp.ne.s32.totalorder %s356, %s357
    %p366 = scmp.eq.s32.totalorder %s31, 0
    %p367 = por %p365, %p366
    %p368 = scmp.ne.s32.totalorder %s356, %s357
    %p369 = scmp.eq.s32.totalorder %s32, 1
    %p370 = por %p368, %p369
    %p372 = scmp.ne.s32.totalorder %s357, %s371
    %p373 = scmp.eq.s32.totalorder %s32, 0
    %p374 = por %p372, %p373
    %s375 = ssub.s32 %s26, %s33
    %p376 = scmp.eq.s32.totalorder %s375, 0
    %s378 = sadd.s32 %s377, 1
    %s379 = scalar_select %p376, %s377, %s378
    %p382 = pneg %p376
    %p383 = scmp.eq.s32.totalorder %s26, 1
    %p384 = por %p382, %p383
    %p385 = scmp.ne.s32.totalorder %s377, %s380
    %p386 = scmp.eq.s32.totalorder %s26, 0
    %p387 = por %p385, %p386
    %p388 = scmp.ne.s32.totalorder %s377, %s380
    %p389 = scmp.eq.s32.totalorder %s31, 1
    %p390 = por %p388, %p389
    %p391 = scmp.ne.s32.totalorder %s380, %s381
    %p392 = scmp.eq.s32.totalorder %s31, 0
    %p393 = por %p391, %p392
    %p394 = scmp.ne.s32.totalorder %s380, %s381
    %p395 = scmp.eq.s32.totalorder %s32, 1
    %p396 = por %p394, %p395
    %p398 = scmp.ne.s32.totalorder %s381, %s397
    %p399 = scmp.eq.s32.totalorder %s32, 0
    %p400 = por %p398, %p399
    %p401 = scmp.le.s32.totalorder 1, %s26
    %p402 = scmp.lt.s32.totalorder %s26, 3
    %p403 = pnand %p401, %p402
    %p404 = pneg %p403
    // Predicated region
    $region9: #{cae_forward.1} parent=5 // pred_check
      _
    $region10: #{cae_forward.1} parent=5 // pred_check_branch
      %406 = sbr.rel (%p403) target = $region12
    $region11: #{cae_forward.1} parent=5 // pred_region
      %s407 = ssub.s32 %s26, 1
      // Predicated region
      $region13: #{cae_forward.1} parent=11 // pred_check
        %p408 = pneg %p73
      $region14: #{cae_forward.1} parent=11 // pred_check_branch
        %410 = sbr.rel (%p408) target = $region16
      $region15: #{cae_forward.1} parent=11 // pred_region
        _
      $region16: #{cae_forward.1} parent=11 // pred_fallthru
        _
      // Predicated region
      $region17: #{cae_forward.1} parent=11 // pred_check
        %p411 = pneg %p94
      $region18: #{cae_forward.1} parent=11 // pred_check_branch
        %413 = sbr.rel (%p411) target = $region20
      $region19: #{cae_forward.1} parent=11 // pred_region
        _
      $region20: #{cae_forward.1} parent=11 // pred_fallthru
        _
      // Predicated region
      $region21: #{cae_forward.1} parent=11 // pred_check
        %p414 = pneg %p115
      $region22: #{cae_forward.1} parent=11 // pred_check_branch
        %416 = sbr.rel (%p414) target = $region24
      $region23: #{cae_forward.1} parent=11 // pred_region
        _
      $region24: #{cae_forward.1} parent=11 // pred_fallthru
        _
      // Predicated region
      $region25: #{cae_forward.1} parent=11 // pred_check
        %p417 = pneg %p136
      $region26: #{cae_forward.1} parent=11 // pred_check_branch
        %419 = sbr.rel (%p417) target = $region28
      $region27: #{cae_forward.1} parent=11 // pred_region
        _
      $region28: #{cae_forward.1} parent=11 // pred_fallthru
        _
      // Predicated region
      $region29: #{cae_forward.1} parent=11 // pred_check
        %p420 = pneg %p157
      $region30: #{cae_forward.1} parent=11 // pred_check_branch
        %422 = sbr.rel (%p420) target = $region32
      $region31: #{cae_forward.1} parent=11 // pred_region
        _
      $region32: #{cae_forward.1} parent=11 // pred_fallthru
        _
      // Predicated region
      $region33: #{cae_forward.1} parent=11 // pred_check
        %p423 = pneg %p178
      $region34: #{cae_forward.1} parent=11 // pred_check_branch
        %425 = sbr.rel (%p423) target = $region36
      $region35: #{cae_forward.1} parent=11 // pred_region
        _
      $region36: #{cae_forward.1} parent=11 // pred_fallthru
        _
      // Predicated region
      $region37: #{cae_forward.1} parent=11 // pred_check
        %p426 = pneg %p199
      $region38: #{cae_forward.1} parent=11 // pred_check_branch
        %428 = sbr.rel (%p426) target = $region40
      $region39: #{cae_forward.1} parent=11 // pred_region
        _
      $region40: #{cae_forward.1} parent=11 // pred_fallthru
        _
      // Predicated region
      $region41: #{cae_forward.1} parent=11 // pred_check
        %p429 = pneg %p220
      $region42: #{cae_forward.1} parent=11 // pred_check_branch
        %431 = sbr.rel (%p429) target = $region44
      $region43: #{cae_forward.1} parent=11 // pred_region
        _
      $region44: #{cae_forward.1} parent=11 // pred_fallthru
        _
      // Predicated region
      $region45: #{cae_forward.1} parent=11 // pred_check
        %p432 = pneg %p241
      $region46: #{cae_forward.1} parent=11 // pred_check_branch
        %434 = sbr.rel (%p432) target = $region48
      $region47: #{cae_forward.1} parent=11 // pred_region
        _
      $region48: #{cae_forward.1} parent=11 // pred_fallthru
        _
      // Predicated region
      $region49: #{cae_forward.1} parent=11 // pred_check
        %p435 = pneg %p262
      $region50: #{cae_forward.1} parent=11 // pred_check_branch
        %437 = sbr.rel (%p435) target = $region52
      $region51: #{cae_forward.1} parent=11 // pred_region
        _
      $region52: #{cae_forward.1} parent=11 // pred_fallthru
        _
      // Predicated region
      $region53: #{cae_forward.1} parent=11 // pred_check
        %p438 = pneg %p283
      $region54: #{cae_forward.1} parent=11 // pred_check_branch
        %440 = sbr.rel (%p438) target = $region56
      $region55: #{cae_forward.1} parent=11 // pred_region
        _
      $region56: #{cae_forward.1} parent=11 // pred_fallthru
        _
      // Predicated region
      $region57: #{cae_forward.1} parent=11 // pred_check
        %p441 = pneg %p304
      $region58: #{cae_forward.1} parent=11 // pred_check_branch
        %443 = sbr.rel (%p441) target = $region60
      $region59: #{cae_forward.1} parent=11 // pred_region
        _
      $region60: #{cae_forward.1} parent=11 // pred_fallthru
        _
      // Predicated region
      $region61: #{cae_forward.1} parent=11 // pred_check
        %p444 = pneg %p325
      $region62: #{cae_forward.1} parent=11 // pred_check_branch
        %446 = sbr.rel (%p444) target = $region64
      $region63: #{cae_forward.1} parent=11 // pred_region
        _
      $region64: #{cae_forward.1} parent=11 // pred_fallthru
        _
      // Predicated region
      $region65: #{cae_forward.1} parent=11 // pred_check
        %p447 = pneg %p346
      $region66: #{cae_forward.1} parent=11 // pred_check_branch
        %449 = sbr.rel (%p447) target = $region68
      $region67: #{cae_forward.1} parent=11 // pred_region
        _
      $region68: #{cae_forward.1} parent=11 // pred_fallthru
        _
      // Predicated region
      $region69: #{cae_forward.1} parent=11 // pred_check
        %p450 = pneg %p367
      $region70: #{cae_forward.1} parent=11 // pred_check_branch
        %452 = sbr.rel (%p450) target = $region72
      $region71: #{cae_forward.1} parent=11 // pred_region
        _
      $region72: #{cae_forward.1} parent=11 // pred_fallthru
        _
    $region12: #{cae_forward.1} parent=5 // pred_fallthru
      _
    %p453 = scmp.lt.s32.totalorder %s26, 2
    // Predicated region
    $region73: #{cae_forward.1} parent=5 // pred_check
      %p454 = pneg %p453
    $region74: #{cae_forward.1} parent=5 // pred_check_branch
      %456 = sbr.rel (%p454) target = $region76
    $region75: #{cae_forward.1} parent=5 // pred_region
      // Predicated region
      $region77: #{cae_forward.1} parent=75 // pred_check
        %p457 = pneg %p46
      $region78: #{cae_forward.1} parent=75 // pred_check_branch
        %459 = sbr.rel (%p457) target = $region80
      $region79: #{cae_forward.1} parent=75 // pred_region
        %p460 = scmp.lt.s32.totalorder %s26, 1
        %s461 = scalar_select %p460, %s26, 1
        %s462 = smul.addr %s461, 2
        %s463 = scalar_lea.vmem %s0, %s462
      $region80: #{cae_forward.1} parent=75 // pred_fallthru
        _
    $region76: #{cae_forward.1} parent=5 // pred_fallthru
      _
    %p464 = scmp.le.s32.totalorder 1, %s26
    %p465 = scmp.lt.s32.totalorder %s26, 3
    %p466 = pnand %p464, %p465
    %p467 = pneg %p466
    // Predicated region
    $region81: #{cae_forward.1} parent=5 // pred_check
      _
    $region82: #{cae_forward.1} parent=5 // pred_check_branch
      %469 = sbr.rel (%p466) target = $region84
    $region83: #{cae_forward.1} parent=5 // pred_region
      %s470 = ssub.s32 %s26, 1
      %p471 = scmp.lt.s32.totalorder %s31, 1
      %s472 = scalar_select %p471, %s31, 1
      %s473 = smul.addr %s472, 2
      %s474 = scalar_lea.vmem %s0, %s473
      %p475 = pneg %p52
      %p476 = pneg %p49
      %p477 = pneg %p73
      %p478 = pneg %p70
      %p479 = pneg %p94
      %p480 = pneg %p91
      %p481 = pneg %p115
      %p482 = pneg %p112
      %p483 = pneg %p136
      %p484 = pneg %p133
      %p485 = pneg %p157
      %p486 = pneg %p154
      %p487 = pneg %p178
      %p488 = pneg %p175
      %p489 = pneg %p199
      %p490 = pneg %p196
      %p491 = pneg %p220
      %p492 = pneg %p217
      %p493 = pneg %p241
      %p494 = pneg %p238
      %p495 = pneg %p262
      %p496 = pneg %p259
      %p497 = pneg %p283
      %p498 = pneg %p280
      %p499 = pneg %p304
      %p500 = pneg %p301
      %p501 = pneg %p325
      %p502 = pneg %p322
      %p503 = pneg %p346
      %p504 = pneg %p343
      %p505 = pneg %p367
      %p506 = pneg %p364
      %p507 = pneg %p393
      %p508 = pneg %p390
      %p509 = scmp.lt.s32.totalorder %s31, 1
      %s510 = scalar_select %p509, %s31, 1
      %s511 = smul.addr %s510, 2
      %s512 = scalar_lea.vmem %s16, %s511
      %p513 = scmp.lt.s32.totalorder %s31, 1
      %s514 = scalar_select %p513, %s31, 1
      %s515 = smul.addr %s514, 2
      %s516 = scalar_lea.vmem %s0, %s515
      %p517 = scmp.lt.s32.totalorder %s31, 1
      %s518 = scalar_select %p517, %s31, 1
      %s519 = smul.addr %s518, 2
      %s520 = scalar_lea.vmem %s16, %s519
      %v521 = vld [vmem:[%s516] sm:$0x3]
      %v523 = vperm.slane %v521, 0
      %v524 = vperm.slane %v521, 1
      %527 = vrot.lane.b32.xlu0 %v523, 17
      %v528 = vpop.permute.xlu0 %527
      %529 = vrot.lane.b32.xlu0 %v524, 17
      %v530 = vpop.permute.xlu0 %529
      %v531 = vlaneseq
      %v532 = vand.u32 %v531, 127
      %vm533 = vcmp.lt.s32.totalorder %v532, 17
      %v534 = vsel %vm533, %v528, %v530
      %v535 = vsel %vm533, %v530, %v528
      %v536 = vld [vmem:[%s13] ss:$8 sm:$0x3]
      %v538 = vperm.slane %v536, 0
      %v539 = vperm.slane %v536, 1
      %v542 = vmul.f32 %v535, %v538
      %v543 = vmul.f32 %v534, %v539
      %v546 = vrot.slane %v543, 7
      %vm547 = vcmask 1040384
      %v548 = vsel %vm547, %v542, %v546
      %v550 = vlaneseq
      %vm551 = vcmp.ge.s32.totalorder %v550, 0
      %vm552 = vcmp.lt.s32.totalorder %v550, 256
      %vm553 = vmand %vm551, %vm552
      %554 = vst.msk [vmem:[#allocation2] ss:$8 sm:$0x3] %vm553, %v548
      %555 = vst.msk [vmem:[#allocation2] ss:$8 sm:$0x0] %vm553, %v548
      %556 = vrot.lane.b32.xlu0 %v523, 16
      %v557 = vpop.permute.xlu0 %556
      %558 = vrot.lane.b32.xlu0 %v524, 16
      %v559 = vpop.permute.xlu0 %558
      %vm560 = vcmp.lt.s32.totalorder %v532, 16
      %v561 = vsel %vm560, %v557, %v559
      %v562 = vsel %vm560, %v559, %v557
      %s563 = scalar_lea.vmem %s13, 1
      %v564 = vld [vmem:[%s563] ss:$8 sm:$0x3]
      %v566 = vperm.slane %v564, 0
      %v567 = vperm.slane %v564, 1
      %v570 = vmul.f32 %v562, %v566
      %v571 = vmul.f32 %v561, %v567
      %v574 = vrot.slane %v571, 7
      %v575 = vsel %vm547, %v570, %v574
      %s577 = scalar_lea.vmem [#allocation2], 1
      %578 = vst.msk [vmem:[%s577] ss:$8 sm:$0x3] %vm553, %v575
      %579 = vst.msk [vmem:[%s577] ss:$8 sm:$0x0] %vm553, %v575
      %580 = vrot.lane.b32.xlu0 %v523, 15
      %v581 = vpop.permute.xlu0 %580
      %582 = vrot.lane.b32.xlu0 %v524, 15
      %v583 = vpop.permute.xlu0 %582
      %vm584 = vcmp.lt.s32.totalorder %v532, 15
      %v585 = vsel %vm584, %v581, %v583
      %v586 = vsel %vm584, %v583, %v581
      %s587 = scalar_lea.vmem %s13, 2
      %v588 = vld [vmem:[%s587] ss:$8 sm:$0x3]
      %v590 = vperm.slane %v588, 0
      %v591 = vperm.slane %v588, 1
      %v594 = vmul.f32 %v586, %v590
      %v595 = vmul.f32 %v585, %v591
      %v598 = vrot.slane %v595, 7
      %v599 = vsel %vm547, %v594, %v598
      %s601 = scalar_lea.vmem [#allocation2], 2
      %602 = vst.msk [vmem:[%s601] ss:$8 sm:$0x3] %vm553, %v599
      %603 = vst.msk [vmem:[%s601] ss:$8 sm:$0x0] %vm553, %v599
      %604 = vrot.lane.b32.xlu0 %v523, 1
      %v605 = vpop.permute.xlu0 %604
      %606 = vrot.lane.b32.xlu0 %v524, 1
      %v607 = vpop.permute.xlu0 %606
      %vm608 = vcmp.lt.s32.totalorder %v532, 1
      %v609 = vsel %vm608, %v605, %v607
      %v610 = vsel %vm608, %v607, %v605
      %s611 = scalar_lea.vmem %s13, 3
      %v612 = vld [vmem:[%s611] ss:$8 sm:$0x3]
      %v614 = vperm.slane %v612, 0
      %v615 = vperm.slane %v612, 1
      %v618 = vmul.f32 %v610, %v614
      %v619 = vmul.f32 %v609, %v615
      %v622 = vrot.slane %v619, 7
      %v623 = vsel %vm547, %v618, %v622
      %s625 = scalar_lea.vmem [#allocation2], 3
      %626 = vst.msk [vmem:[%s625] ss:$8 sm:$0x3] %vm553, %v623
      %627 = vst.msk [vmem:[%s625] ss:$8 sm:$0x0] %vm553, %v623
      %s628 = scalar_lea.vmem %s13, 4
      %v629 = vld [vmem:[%s628] ss:$8 sm:$0x3]
      %v630 = vmul.f32 %v521, %v629
      %s631 = scalar_lea.vmem [#allocation2], 4
      %632 = vst.msk [vmem:[%s631] ss:$8 sm:$0x3] %vm553, %v630
      %633 = vst.msk [vmem:[%s631] ss:$8 sm:$0x0] %vm553, %v630
      %634 = vrot.lane.b32.xlu0 %v523, 127
      %v635 = vpop.permute.xlu0 %634
      %636 = vrot.lane.b32.xlu0 %v524, 127
      %v637 = vpop.permute.xlu0 %636
      %vm638 = vcmp.lt.s32.totalorder %v532, 127
      %v639 = vsel %vm638, %v635, %v637
      %v640 = vsel %vm638, %v637, %v635
      %s641 = scalar_lea.vmem %s13, 5
      %v642 = vld [vmem:[%s641] ss:$8 sm:$0x3]
      %v644 = vperm.slane %v642, 0
      %v645 = vperm.slane %v642, 1
      %v648 = vmul.f32 %v639, %v644
      %v649 = vmul.f32 %v640, %v645
      %v652 = vrot.slane %v649, 7
      %v653 = vsel %vm547, %v648, %v652
      %s655 = scalar_lea.vmem [#allocation2], 5
      %656 = vst.msk [vmem:[%s655] ss:$8 sm:$0x3] %vm553, %v653
      %657 = vst.msk [vmem:[%s655] ss:$8 sm:$0x0] %vm553, %v653
      %658 = vrot.lane.b32.xlu0 %v523, 113
      %v659 = vpop.permute.xlu0 %658
      %660 = vrot.lane.b32.xlu0 %v524, 113
      %v661 = vpop.permute.xlu0 %660
      %vm662 = vcmp.lt.s32.totalorder %v532, 113
      %v663 = vsel %vm662, %v659, %v661
      %v664 = vsel %vm662, %v661, %v659
      %s665 = scalar_lea.vmem %s13, 6
      %v666 = vld [vmem:[%s665] ss:$8 sm:$0x3]
      %v668 = vperm.slane %v666, 0
      %v669 = vperm.slane %v666, 1
      %v672 = vmul.f32 %v663, %v668
      %v673 = vmul.f32 %v664, %v669
      %v676 = vrot.slane %v673, 7
      %v677 = vsel %vm547, %v672, %v676
      %s679 = scalar_lea.vmem [#allocation2], 6
      %680 = vst.msk [vmem:[%s679] ss:$8 sm:$0x3] %vm553, %v677
      %681 = vst.msk [vmem:[%s679] ss:$8 sm:$0x0] %vm553, %v677
      %682 = vrot.lane.b32.xlu0 %v523, 112
      %v683 = vpop.permute.xlu0 %682
      %684 = vrot.lane.b32.xlu0 %v524, 112
      %v685 = vpop.permute.xlu0 %684
      %vm686 = vcmp.lt.s32.totalorder %v532, 112
      %v687 = vsel %vm686, %v683, %v685
      %v688 = vsel %vm686, %v685, %v683
      %s689 = scalar_lea.vmem %s13, 7
      %v690 = vld [vmem:[%s689] ss:$8 sm:$0x3]
      %v692 = vperm.slane %v690, 0
      %v693 = vperm.slane %v690, 1
      %v696 = vmul.f32 %v687, %v692
      %v697 = vmul.f32 %v688, %v693
      %v700 = vrot.slane %v697, 7
      %v701 = vsel %vm547, %v696, %v700
      %s703 = scalar_lea.vmem [#allocation2], 7
      %704 = vst.msk [vmem:[%s703] ss:$8 sm:$0x3] %vm553, %v701
      %705 = vst.msk [vmem:[%s703] ss:$8 sm:$0x0] %vm553, %v701
      %706 = vrot.lane.b32.xlu0 %v523, 111
      %v707 = vpop.permute.xlu0 %706
      %708 = vrot.lane.b32.xlu0 %v524, 111
      %v709 = vpop.permute.xlu0 %708
      %vm710 = vcmp.lt.s32.totalorder %v532, 111
      %v711 = vsel %vm710, %v707, %v709
      %v712 = vsel %vm710, %v709, %v707
      %s713 = scalar_lea.vmem %s13, 16
      %v714 = vld [vmem:[%s713] ss:$8 sm:$0x3]
      %v716 = vperm.slane %v714, 0
      %v717 = vperm.slane %v714, 1
      %v720 = vmul.f32 %v711, %v716
      %v721 = vmul.f32 %v712, %v717
      %v724 = vrot.slane %v721, 7
      %v725 = vsel %vm547, %v720, %v724
      %s727 = scalar_lea.vmem [#allocation2], 16
      %728 = vst.msk [vmem:[%s727] ss:$8 sm:$0x3] %vm553, %v725
      %729 = vst.msk [vmem:[%s727] ss:$8 sm:$0x0] %vm553, %v725
      %v730 = vld [vmem:[%s1] sm:$0xff]
      %v731 = vld [vmem:[%s1 + $0x8] sm:$0xff]
      %v732 = vld [vmem:[#allocation2] sm:$0xff]
      %v733 = vld [vmem:[#allocation2 + $0x8] sm:$0xff]
      %v734 = vld [vmem:[#allocation2 + $0x10] sm:$0x1]
      %v735 = vld [vmem:[#allocation2 + $0x18] sm:$0x1]
      %v736 = vld [vmem:[%s2] sm:$0xff]
      %v737 = vld [vmem:[%s2 + $0x8] sm:$0xff]
      %739 = vset.pattern.permute.xlu0 0
      %740 = vperm.xlu0 %739, %v736
      %v741 = vpop.permute.xlu0 %740
      %744 = vset.pattern.permute.xlu0 0
      %745 = vperm.xlu0 %744, %v737
      %v746 = vpop.permute.xlu0 %745
      %vm748 = vcmask 72704
      %v750 = vsel %vm748, %v730, 0
      %v753 = vsel %vm748, %v731, 0
      %v756 = vsel %vm547, %v734, 0
      %v759 = vsel %vm547, %v735, 0
      %761 = vmatpush.msra.mxu0 0.0
      %762 = vmatpush.msra.mxu0 0.0
      %763 = vmatpush.msra.mxu0 0.0
      %764 = vmatpush.msra.mxu0 0.0
      %765 = vmatpush.msra.mxu0 0.0
      %766 = vmatpush.msra.mxu0 0.0
      %767 = vmatpush.msra.mxu0 0.0
      %768 = vmatpush.msra.mxu0 0.0
      %769 = vmatpush.msra.mxu0 0.0
      %770 = vmatpush.msra.mxu0 0.0
      %771 = vmatpush.msra.mxu0 0.0
      %772 = vmatpush.msra.mxu0 0.0
      %773 = vmatpush.msra.mxu0 0.0
      %774 = vmatpush.msra.mxu0 0.0
      %775 = vmatpush.msra.mxu0 %v756
      %776 = vmatpush.msra.mxu0 %v732
      %777 = vmatmul.f32.gmra.mxu0 %v750
      %v778 = vpop.f32.mrf.mxu0
      %v779 = vadd.f32 %v741, %v778
      %780 = vmatmul.f32.gmra.mxu0 %v753
      %v781 = vpop.f32.mrf.mxu0
      %v782 = vadd.f32 %v746, %v781
      %783 = vdwg.mxu0
      %784 = vmatpush.msra.mxu0 0.0
      %785 = vmatpush.msra.mxu0 0.0
      %786 = vmatpush.msra.mxu0 0.0
      %787 = vmatpush.msra.mxu0 0.0
      %788 = vmatpush.msra.mxu0 0.0
      %789 = vmatpush.msra.mxu0 0.0
      %790 = vmatpush.msra.mxu0 0.0
      %791 = vmatpush.msra.mxu0 0.0
      %792 = vmatpush.msra.mxu0 0.0
      %793 = vmatpush.msra.mxu0 0.0
      %794 = vmatpush.msra.mxu0 0.0
      %795 = vmatpush.msra.mxu0 0.0
      %796 = vmatpush.msra.mxu0 0.0
      %797 = vmatpush.msra.mxu0 0.0
      %798 = vmatpush.msra.mxu0 %v759
      %799 = vmatpush.msra.mxu0 %v733
      %800 = vmatmul.f32.gmra.mxu0 %v750
      %v801 = vpop.f32.mrf.mxu0
      %v802 = vadd.f32 %v741, %v801
      %803 = vmatmul.f32.gmra.mxu0 %v753
      %v804 = vpop.f32.mrf.mxu0
      %v805 = vadd.f32 %v746, %v804
      %806 = vdwg.mxu0
      %v807 = vmax.f32 %v779, 0.0
      %v808 = vmax.f32 %v802, 0.0
      %v809 = vmax.f32 %v782, 0.0
      %v810 = vmax.f32 %v805, 0.0
      %811 = vrot.lane.b32.xlu0 %v807, 17
      %v812 = vpop.permute.xlu0 %811
      %813 = vrot.lane.b32.xlu0 %v809, 17
      %v814 = vpop.permute.xlu0 %813
      %815 = vrot.lane.b32.xlu0 %v808, 17
      %v816 = vpop.permute.xlu0 %815
      %817 = vrot.lane.b32.xlu0 %v810, 17
      %v818 = vpop.permute.xlu0 %817
      %v819 = vsel %vm533, %v812, %v816
      %v820 = vsel %vm533, %v814, %v818
      %v821 = vsel %vm533, %v816, %v812
      %v822 = vsel %vm533, %v818, %v814
      %v823 = vld [vmem:[%s13] ss:$8 sm:$0x3]
      %v825 = vperm.slane %v823, 0
      %v826 = vperm.slane %v823, 1
      %v829 = vmul.f32 %v821, %v825
      %v830 = vmul.f32 %v819, %v826
      %v831 = vmul.f32 %v822, %v825
      %v832 = vmul.f32 %v820, %v826
      %833 = vst [vmem:[#allocation2] sm:$0xff] %v829
      %834 = vst [vmem:[#allocation2 + $0x8] sm:$0xff] %v830
      %835 = vst [vmem:[#allocation2 + $0x10] sm:$0xff] %v831
      %836 = vst [vmem:[#allocation2 + $0x18] sm:$0xff] %v832
      %837 = vrot.lane.b32.xlu0 %v807, 16
      %v838 = vpop.permute.xlu0 %837
      %839 = vrot.lane.b32.xlu0 %v809, 16
      %v840 = vpop.permute.xlu0 %839
      %841 = vrot.lane.b32.xlu0 %v808, 16
      %v842 = vpop.permute.xlu0 %841
      %843 = vrot.lane.b32.xlu0 %v810, 16
      %v844 = vpop.permute.xlu0 %843
      %v845 = vsel %vm560, %v838, %v842
      %v846 = vsel %vm560, %v840, %v844
      %v847 = vsel %vm560, %v842, %v838
      %v848 = vsel %vm560, %v844, %v840
      %v849 = vld [vmem:[%s563] ss:$8 sm:$0x3]
      %v851 = vperm.slane %v849, 0
      %v852 = vperm.slane %v849, 1
      %v855 = vmul.f32 %v847, %v851
      %v856 = vmul.f32 %v845, %v852
      %v857 = vmul.f32 %v848, %v851
      %v858 = vmul.f32 %v846, %v852
      %859 = vst [vmem:[#allocation2 + $0x20] sm:$0xff] %v855
      %860 = vst [vmem:[#allocation2 + $0x28] sm:$0xff] %v856
      %861 = vst [vmem:[#allocation2 + $0x30] sm:$0xff] %v857
      %862 = vst [vmem:[#allocation2 + $0x38] sm:$0xff] %v858
      %863 = vrot.lane.b32.xlu0 %v807, 15
      %v864 = vpop.permute.xlu0 %863
      %865 = vrot.lane.b32.xlu0 %v809, 15
      %v866 = vpop.permute.xlu0 %865
      %867 = vrot.lane.b32.xlu0 %v808, 15
      %v868 = vpop.permute.xlu0 %867
      %869 = vrot.lane.b32.xlu0 %v810, 15
      %v870 = vpop.permute.xlu0 %869
      %v871 = vsel %vm584, %v864, %v868
      %v872 = vsel %vm584, %v866, %v870
      %v873 = vsel %vm584, %v868, %v864
      %v874 = vsel %vm584, %v870, %v866
      %v875 = vld [vmem:[%s587] ss:$8 sm:$0x3]
      %v877 = vperm.slane %v875, 0
      %v878 = vperm.slane %v875, 1
      %v881 = vmul.f32 %v873, %v877
      %v882 = vmul.f32 %v871, %v878
      %v883 = vmul.f32 %v874, %v877
      %v884 = vmul.f32 %v872, %v878
      %885 = vst [vmem:[#allocation2 + $0x40] sm:$0xff] %v881
      %886 = vst [vmem:[#allocation2 + $0x48] sm:$0xff] %v882
      %887 = vst [vmem:[#allocation2 + $0x50] sm:$0xff] %v883
      %888 = vst [vmem:[#allocation2 + $0x58] sm:$0xff] %v884
      %889 = vrot.lane.b32.xlu0 %v807, 1
      %v890 = vpop.permute.xlu0 %889
      %891 = vrot.lane.b32.xlu0 %v809, 1
      %v892 = vpop.permute.xlu0 %891
      %893 = vrot.lane.b32.xlu0 %v808, 1
      %v894 = vpop.permute.xlu0 %893
      %895 = vrot.lane.b32.xlu0 %v810, 1
      %v896 = vpop.permute.xlu0 %895
      %v897 = vsel %vm608, %v890, %v894
      %v898 = vsel %vm608, %v892, %v896
      %v899 = vsel %vm608, %v894, %v890
      %v900 = vsel %vm608, %v896, %v892
      %v901 = vld [vmem:[%s611] ss:$8 sm:$0x3]
      %v903 = vperm.slane %v901, 0
      %v904 = vperm.slane %v901, 1
      %v907 = vmul.f32 %v899, %v903
      %v908 = vmul.f32 %v897, %v904
      %v909 = vmul.f32 %v900, %v903
      %v910 = vmul.f32 %v898, %v904
      %911 = vst [vmem:[#allocation2 + $0x60] sm:$0xff] %v907
      %912 = vst [vmem:[#allocation2 + $0x68] sm:$0xff] %v908
      %913 = vst [vmem:[#allocation2 + $0x70] sm:$0xff] %v909
      %914 = vst [vmem:[#allocation2 + $0x78] sm:$0xff] %v910
      %v915 = vld [vmem:[%s628] ss:$8 sm:$0x3]
      %v917 = vperm.slane %v915, 0
      %v918 = vperm.slane %v915, 1
      %v921 = vmul.f32 %v807, %v917
      %v922 = vmul.f32 %v808, %v918
      %v923 = vmul.f32 %v809, %v917
      %v924 = vmul.f32 %v810, %v918
      %925 = vst [vmem:[#allocation2 + $0x80] sm:$0xff] %v921
      %926 = vst [vmem:[#allocation2 + $0x88] sm:$0xff] %v922
      %927 = vst [vmem:[#allocation2 + $0x90] sm:$0xff] %v923
      %928 = vst [vmem:[#allocation2 + $0x98] sm:$0xff] %v924
      %929 = vrot.lane.b32.xlu0 %v807, 127
      %v930 = vpop.permute.xlu0 %929
      %931 = vrot.lane.b32.xlu0 %v809, 127
      %v932 = vpop.permute.xlu0 %931
      %933 = vrot.lane.b32.xlu0 %v808, 127
      %v934 = vpop.permute.xlu0 %933
      %935 = vrot.lane.b32.xlu0 %v810, 127
      %v936 = vpop.permute.xlu0 %935
      %v937 = vsel %vm638, %v930, %v934
      %v938 = vsel %vm638, %v932, %v936
      %v939 = vsel %vm638, %v934, %v930
      %v940 = vsel %vm638, %v936, %v932
      %v941 = vld [vmem:[%s641] ss:$8 sm:$0x3]
      %v943 = vperm.slane %v941, 0
      %v944 = vperm.slane %v941, 1
      %v947 = vmul.f32 %v937, %v943
      %v948 = vmul.f32 %v939, %v944
      %v949 = vmul.f32 %v938, %v943
      %v950 = vmul.f32 %v940, %v944
      %951 = vst [vmem:[#allocation2 + $0xa0] sm:$0xff] %v947
      %952 = vst [vmem:[#allocation2 + $0xa8] sm:$0xff] %v948
      %953 = vst [vmem:[#allocation2 + $0xb0] sm:$0xff] %v949
      %954 = vst [vmem:[#allocation2 + $0xb8] sm:$0xff] %v950
      %955 = vrot.lane.b32.xlu0 %v807, 113
      %v956 = vpop.permute.xlu0 %955
      %957 = vrot.lane.b32.xlu0 %v809, 113
      %v958 = vpop.permute.xlu0 %957
      %959 = vrot.lane.b32.xlu0 %v808, 113
      %v960 = vpop.permute.xlu0 %959
      %961 = vrot.lane.b32.xlu0 %v810, 113
      %v962 = vpop.permute.xlu0 %961
      %v963 = vsel %vm662, %v956, %v960
      %v964 = vsel %vm662, %v958, %v962
      %v965 = vsel %vm662, %v960, %v956
      %v966 = vsel %vm662, %v962, %v958
      %v967 = vld [vmem:[%s665] ss:$8 sm:$0x3]
      %v969 = vperm.slane %v967, 0
      %v970 = vperm.slane %v967, 1
      %v973 = vmul.f32 %v963, %v969
      %v974 = vmul.f32 %v965, %v970
      %v975 = vmul.f32 %v964, %v969
      %v976 = vmul.f32 %v966, %v970
      %977 = vst [vmem:[#allocation2 + $0xc0] sm:$0xff] %v973
      %978 = vst [vmem:[#allocation2 + $0xc8] sm:$0xff] %v974
      %979 = vst [vmem:[#allocation2 + $0xd0] sm:$0xff] %v975
      %980 = vst [vmem:[#allocation2 + $0xd8] sm:$0xff] %v976
      %981 = vrot.lane.b32.xlu0 %v807, 112
      %v982 = vpop.permute.xlu0 %981
      %983 = vrot.lane.b32.xlu0 %v809, 112
      %v984 = vpop.permute.xlu0 %983
      %985 = vrot.lane.b32.xlu0 %v808, 112
      %v986 = vpop.permute.xlu0 %985
      %987 = vrot.lane.b32.xlu0 %v810, 112
      %v988 = vpop.permute.xlu0 %987
      %v989 = vsel %vm686, %v982, %v986
      %v990 = vsel %vm686, %v984, %v988
      %v991 = vsel %vm686, %v986, %v982
      %v992 = vsel %vm686, %v988, %v984
      %v993 = vld [vmem:[%s689] ss:$8 sm:$0x3]
      %v995 = vperm.slane %v993, 0
      %v996 = vperm.slane %v993, 1
      %v999 = vmul.f32 %v989, %v995
      %v1000 = vmul.f32 %v991, %v996
      %v1001 = vmul.f32 %v990, %v995
      %v1002 = vmul.f32 %v992, %v996
      %1003 = vst [vmem:[#allocation2 + $0xe0] sm:$0xff] %v999
      %1004 = vst [vmem:[#allocation2 + $0xe8] sm:$0xff] %v1000
      %1005 = vst [vmem:[#allocation2 + $0xf0] sm:$0xff] %v1001
      %1006 = vst [vmem:[#allocation2 + $0xf8] sm:$0xff] %v1002
      %1007 = vrot.lane.b32.xlu0 %v807, 111
      %v1008 = vpop.permute.xlu0 %1007
      %1009 = vrot.lane.b32.xlu0 %v809, 111
      %v1010 = vpop.permute.xlu0 %1009
      %1011 = vrot.lane.b32.xlu0 %v808, 111
      %v1012 = vpop.permute.xlu0 %1011
      %1013 = vrot.lane.b32.xlu0 %v810, 111
      %v1014 = vpop.permute.xlu0 %1013
      %v1015 = vsel %vm710, %v1008, %v1012
      %v1016 = vsel %vm710, %v1010, %v1014
      %v1017 = vsel %vm710, %v1012, %v1008
      %v1018 = vsel %vm710, %v1014, %v1010
      %v1019 = vld [vmem:[%s713] ss:$8 sm:$0x3]
      %v1021 = vperm.slane %v1019, 0
      %v1022 = vperm.slane %v1019, 1
      %v1025 = vmul.f32 %v1015, %v1021
      %v1026 = vmul.f32 %v1017, %v1022
      %v1027 = vmul.f32 %v1016, %v1021
      %v1028 = vmul.f32 %v1018, %v1022
      %1029 = vst [vmem:[#allocation2 + $0x100] sm:$0xff] %v1025
      %1030 = vst [vmem:[#allocation2 + $0x108] sm:$0xff] %v1026
      %1031 = vst [vmem:[#allocation2 + $0x110] sm:$0xff] %v1027
      %1032 = vst [vmem:[#allocation2 + $0x118] sm:$0xff] %v1028
      %v1033 = vld [vmem:[%s3] sm:$0xff]
      %v1034 = vld [vmem:[%s3 + $0x8] sm:$0xff]
      %v1035 = vld [vmem:[%s3 + $0x10] sm:$0xff]
      %v1036 = vld [vmem:[%s3 + $0x18] sm:$0xff]
      %v1037 = vld [vmem:[#allocation2] sm:$0xff]
      %v1038 = vld [vmem:[#allocation2 + $0x8] sm:$0xff]
      %v1039 = vld [vmem:[#allocation2 + $0x10] sm:$0xff]
      %v1040 = vld [vmem:[#allocation2 + $0x18] sm:$0xff]
      %v1041 = vld [vmem:[#allocation2 + $0x20] sm:$0xff]
      %v1042 = vld [vmem:[#allocation2 + $0x28] sm:$0xff]
      %v1043 = vld [vmem:[#allocation2 + $0x30] sm:$0xff]
      %v1044 = vld [vmem:[#allocation2 + $0x38] sm:$0xff]
      %v1045 = vld [vmem:[#allocation2 + $0x40] sm:$0xff]
      %v1046 = vld [vmem:[#allocation2 + $0x48] sm:$0xff]
      %v1047 = vld [vmem:[#allocation2 + $0x50] sm:$0xff]
      %v1048 = vld [vmem:[#allocation2 + $0x58] sm:$0xff]
      %v1049 = vld [vmem:[#allocation2 + $0x60] sm:$0xff]
      %v1050 = vld [vmem:[#allocation2 + $0x68] sm:$0xff]
      %v1051 = vld [vmem:[#allocation2 + $0x70] sm:$0xff]
      %v1052 = vld [vmem:[#allocation2 + $0x78] sm:$0xff]
      %v1053 = vld [vmem:[#allocation2 + $0x80] sm:$0xff]
      %v1054 = vld [vmem:[#allocation2 + $0x88] sm:$0xff]
      %v1055 = vld [vmem:[#allocation2 + $0x90] sm:$0xff]
      %v1056 = vld [vmem:[#allocation2 + $0x98] sm:$0xff]
      %v1057 = vld [vmem:[#allocation2 + $0xa0] sm:$0xff]
      %v1058 = vld [vmem:[#allocation2 + $0xa8] sm:$0xff]
      %v1059 = vld [vmem:[#allocation2 + $0xb0] sm:$0xff]
      %v1060 = vld [vmem:[#allocation2 + $0xb8] sm:$0xff]
      %v1061 = vld [vmem:[#allocation2 + $0xc0] sm:$0xff]
      %v1062 = vld [vmem:[#allocation2 + $0xc8] sm:$0xff]
      %v1063 = vld [vmem:[#allocation2 + $0xd0] sm:$0xff]
      %v1064 = vld [vmem:[#allocation2 + $0xd8] sm:$0xff]
      %v1065 = vld [vmem:[#allocation2 + $0xe0] sm:$0xff]
      %v1066 = vld [vmem:[#allocation2 + $0xe8] sm:$0xff]
      %v1067 = vld [vmem:[#allocation2 + $0xf0] sm:$0xff]
      %v1068 = vld [vmem:[#allocation2 + $0xf8] sm:$0xff]
      %v1069 = vld [vmem:[#allocation2 + $0x100] sm:$0xff]
      %v1070 = vld [vmem:[#allocation2 + $0x108] sm:$0xff]
      %v1071 = vld [vmem:[#allocation2 + $0x110] sm:$0xff]
      %v1072 = vld [vmem:[#allocation2 + $0x118] sm:$0xff]
      %v1073 = vld [vmem:[%s4] sm:$0xff]
      %v1074 = vld [vmem:[%s4 + $0x8] sm:$0xff]
      %1076 = vset.pattern.permute.xlu0 0
      %1077 = vperm.xlu0 %1076, %v1073
      %v1078 = vpop.permute.xlu0 %1077
      %1081 = vset.pattern.permute.xlu0 0
      %1082 = vperm.xlu0 %1081, %v1074
      %v1083 = vpop.permute.xlu0 %1082
      %vm1085 = vcmask 130048
      %v1087 = vsel %vm1085, %v1034, 0
      %v1090 = vsel %vm1085, %v1036, 0
      %1092 = vmatpush.msra.mxu0 %v1067
      %1093 = vmatpush.msra.mxu0 %v1065
      %1094 = vmatpush.msra.mxu0 %v1063
      %1095 = vmatpush.msra.mxu0 %v1061
      %1096 = vmatpush.msra.mxu0 %v1059
      %1097 = vmatpush.msra.mxu0 %v1057
      %1098 = vmatpush.msra.mxu0 %v1055
      %1099 = vmatpush.msra.mxu0 %v1053
      %1100 = vmatpush.msra.mxu0 %v1051
      %1101 = vmatpush.msra.mxu0 %v1049
      %1102 = vmatpush.msra.mxu0 %v1047
      %1103 = vmatpush.msra.mxu0 %v1045
      %1104 = vmatpush.msra.mxu0 %v1043
      %1105 = vmatpush.msra.mxu0 %v1041
      %1106 = vmatpush.msra.mxu0 %v1039
      %1107 = vmatpush.msra.mxu0 %v1037
      %1108 = vmatmul.f32.gmra.mxu0 %v1033
      %v1109 = vpop.f32.mrf.mxu0
      %v1110 = vadd.f32 %v1078, %v1109
      %1111 = vmatmul.f32.gmra.mxu0 %v1035
      %v1112 = vpop.f32.mrf.mxu0
      %v1113 = vadd.f32 %v1083, %v1112
      %1114 = vdwg.mxu0
      %1115 = vmatpush.msra.mxu0 0.0
      %1116 = vmatpush.msra.mxu0 0.0
      %1117 = vmatpush.msra.mxu0 0.0
      %1118 = vmatpush.msra.mxu0 0.0
      %1119 = vmatpush.msra.mxu0 0.0
      %1120 = vmatpush.msra.mxu0 0.0
      %1121 = vmatpush.msra.mxu0 0.0
      %1122 = vmatpush.msra.mxu0 0.0
      %1123 = vmatpush.msra.mxu0 0.0
      %1124 = vmatpush.msra.mxu0 0.0
      %1125 = vmatpush.msra.mxu0 0.0
      %1126 = vmatpush.msra.mxu0 0.0
      %1127 = vmatpush.msra.mxu0 0.0
      %1128 = vmatpush.msra.mxu0 0.0
      %1129 = vmatpush.msra.mxu0 %v1071
      %1130 = vmatpush.msra.mxu0 %v1069
      %1131 = vmatmul.f32.gmra.mxu0 %v1087
      %v1132 = vpop.f32.mrf.mxu0
      %v1133 = vadd.f32 %v1110, %v1132
      %1134 = vmatmul.f32.gmra.mxu0 %v1090
      %v1135 = vpop.f32.mrf.mxu0
      %v1136 = vadd.f32 %v1113, %v1135
      %1137 = vdwg.mxu0
      %1138 = vmatpush.msra.mxu0 %v1068
      %1139 = vmatpush.msra.mxu0 %v1066
      %1140 = vmatpush.msra.mxu0 %v1064
      %1141 = vmatpush.msra.mxu0 %v1062
      %1142 = vmatpush.msra.mxu0 %v1060
      %1143 = vmatpush.msra.mxu0 %v1058
      %1144 = vmatpush.msra.mxu0 %v1056
      %1145 = vmatpush.msra.mxu0 %v1054
      %1146 = vmatpush.msra.mxu0 %v1052
      %1147 = vmatpush.msra.mxu0 %v1050
      %1148 = vmatpush.msra.mxu0 %v1048
      %1149 = vmatpush.msra.mxu0 %v1046
      %1150 = vmatpush.msra.mxu0 %v1044
      %1151 = vmatpush.msra.mxu0 %v1042
      %1152 = vmatpush.msra.mxu0 %v1040
      %1153 = vmatpush.msra.mxu0 %v1038
      %1154 = vmatmul.f32.gmra.mxu0 %v1033
      %v1155 = vpop.f32.mrf.mxu0
      %v1156 = vadd.f32 %v1078, %v1155
      %1157 = vmatmul.f32.gmra.mxu0 %v1035
      %v1158 = vpop.f32.mrf.mxu0
      %v1159 = vadd.f32 %v1083, %v1158
      %1160 = vdwg.mxu0
      %1161 = vmatpush.msra.mxu0 0.0
      %1162 = vmatpush.msra.mxu0 0.0
      %1163 = vmatpush.msra.mxu0 0.0
      %1164 = vmatpush.msra.mxu0 0.0
      %1165 = vmatpush.msra.mxu0 0.0
      %1166 = vmatpush.msra.mxu0 0.0
      %1167 = vmatpush.msra.mxu0 0.0
      %1168 = vmatpush.msra.mxu0 0.0
      %1169 = vmatpush.msra.mxu0 0.0
      %1170 = vmatpush.msra.mxu0 0.0
      %1171 = vmatpush.msra.mxu0 0.0
      %1172 = vmatpush.msra.mxu0 0.0
      %1173 = vmatpush.msra.mxu0 0.0
      %1174 = vmatpush.msra.mxu0 0.0
      %1175 = vmatpush.msra.mxu0 %v1072
      %1176 = vmatpush.msra.mxu0 %v1070
      %1177 = vmatmul.f32.gmra.mxu0 %v1087
      %v1178 = vpop.f32.mrf.mxu0
      %v1179 = vadd.f32 %v1156, %v1178
      %1180 = vmatmul.f32.gmra.mxu0 %v1090
      %v1181 = vpop.f32.mrf.mxu0
      %v1182 = vadd.f32 %v1159, %v1181
      %1183 = vdwg.mxu0
      %v1184 = vmax.f32 %v1133, 0.0
      %v1185 = vmax.f32 %v1179, 0.0
      %v1186 = vmax.f32 %v1136, 0.0
      %v1187 = vmax.f32 %v1182, 0.0
      %1188 = vrot.lane.b32.xlu0 %v1184, 127
      %v1189 = vpop.permute.xlu0 %1188
      %1190 = vrot.lane.b32.xlu0 %v1186, 127
      %v1191 = vpop.permute.xlu0 %1190
      %1192 = vrot.lane.b32.xlu0 %v1185, 127
      %v1193 = vpop.permute.xlu0 %1192
      %1194 = vrot.lane.b32.xlu0 %v1187, 127
      %v1195 = vpop.permute.xlu0 %1194
      %v1196 = vsel %vm638, %v1189, %v1193
      %v1197 = vsel %vm638, %v1191, %v1195
      %v1198 = vsel %vm638, %v1193, %v1189
      %v1199 = vsel %vm638, %v1195, %v1191
      %v1200 = vmax.f32 %v1184, %v1196
      %v1201 = vmax.f32 %v1185, %v1198
      %v1202 = vmax.f32 %v1186, %v1197
      %v1203 = vmax.f32 %v1187, %v1199
      %1204 = vrot.lane.b32.xlu0 %v1200, 112
      %v1205 = vpop.permute.xlu0 %1204
      %1206 = vrot.lane.b32.xlu0 %v1202, 112
      %v1207 = vpop.permute.xlu0 %1206
      %1208 = vrot.lane.b32.xlu0 %v1201, 112
      %v1209 = vpop.permute.xlu0 %1208
      %1210 = vrot.lane.b32.xlu0 %v1203, 112
      %v1211 = vpop.permute.xlu0 %1210
      %v1212 = vsel %vm686, %v1205, %v1209
      %v1213 = vsel %vm686, %v1207, %v1211
      %v1214 = vsel %vm686, %v1209, %v1205
      %v1215 = vsel %vm686, %v1211, %v1207
      %v1216 = vmax.f32 %v1200, %v1212
      %v1217 = vmax.f32 %v1201, %v1214
      %v1218 = vmax.f32 %v1202, %v1213
      %v1219 = vmax.f32 %v1203, %v1215
      %1220 = vrot.lane.b32.xlu0 %v1216, 34
      %v1221 = vpop.permute.xlu0 %1220
      %1222 = vrot.lane.b32.xlu0 %v1218, 34
      %v1223 = vpop.permute.xlu0 %1222
      %1224 = vrot.lane.b32.xlu0 %v1217, 34
      %v1225 = vpop.permute.xlu0 %1224
      %1226 = vrot.lane.b32.xlu0 %v1219, 34
      %v1227 = vpop.permute.xlu0 %1226
      %vm1228 = vcmp.lt.s32.totalorder %v532, 34
      %v1229 = vsel %vm1228, %v1221, %v1225
      %v1230 = vsel %vm1228, %v1223, %v1227
      %v1231 = vsel %vm1228, %v1225, %v1221
      %v1232 = vsel %vm1228, %v1227, %v1223
      %v1233 = vld [vmem:[%s14] ss:$8 sm:$0x3]
      %v1235 = vperm.slane %v1233, 0
      %v1236 = vperm.slane %v1233, 1
      %v1239 = vmul.f32 %v1231, %v1235
      %v1240 = vmul.f32 %v1229, %v1236
      %v1241 = vmul.f32 %v1232, %v1235
      %v1242 = vmul.f32 %v1230, %v1236
      %1243 = vst [vmem:[#allocation2] sm:$0xff] %v1239
      %1244 = vst [vmem:[#allocation2 + $0x8] sm:$0xff] %v1240
      %1245 = vst [vmem:[#allocation2 + $0x10] sm:$0xff] %v1241
      %1246 = vst [vmem:[#allocation2 + $0x18] sm:$0xff] %v1242
      %1247 = vrot.lane.b32.xlu0 %v1216, 32
      %v1248 = vpop.permute.xlu0 %1247
      %1249 = vrot.lane.b32.xlu0 %v1218, 32
      %v1250 = vpop.permute.xlu0 %1249
      %1251 = vrot.lane.b32.xlu0 %v1217, 32
      %v1252 = vpop.permute.xlu0 %1251
      %1253 = vrot.lane.b32.xlu0 %v1219, 32
      %v1254 = vpop.permute.xlu0 %1253
      %vm1255 = vcmp.lt.s32.totalorder %v532, 32
      %v1256 = vsel %vm1255, %v1248, %v1252
      %v1257 = vsel %vm1255, %v1250, %v1254
      %v1258 = vsel %vm1255, %v1252, %v1248
      %v1259 = vsel %vm1255, %v1254, %v1250
      %s1260 = scalar_lea.vmem %s14, 1
      %v1261 = vld [vmem:[%s1260] ss:$8 sm:$0x3]
      %v1263 = vperm.slane %v1261, 0
      %v1264 = vperm.slane %v1261, 1
      %v1267 = vmul.f32 %v1258, %v1263
      %v1268 = vmul.f32 %v1256, %v1264
      %v1269 = vmul.f32 %v1259, %v1263
      %v1270 = vmul.f32 %v1257, %v1264
      %1271 = vst [vmem:[#allocation2 + $0x20] sm:$0xff] %v1267
      %1272 = vst [vmem:[#allocation2 + $0x28] sm:$0xff] %v1268
      %1273 = vst [vmem:[#allocation2 + $0x30] sm:$0xff] %v1269
      %1274 = vst [vmem:[#allocation2 + $0x38] sm:$0xff] %v1270
      %1275 = vrot.lane.b32.xlu0 %v1216, 30
      %v1276 = vpop.permute.xlu0 %1275
      %1277 = vrot.lane.b32.xlu0 %v1218, 30
      %v1278 = vpop.permute.xlu0 %1277
      %1279 = vrot.lane.b32.xlu0 %v1217, 30
      %v1280 = vpop.permute.xlu0 %1279
      %1281 = vrot.lane.b32.xlu0 %v1219, 30
      %v1282 = vpop.permute.xlu0 %1281
      %vm1283 = vcmp.lt.s32.totalorder %v532, 30
      %v1284 = vsel %vm1283, %v1276, %v1280
      %v1285 = vsel %vm1283, %v1278, %v1282
      %v1286 = vsel %vm1283, %v1280, %v1276
      %v1287 = vsel %vm1283, %v1282, %v1278
      %s1288 = scalar_lea.vmem %s14, 2
      %v1289 = vld [vmem:[%s1288] ss:$8 sm:$0x3]
      %v1291 = vperm.slane %v1289, 0
      %v1292 = vperm.slane %v1289, 1
      %v1295 = vmul.f32 %v1286, %v1291
      %v1296 = vmul.f32 %v1284, %v1292
      %v1297 = vmul.f32 %v1287, %v1291
      %v1298 = vmul.f32 %v1285, %v1292
      %1299 = vst [vmem:[#allocation2 + $0x40] sm:$0xff] %v1295
      %1300 = vst [vmem:[#allocation2 + $0x48] sm:$0xff] %v1296
      %1301 = vst [vmem:[#allocation2 + $0x50] sm:$0xff] %v1297
      %1302 = vst [vmem:[#allocation2 + $0x58] sm:$0xff] %v1298
      %1303 = vrot.lane.b32.xlu0 %v1216, 2
      %v1304 = vpop.permute.xlu0 %1303
      %1305 = vrot.lane.b32.xlu0 %v1218, 2
      %v1306 = vpop.permute.xlu0 %1305
      %1307 = vrot.lane.b32.xlu0 %v1217, 2
      %v1308 = vpop.permute.xlu0 %1307
      %1309 = vrot.lane.b32.xlu0 %v1219, 2
      %v1310 = vpop.permute.xlu0 %1309
      %vm1311 = vcmp.lt.s32.totalorder %v532, 2
      %v1312 = vsel %vm1311, %v1304, %v1308
      %v1313 = vsel %vm1311, %v1306, %v1310
      %v1314 = vsel %vm1311, %v1308, %v1304
      %v1315 = vsel %vm1311, %v1310, %v1306
      %s1316 = scalar_lea.vmem %s14, 3
      %v1317 = vld [vmem:[%s1316] ss:$8 sm:$0x3]
      %v1319 = vperm.slane %v1317, 0
      %v1320 = vperm.slane %v1317, 1
      %v1323 = vmul.f32 %v1314, %v1319
      %v1324 = vmul.f32 %v1312, %v1320
      %v1325 = vmul.f32 %v1315, %v1319
      %v1326 = vmul.f32 %v1313, %v1320
      %1327 = vst [vmem:[#allocation2 + $0x60] sm:$0xff] %v1323
      %1328 = vst [vmem:[#allocation2 + $0x68] sm:$0xff] %v1324
      %1329 = vst [vmem:[#allocation2 + $0x70] sm:$0xff] %v1325
      %1330 = vst [vmem:[#allocation2 + $0x78] sm:$0xff] %v1326
      %s1331 = scalar_lea.vmem %s14, 4
      %v1332 = vld [vmem:[%s1331] ss:$8 sm:$0x3]
      %v1334 = vperm.slane %v1332, 0
      %v1335 = vperm.slane %v1332, 1
      %v1338 = vmul.f32 %v1216, %v1334
      %v1339 = vmul.f32 %v1217, %v1335
      %v1340 = vmul.f32 %v1218, %v1334
      %v1341 = vmul.f32 %v1219, %v1335
      %1342 = vst [vmem:[#allocation2 + $0x80] sm:$0xff] %v1338
      %1343 = vst [vmem:[#allocation2 + $0x88] sm:$0xff] %v1339
      %1344 = vst [vmem:[#allocation2 + $0x90] sm:$0xff] %v1340
      %1345 = vst [vmem:[#allocation2 + $0x98] sm:$0xff] %v1341
      %1346 = vrot.lane.b32.xlu0 %v1216, 126
      %v1347 = vpop.permute.xlu0 %1346
      %1348 = vrot.lane.b32.xlu0 %v1218, 126
      %v1349 = vpop.permute.xlu0 %1348
      %1350 = vrot.lane.b32.xlu0 %v1217, 126
      %v1351 = vpop.permute.xlu0 %1350
      %1352 = vrot.lane.b32.xlu0 %v1219, 126
      %v1353 = vpop.permute.xlu0 %1352
      %vm1354 = vcmp.lt.s32.totalorder %v532, 126
      %v1355 = vsel %vm1354, %v1347, %v1351
      %v1356 = vsel %vm1354, %v1349, %v1353
      %v1357 = vsel %vm1354, %v1351, %v1347
      %v1358 = vsel %vm1354, %v1353, %v1349
      %s1359 = scalar_lea.vmem %s14, 5
      %v1360 = vld [vmem:[%s1359] ss:$8 sm:$0x3]
      %v1362 = vperm.slane %v1360, 0
      %v1363 = vperm.slane %v1360, 1
      %v1366 = vmul.f32 %v1355, %v1362
      %v1367 = vmul.f32 %v1357, %v1363
      %v1368 = vmul.f32 %v1356, %v1362
      %v1369 = vmul.f32 %v1358, %v1363
      %1370 = vst [vmem:[#allocation2 + $0xa0] sm:$0xff] %v1366
      %1371 = vst [vmem:[#allocation2 + $0xa8] sm:$0xff] %v1367
      %1372 = vst [vmem:[#allocation2 + $0xb0] sm:$0xff] %v1368
      %1373 = vst [vmem:[#allocation2 + $0xb8] sm:$0xff] %v1369
      %1374 = vrot.lane.b32.xlu0 %v1216, 98
      %v1375 = vpop.permute.xlu0 %1374
      %1376 = vrot.lane.b32.xlu0 %v1218, 98
      %v1377 = vpop.permute.xlu0 %1376
      %1378 = vrot.lane.b32.xlu0 %v1217, 98
      %v1379 = vpop.permute.xlu0 %1378
      %1380 = vrot.lane.b32.xlu0 %v1219, 98
      %v1381 = vpop.permute.xlu0 %1380
      %vm1382 = vcmp.lt.s32.totalorder %v532, 98
      %v1383 = vsel %vm1382, %v1375, %v1379
      %v1384 = vsel %vm1382, %v1377, %v1381
      %v1385 = vsel %vm1382, %v1379, %v1375
      %v1386 = vsel %vm1382, %v1381, %v1377
      %s1387 = scalar_lea.vmem %s14, 6
      %v1388 = vld [vmem:[%s1387] ss:$8 sm:$0x3]
      %v1390 = vperm.slane %v1388, 0
      %v1391 = vperm.slane %v1388, 1
      %v1394 = vmul.f32 %v1383, %v1390
      %v1395 = vmul.f32 %v1385, %v1391
      %v1396 = vmul.f32 %v1384, %v1390
      %v1397 = vmul.f32 %v1386, %v1391
      %1398 = vst [vmem:[#allocation2 + $0xc0] sm:$0xff] %v1394
      %1399 = vst [vmem:[#allocation2 + $0xc8] sm:$0xff] %v1395
      %1400 = vst [vmem:[#allocation2 + $0xd0] sm:$0xff] %v1396
      %1401 = vst [vmem:[#allocation2 + $0xd8] sm:$0xff] %v1397
      %1402 = vrot.lane.b32.xlu0 %v1216, 96
      %v1403 = vpop.permute.xlu0 %1402
      %1404 = vrot.lane.b32.xlu0 %v1218, 96
      %v1405 = vpop.permute.xlu0 %1404
      %1406 = vrot.lane.b32.xlu0 %v1217, 96
      %v1407 = vpop.permute.xlu0 %1406
      %1408 = vrot.lane.b32.xlu0 %v1219, 96
      %v1409 = vpop.permute.xlu0 %1408
      %vm1410 = vcmp.lt.s32.totalorder %v532, 96
      %v1411 = vsel %vm1410, %v1403, %v1407
      %v1412 = vsel %vm1410, %v1405, %v1409
      %v1413 = vsel %vm1410, %v1407, %v1403
      %v1414 = vsel %vm1410, %v1409, %v1405
      %s1415 = scalar_lea.vmem %s14, 7
      %v1416 = vld [vmem:[%s1415] ss:$8 sm:$0x3]
      %v1418 = vperm.slane %v1416, 0
      %v1419 = vperm.slane %v1416, 1
      %v1422 = vmul.f32 %v1411, %v1418
      %v1423 = vmul.f32 %v1413, %v1419
      %v1424 = vmul.f32 %v1412, %v1418
      %v1425 = vmul.f32 %v1414, %v1419
      %1426 = vst [vmem:[#allocation2 + $0xe0] sm:$0xff] %v1422
      %1427 = vst [vmem:[#allocation2 + $0xe8] sm:$0xff] %v1423
      %1428 = vst [vmem:[#allocation2 + $0xf0] sm:$0xff] %v1424
      %1429 = vst [vmem:[#allocation2 + $0xf8] sm:$0xff] %v1425
      %1430 = vrot.lane.b32.xlu0 %v1216, 94
      %v1431 = vpop.permute.xlu0 %1430
      %1432 = vrot.lane.b32.xlu0 %v1218, 94
      %v1433 = vpop.permute.xlu0 %1432
      %1434 = vrot.lane.b32.xlu0 %v1217, 94
      %v1435 = vpop.permute.xlu0 %1434
      %1436 = vrot.lane.b32.xlu0 %v1219, 94
      %v1437 = vpop.permute.xlu0 %1436
      %vm1438 = vcmp.lt.s32.totalorder %v532, 94
      %v1439 = vsel %vm1438, %v1431, %v1435
      %v1440 = vsel %vm1438, %v1433, %v1437
      %v1441 = vsel %vm1438, %v1435, %v1431
      %v1442 = vsel %vm1438, %v1437, %v1433
      %s1443 = scalar_lea.vmem %s14, 16
      %v1444 = vld [vmem:[%s1443] ss:$8 sm:$0x3]
      %v1446 = vperm.slane %v1444, 0
      %v1447 = vperm.slane %v1444, 1
      %v1450 = vmul.f32 %v1439, %v1446
      %v1451 = vmul.f32 %v1441, %v1447
      %v1452 = vmul.f32 %v1440, %v1446
      %v1453 = vmul.f32 %v1442, %v1447
      %1454 = vst [vmem:[#allocation2 + $0x100] sm:$0xff] %v1450
      %1455 = vst [vmem:[#allocation2 + $0x108] sm:$0xff] %v1451
      %1456 = vst [vmem:[#allocation2 + $0x110] sm:$0xff] %v1452
      %1457 = vst [vmem:[#allocation2 + $0x118] sm:$0xff] %v1453
      %v1458 = vld [vmem:[%s5] sm:$0x3]
      %v1459 = vld [vmem:[#allocation2] sm:$0xff]
      %v1460 = vld [vmem:[#allocation2 + $0x8] sm:$0xff]
      %v1461 = vld [vmem:[#allocation2 + $0x10] sm:$0xff]
      %v1462 = vld [vmem:[#allocation2 + $0x18] sm:$0xff]
      %v1463 = vld [vmem:[#allocation2 + $0x20] sm:$0xff]
      %v1464 = vld [vmem:[#allocation2 + $0x28] sm:$0xff]
      %v1465 = vld [vmem:[#allocation2 + $0x30] sm:$0xff]
      %v1466 = vld [vmem:[#allocation2 + $0x38] sm:$0xff]
      %v1467 = vld [vmem:[#allocation2 + $0x40] sm:$0xff]
      %v1468 = vld [vmem:[#allocation2 + $0x48] sm:$0xff]
      %v1469 = vld [vmem:[#allocation2 + $0x50] sm:$0xff]
      %v1470 = vld [vmem:[#allocation2 + $0x58] sm:$0xff]
      %v1471 = vld [vmem:[#allocation2 + $0x60] sm:$0xff]
      %v1472 = vld [vmem:[#allocation2 + $0x68] sm:$0xff]
      %v1473 = vld [vmem:[#allocation2 + $0x70] sm:$0xff]
      %v1474 = vld [vmem:[#allocation2 + $0x78] sm:$0xff]
      %v1475 = vld [vmem:[#allocation2 + $0x80] sm:$0xff]
      %v1476 = vld [vmem:[#allocation2 + $0x88] sm:$0xff]
      %v1477 = vld [vmem:[#allocation2 + $0x90] sm:$0xff]
      %v1478 = vld [vmem:[#allocation2 + $0x98] sm:$0xff]
      %v1479 = vld [vmem:[#allocation2 + $0xa0] sm:$0xff]
      %v1480 = vld [vmem:[#allocation2 + $0xa8] sm:$0xff]
      %v1481 = vld [vmem:[#allocation2 + $0xb0] sm:$0xff]
      %v1482 = vld [vmem:[#allocation2 + $0xb8] sm:$0xff]
      %v1483 = vld [vmem:[#allocation2 + $0xc0] sm:$0xff]
      %v1484 = vld [vmem:[#allocation2 + $0xc8] sm:$0xff]
      %v1485 = vld [vmem:[#allocation2 + $0xd0] sm:$0xff]
      %v1486 = vld [vmem:[#allocation2 + $0xd8] sm:$0xff]
      %v1487 = vld [vmem:[#allocation2 + $0xe0] sm:$0xff]
      %v1488 = vld [vmem:[#allocation2 + $0xe8] sm:$0xff]
      %v1489 = vld [vmem:[#allocation2 + $0xf0] sm:$0xff]
      %v1490 = vld [vmem:[#allocation2 + $0xf8] sm:$0xff]
      %v1491 = vld [vmem:[#allocation2 + $0x100] sm:$0xff]
      %v1492 = vld [vmem:[#allocation2 + $0x108] sm:$0xff]
      %v1493 = vld [vmem:[#allocation2 + $0x110] sm:$0xff]
      %v1494 = vld [vmem:[#allocation2 + $0x118] sm:$0xff]
      %v1495 = vld [vmem:[#allocation3] sm:$0x1]
      %1497 = vset.pattern.permute.xlu0 0
      %1498 = vperm.xlu0 %1497, %v1495
      %v1499 = vpop.permute.xlu0 %1498
      %v1501 = vperm.slane %v1499, 0
      %v1503 = vperm.slane %v1458, 0
      %v1504 = vperm.slane %v1458, 1
      %v1506 = vsel %vm1085, %v1504, 0
      %1508 = vmatpush.msra.mxu0 %v1489
      %1509 = vmatpush.msra.mxu0 %v1487
      %1510 = vmatpush.msra.mxu0 %v1485
      %1511 = vmatpush.msra.mxu0 %v1483
      %1512 = vmatpush.msra.mxu0 %v1481
      %1513 = vmatpush.msra.mxu0 %v1479
      %1514 = vmatpush.msra.mxu0 %v1477
      %1515 = vmatpush.msra.mxu0 %v1475
      %1516 = vmatpush.msra.mxu0 %v1473
      %1517 = vmatpush.msra.mxu0 %v1471
      %1518 = vmatpush.msra.mxu0 %v1469
      %1519 = vmatpush.msra.mxu0 %v1467
      %1520 = vmatpush.msra.mxu0 %v1465
      %1521 = vmatpush.msra.mxu0 %v1463
      %1522 = vmatpush.msra.mxu0 %v1461
      %1523 = vmatpush.msra.mxu0 %v1459
      %1524 = vmatmul.f32.gmra.mxu0 %v1503
      %v1525 = vpop.f32.mrf.mxu0
      %v1526 = vadd.f32 %v1501, %v1525
      %1527 = vdwg.mxu0
      %1528 = vmatpush.msra.mxu0 0.0
      %1529 = vmatpush.msra.mxu0 0.0
      %1530 = vmatpush.msra.mxu0 0.0
      %1531 = vmatpush.msra.mxu0 0.0
      %1532 = vmatpush.msra.mxu0 0.0
      %1533 = vmatpush.msra.mxu0 0.0
      %1534 = vmatpush.msra.mxu0 0.0
      %1535 = vmatpush.msra.mxu0 0.0
      %1536 = vmatpush.msra.mxu0 0.0
      %1537 = vmatpush.msra.mxu0 0.0
      %1538 = vmatpush.msra.mxu0 0.0
      %1539 = vmatpush.msra.mxu0 0.0
      %1540 = vmatpush.msra.mxu0 0.0
      %1541 = vmatpush.msra.mxu0 0.0
      %1542 = vmatpush.msra.mxu0 %v1493
      %1543 = vmatpush.msra.mxu0 %v1491
      %1544 = vmatmul.f32.gmra.mxu0 %v1506
      %v1545 = vpop.f32.mrf.mxu0
      %v1546 = vadd.f32 %v1526, %v1545
      %1547 = vdwg.mxu0
      %1548 = vmatpush.msra.mxu0 %v1490
      %1549 = vmatpush.msra.mxu0 %v1488
      %1550 = vmatpush.msra.mxu0 %v1486
      %1551 = vmatpush.msra.mxu0 %v1484
      %1552 = vmatpush.msra.mxu0 %v1482
      %1553 = vmatpush.msra.mxu0 %v1480
      %1554 = vmatpush.msra.mxu0 %v1478
      %1555 = vmatpush.msra.mxu0 %v1476
      %1556 = vmatpush.msra.mxu0 %v1474
      %1557 = vmatpush.msra.mxu0 %v1472
      %1558 = vmatpush.msra.mxu0 %v1470
      %1559 = vmatpush.msra.mxu0 %v1468
      %1560 = vmatpush.msra.mxu0 %v1466
      %1561 = vmatpush.msra.mxu0 %v1464
      %1562 = vmatpush.msra.mxu0 %v1462
      %1563 = vmatpush.msra.mxu0 %v1460
      %1564 = vmatmul.f32.gmra.mxu0 %v1503
      %v1565 = vpop.f32.mrf.mxu0
      %v1566 = vadd.f32 %v1501, %v1565
      %1567 = vdwg.mxu0
      %1568 = vmatpush.msra.mxu0 0.0
      %1569 = vmatpush.msra.mxu0 0.0
      %1570 = vmatpush.msra.mxu0 0.0
      %1571 = vmatpush.msra.mxu0 0.0
      %1572 = vmatpush.msra.mxu0 0.0
      %1573 = vmatpush.msra.mxu0 0.0
      %1574 = vmatpush.msra.mxu0 0.0
      %1575 = vmatpush.msra.mxu0 0.0
      %1576 = vmatpush.msra.mxu0 0.0
      %1577 = vmatpush.msra.mxu0 0.0
      %1578 = vmatpush.msra.mxu0 0.0
      %1579 = vmatpush.msra.mxu0 0.0
      %1580 = vmatpush.msra.mxu0 0.0
      %1581 = vmatpush.msra.mxu0 0.0
      %1582 = vmatpush.msra.mxu0 %v1494
      %1583 = vmatpush.msra.mxu0 %v1492
      %1584 = vmatmul.f32.gmra.mxu0 %v1506
      %v1585 = vpop.f32.mrf.mxu0
      %v1586 = vadd.f32 %v1566, %v1585
      %1587 = vdwg.mxu0
      %1588 = vrot.lane.b32.xlu0 %v1546, 34
      %v1589 = vpop.permute.xlu0 %1588
      %1590 = vrot.lane.b32.xlu0 %v1586, 34
      %v1591 = vpop.permute.xlu0 %1590
      %v1592 = vsel %vm1228, %v1589, %v1591
      %v1593 = vsel %vm1228, %v1591, %v1589
      %v1594 = vld [vmem:[%s14] ss:$8 sm:$0x3]
      %v1596 = vperm.slane %v1594, 0
      %v1597 = vperm.slane %v1594, 1
      %v1600 = vmul.f32 %v1593, %v1596
      %v1601 = vmul.f32 %v1592, %v1597
      %v1604 = vrot.slane %v1601, 7
      %v1605 = vsel %vm547, %v1600, %v1604
      %1607 = vst.msk [vmem:[#allocation2] ss:$8 sm:$0x3] %vm553, %v1605
      %1608 = vst.msk [vmem:[#allocation2] ss:$8 sm:$0x0] %vm553, %v1605
      %1609 = vrot.lane.b32.xlu0 %v1546, 32
      %v1610 = vpop.permute.xlu0 %1609
      %1611 = vrot.lane.b32.xlu0 %v1586, 32
      %v1612 = vpop.permute.xlu0 %1611
      %v1613 = vsel %vm1255, %v1610, %v1612
      %v1614 = vsel %vm1255, %v1612, %v1610
      %v1615 = vld [vmem:[%s1260] ss:$8 sm:$0x3]
      %v1617 = vperm.slane %v1615, 0
      %v1618 = vperm.slane %v1615, 1
      %v1621 = vmul.f32 %v1614, %v1617
      %v1622 = vmul.f32 %v1613, %v1618
      %v1625 = vrot.slane %v1622, 7
      %v1626 = vsel %vm547, %v1621, %v1625
      %1628 = vst.msk [vmem:[%s577] ss:$8 sm:$0x3] %vm553, %v1626
      %1629 = vst.msk [vmem:[%s577] ss:$8 sm:$0x0] %vm553, %v1626
      %1630 = vrot.lane.b32.xlu0 %v1546, 30
      %v1631 = vpop.permute.xlu0 %1630
      %1632 = vrot.lane.b32.xlu0 %v1586, 30
      %v1633 = vpop.permute.xlu0 %1632
      %v1634 = vsel %vm1283, %v1631, %v1633
      %v1635 = vsel %vm1283, %v1633, %v1631
      %v1636 = vld [vmem:[%s1288] ss:$8 sm:$0x3]
      %v1638 = vperm.slane %v1636, 0
      %v1639 = vperm.slane %v1636, 1
      %v1642 = vmul.f32 %v1635, %v1638
      %v1643 = vmul.f32 %v1634, %v1639
      %v1646 = vrot.slane %v1643, 7
      %v1647 = vsel %vm547, %v1642, %v1646
      %1649 = vst.msk [vmem:[%s601] ss:$8 sm:$0x3] %vm553, %v1647
      %1650 = vst.msk [vmem:[%s601] ss:$8 sm:$0x0] %vm553, %v1647
      %1651 = vrot.lane.b32.xlu0 %v1546, 2
      %v1652 = vpop.permute.xlu0 %1651
      %1653 = vrot.lane.b32.xlu0 %v1586, 2
      %v1654 = vpop.permute.xlu0 %1653
      %v1655 = vsel %vm1311, %v1652, %v1654
      %v1656 = vsel %vm1311, %v1654, %v1652
      %v1657 = vld [vmem:[%s1316] ss:$8 sm:$0x3]
      %v1659 = vperm.slane %v1657, 0
      %v1660 = vperm.slane %v1657, 1
      %v1663 = vmul.f32 %v1656, %v1659
      %v1664 = vmul.f32 %v1655, %v1660
      %v1667 = vrot.slane %v1664, 7
      %v1668 = vsel %vm547, %v1663, %v1667
      %1670 = vst.msk [vmem:[%s625] ss:$8 sm:$0x3] %vm553, %v1668
      %1671 = vst.msk [vmem:[%s625] ss:$8 sm:$0x0] %vm553, %v1668
      %v1672 = vld [vmem:[%s1331] ss:$8 sm:$0x3]
      %v1674 = vperm.slane %v1672, 0
      %v1675 = vperm.slane %v1672, 1
      %v1678 = vmul.f32 %v1546, %v1674
      %v1679 = vmul.f32 %v1586, %v1675
      %v1682 = vrot.slane %v1679, 7
      %v1683 = vsel %vm547, %v1678, %v1682
      %1685 = vst.msk [vmem:[%s631] ss:$8 sm:$0x3] %vm553, %v1683
      %1686 = vst.msk [vmem:[%s631] ss:$8 sm:$0x0] %vm553, %v1683
      %1687 = vrot.lane.b32.xlu0 %v1546, 126
      %v1688 = vpop.permute.xlu0 %1687
      %1689 = vrot.lane.b32.xlu0 %v1586, 126
      %v1690 = vpop.permute.xlu0 %1689
      %v1691 = vsel %vm1354, %v1688, %v1690
      %v1692 = vsel %vm1354, %v1690, %v1688
      %v1693 = vld [vmem:[%s1359] ss:$8 sm:$0x3]
      %v1695 = vperm.slane %v1693, 0
      %v1696 = vperm.slane %v1693, 1
      %v1699 = vmul.f32 %v1691, %v1695
      %v1700 = vmul.f32 %v1692, %v1696
      %v1703 = vrot.slane %v1700, 7
      %v1704 = vsel %vm547, %v1699, %v1703
      %1706 = vst.msk [vmem:[%s655] ss:$8 sm:$0x3] %vm553, %v1704
      %1707 = vst.msk [vmem:[%s655] ss:$8 sm:$0x0] %vm553, %v1704
      %1708 = vrot.lane.b32.xlu0 %v1546, 98
      %v1709 = vpop.permute.xlu0 %1708
      %1710 = vrot.lane.b32.xlu0 %v1586, 98
      %v1711 = vpop.permute.xlu0 %1710
      %v1712 = vsel %vm1382, %v1709, %v1711
      %v1713 = vsel %vm1382, %v1711, %v1709
      %v1714 = vld [vmem:[%s1387] ss:$8 sm:$0x3]
      %v1716 = vperm.slane %v1714, 0
      %v1717 = vperm.slane %v1714, 1
      %v1720 = vmul.f32 %v1712, %v1716
      %v1721 = vmul.f32 %v1713, %v1717
      %v1724 = vrot.slane %v1721, 7
      %v1725 = vsel %vm547, %v1720, %v1724
      %1727 = vst.msk [vmem:[%s679] ss:$8 sm:$0x3] %vm553, %v1725
      %1728 = vst.msk [vmem:[%s679] ss:$8 sm:$0x0] %vm553, %v1725
      %1729 = vrot.lane.b32.xlu0 %v1546, 96
      %v1730 = vpop.permute.xlu0 %1729
      %1731 = vrot.lane.b32.xlu0 %v1586, 96
      %v1732 = vpop.permute.xlu0 %1731
      %v1733 = vsel %vm1410, %v1730, %v1732
      %v1734 = vsel %vm1410, %v1732, %v1730
      %v1735 = vld [vmem:[%s1415] ss:$8 sm:$0x3]
      %v1737 = vperm.slane %v1735, 0
      %v1738 = vperm.slane %v1735, 1
      %v1741 = vmul.f32 %v1733, %v1737
      %v1742 = vmul.f32 %v1734, %v1738
      %v1745 = vrot.slane %v1742, 7
      %v1746 = vsel %vm547, %v1741, %v1745
      %1748 = vst.msk [vmem:[%s703] ss:$8 sm:$0x3] %vm553, %v1746
      %1749 = vst.msk [vmem:[%s703] ss:$8 sm:$0x0] %vm553, %v1746
      %1750 = vrot.lane.b32.xlu0 %v1546, 94
      %v1751 = vpop.permute.xlu0 %1750
      %1752 = vrot.lane.b32.xlu0 %v1586, 94
      %v1753 = vpop.permute.xlu0 %1752
      %v1754 = vsel %vm1438, %v1751, %v1753
      %v1755 = vsel %vm1438, %v1753, %v1751
      %v1756 = vld [vmem:[%s1443] ss:$8 sm:$0x3]
      %v1758 = vperm.slane %v1756, 0
      %v1759 = vperm.slane %v1756, 1
      %v1762 = vmul.f32 %v1754, %v1758
      %v1763 = vmul.f32 %v1755, %v1759
      %v1766 = vrot.slane %v1763, 7
      %v1767 = vsel %vm547, %v1762, %v1766
      %1769 = vst.msk [vmem:[%s727] ss:$8 sm:$0x3] %vm553, %v1767
      %1770 = vst.msk [vmem:[%s727] ss:$8 sm:$0x0] %vm553, %v1767
      %v1771 = vld [vmem:[%s7] sm:$0xff]
      %v1772 = vld [vmem:[%s7 + $0x8] sm:$0xff]
      %v1773 = vld [vmem:[#allocation2] sm:$0xff]
      %v1774 = vld [vmem:[#allocation2 + $0x8] sm:$0xff]
      %v1775 = vld [vmem:[#allocation2 + $0x10] sm:$0x1]
      %v1776 = vld [vmem:[#allocation2 + $0x18] sm:$0x1]
      %v1777 = vld [vmem:[%s8] sm:$0xff]
      %v1778 = vld [vmem:[%s8 + $0x8] sm:$0xff]
      %1780 = vset.pattern.permute.xlu0 0
      %1781 = vperm.xlu0 %1780, %v1777
      %v1782 = vpop.permute.xlu0 %1781
      %1785 = vset.pattern.permute.xlu0 0
      %1786 = vperm.xlu0 %1785, %v1778
      %v1787 = vpop.permute.xlu0 %1786
      %v1790 = vsel %vm748, %v1771, 0
      %v1793 = vsel %vm748, %v1772, 0
      %v1796 = vsel %vm547, %v1775, 0
      %v1799 = vsel %vm547, %v1776, 0
      %1801 = vmatpush.msra.mxu0 0.0
      %1802 = vmatpush.msra.mxu0 0.0
      %1803 = vmatpush.msra.mxu0 0.0
      %1804 = vmatpush.msra.mxu0 0.0
      %1805 = vmatpush.msra.mxu0 0.0
      %1806 = vmatpush.msra.mxu0 0.0
      %1807 = vmatpush.msra.mxu0 0.0
      %1808 = vmatpush.msra.mxu0 0.0
      %1809 = vmatpush.msra.mxu0 0.0
      %1810 = vmatpush.msra.mxu0 0.0
      %1811 = vmatpush.msra.mxu0 0.0
      %1812 = vmatpush.msra.mxu0 0.0
      %1813 = vmatpush.msra.mxu0 0.0
      %1814 = vmatpush.msra.mxu0 0.0
      %1815 = vmatpush.msra.mxu0 %v1796
      %1816 = vmatpush.msra.mxu0 %v1773
      %1817 = vmatmul.f32.gmra.mxu0 %v1790
      %v1818 = vpop.f32.mrf.mxu0
      %v1819 = vadd.f32 %v1782, %v1818
      %1820 = vmatmul.f32.gmra.mxu0 %v1793
      %v1821 = vpop.f32.mrf.mxu0
      %v1822 = vadd.f32 %v1787, %v1821
      %1823 = vdwg.mxu0
      %1824 = vmatpush.msra.mxu0 0.0
      %1825 = vmatpush.msra.mxu0 0.0
      %1826 = vmatpush.msra.mxu0 0.0
      %1827 = vmatpush.msra.mxu0 0.0
      %1828 = vmatpush.msra.mxu0 0.0
      %1829 = vmatpush.msra.mxu0 0.0
      %1830 = vmatpush.msra.mxu0 0.0
      %1831 = vmatpush.msra.mxu0 0.0
      %1832 = vmatpush.msra.mxu0 0.0
      %1833 = vmatpush.msra.mxu0 0.0
      %1834 = vmatpush.msra.mxu0 0.0
      %1835 = vmatpush.msra.mxu0 0.0
      %1836 = vmatpush.msra.mxu0 0.0
      %1837 = vmatpush.msra.mxu0 0.0
      %1838 = vmatpush.msra.mxu0 %v1799
      %1839 = vmatpush.msra.mxu0 %v1774
      %1840 = vmatmul.f32.gmra.mxu0 %v1790
      %v1841 = vpop.f32.mrf.mxu0
      %v1842 = vadd.f32 %v1782, %v1841
      %1843 = vmatmul.f32.gmra.mxu0 %v1793
      %v1844 = vpop.f32.mrf.mxu0
      %v1845 = vadd.f32 %v1787, %v1844
      %1846 = vdwg.mxu0
      %v1847 = vmax.f32 %v1819, 0.0
      %v1848 = vmax.f32 %v1842, 0.0
      %v1849 = vmax.f32 %v1822, 0.0
      %v1850 = vmax.f32 %v1845, 0.0
      %v1851 = vld [vmem:[%s15] ss:$4 sm:$0x3]
      %v1853 = vperm.slane %v1851, 0
      %v1854 = vperm.slane %v1851, 1
      %v1857 = vmul.f32 %v1847, %v1853
      %v1858 = vmul.f32 %v1848, %v1854
      %v1859 = vmul.f32 %v1849, %v1853
      %v1860 = vmul.f32 %v1850, %v1854
      %1861 = vrot.lane.b32.xlu0 %v1847, 1
      %v1862 = vpop.permute.xlu0 %1861
      %1863 = vrot.lane.b32.xlu0 %v1849, 1
      %v1864 = vpop.permute.xlu0 %1863
      %1865 = vrot.lane.b32.xlu0 %v1848, 1
      %v1866 = vpop.permute.xlu0 %1865
      %1867 = vrot.lane.b32.xlu0 %v1850, 1
      %v1868 = vpop.permute.xlu0 %1867
      %v1869 = vsel %vm608, %v1862, %v1866
      %v1870 = vsel %vm608, %v1864, %v1868
      %v1871 = vsel %vm608, %v1866, %v1862
      %v1872 = vsel %vm608, %v1868, %v1864
      %s1873 = scalar_lea.vmem %s15, 1
      %v1874 = vld [vmem:[%s1873] ss:$4 sm:$0x3]
      %v1876 = vperm.slane %v1874, 0
      %v1877 = vperm.slane %v1874, 1
      %v1880 = vmul.f32 %v1871, %v1876
      %v1881 = vmul.f32 %v1869, %v1877
      %v1882 = vmul.f32 %v1872, %v1876
      %v1883 = vmul.f32 %v1870, %v1877
      %v1884 = vadd.f32 %v1857, %v1880
      %v1885 = vadd.f32 %v1858, %v1881
      %v1886 = vadd.f32 %v1859, %v1882
      %v1887 = vadd.f32 %v1860, %v1883
      %1888 = vrot.lane.b32.xlu0 %v1847, 16
      %v1889 = vpop.permute.xlu0 %1888
      %1890 = vrot.lane.b32.xlu0 %v1849, 16
      %v1891 = vpop.permute.xlu0 %1890
      %1892 = vrot.lane.b32.xlu0 %v1848, 16
      %v1893 = vpop.permute.xlu0 %1892
      %1894 = vrot.lane.b32.xlu0 %v1850, 16
      %v1895 = vpop.permute.xlu0 %1894
      %v1896 = vsel %vm560, %v1889, %v1893
      %v1897 = vsel %vm560, %v1891, %v1895
      %v1898 = vsel %vm560, %v1893, %v1889
      %v1899 = vsel %vm560, %v1895, %v1891
      %s1900 = scalar_lea.vmem %s15, 2
      %v1901 = vld [vmem:[%s1900] ss:$4 sm:$0x3]
      %v1903 = vperm.slane %v1901, 0
      %v1904 = vperm.slane %v1901, 1
      %v1907 = vmul.f32 %v1898, %v1903
      %v1908 = vmul.f32 %v1896, %v1904
      %v1909 = vmul.f32 %v1899, %v1903
      %v1910 = vmul.f32 %v1897, %v1904
      %v1911 = vadd.f32 %v1884, %v1907
      %v1912 = vadd.f32 %v1885, %v1908
      %v1913 = vadd.f32 %v1886, %v1909
      %v1914 = vadd.f32 %v1887, %v1910
      %1915 = vrot.lane.b32.xlu0 %v1847, 17
      %v1916 = vpop.permute.xlu0 %1915
      %1917 = vrot.lane.b32.xlu0 %v1849, 17
      %v1918 = vpop.permute.xlu0 %1917
      %1919 = vrot.lane.b32.xlu0 %v1848, 17
      %v1920 = vpop.permute.xlu0 %1919
      %1921 = vrot.lane.b32.xlu0 %v1850, 17
      %v1922 = vpop.permute.xlu0 %1921
      %v1923 = vsel %vm533, %v1916, %v1920
      %v1924 = vsel %vm533, %v1918, %v1922
      %v1925 = vsel %vm533, %v1920, %v1916
      %v1926 = vsel %vm533, %v1922, %v1918
      %s1927 = scalar_lea.vmem %s15, 3
      %v1928 = vld [vmem:[%s1927] ss:$4 sm:$0x3]
      %v1930 = vperm.slane %v1928, 0
      %v1931 = vperm.slane %v1928, 1
      %v1934 = vmul.f32 %v1925, %v1930
      %v1935 = vmul.f32 %v1923, %v1931
      %v1936 = vmul.f32 %v1926, %v1930
      %v1937 = vmul.f32 %v1924, %v1931
      %v1938 = vadd.f32 %v1911, %v1934
      %v1939 = vadd.f32 %v1912, %v1935
      %v1940 = vadd.f32 %v1913, %v1936
      %v1941 = vadd.f32 %v1914, %v1937
      %1942 = vrot.lane.b32.xlu0 %v1938, 17
      %v1943 = vpop.permute.xlu0 %1942
      %1944 = vrot.lane.b32.xlu0 %v1940, 17
      %v1945 = vpop.permute.xlu0 %1944
      %1946 = vrot.lane.b32.xlu0 %v1939, 17
      %v1947 = vpop.permute.xlu0 %1946
      %1948 = vrot.lane.b32.xlu0 %v1941, 17
      %v1949 = vpop.permute.xlu0 %1948
      %v1950 = vsel %vm533, %v1943, %v1947
      %v1951 = vsel %vm533, %v1945, %v1949
      %v1952 = vsel %vm533, %v1947, %v1943
      %v1953 = vsel %vm533, %v1949, %v1945
      %v1954 = vld [vmem:[%s13] ss:$8 sm:$0x3]
      %v1956 = vperm.slane %v1954, 0
      %v1957 = vperm.slane %v1954, 1
      %v1960 = vmul.f32 %v1952, %v1956
      %v1961 = vmul.f32 %v1950, %v1957
      %v1962 = vmul.f32 %v1953, %v1956
      %v1963 = vmul.f32 %v1951, %v1957
      %1964 = vst [vmem:[#allocation2] sm:$0xff] %v1960
      %1965 = vst [vmem:[#allocation2 + $0x8] sm:$0xff] %v1961
      %1966 = vst [vmem:[#allocation2 + $0x10] sm:$0xff] %v1962
      %1967 = vst [vmem:[#allocation2 + $0x18] sm:$0xff] %v1963
      %1968 = vrot.lane.b32.xlu0 %v1938, 16
      %v1969 = vpop.permute.xlu0 %1968
      %1970 = vrot.lane.b32.xlu0 %v1940, 16
      %v1971 = vpop.permute.xlu0 %1970
      %1972 = vrot.lane.b32.xlu0 %v1939, 16
      %v1973 = vpop.permute.xlu0 %1972
      %1974 = vrot.lane.b32.xlu0 %v1941, 16
      %v1975 = vpop.permute.xlu0 %1974
      %v1976 = vsel %vm560, %v1969, %v1973
      %v1977 = vsel %vm560, %v1971, %v1975
      %v1978 = vsel %vm560, %v1973, %v1969
      %v1979 = vsel %vm560, %v1975, %v1971
      %v1980 = vld [vmem:[%s563] ss:$8 sm:$0x3]
      %v1982 = vperm.slane %v1980, 0
      %v1983 = vperm.slane %v1980, 1
      %v1986 = vmul.f32 %v1978, %v1982
      %v1987 = vmul.f32 %v1976, %v1983
      %v1988 = vmul.f32 %v1979, %v1982
      %v1989 = vmul.f32 %v1977, %v1983
      %1990 = vst [vmem:[#allocation2 + $0x20] sm:$0xff] %v1986
      %1991 = vst [vmem:[#allocation2 + $0x28] sm:$0xff] %v1987
      %1992 = vst [vmem:[#allocation2 + $0x30] sm:$0xff] %v1988
      %1993 = vst [vmem:[#allocation2 + $0x38] sm:$0xff] %v1989
      %1994 = vrot.lane.b32.xlu0 %v1938, 15
      %v1995 = vpop.permute.xlu0 %1994
      %1996 = vrot.lane.b32.xlu0 %v1940, 15
      %v1997 = vpop.permute.xlu0 %1996
      %1998 = vrot.lane.b32.xlu0 %v1939, 15
      %v1999 = vpop.permute.xlu0 %1998
      %2000 = vrot.lane.b32.xlu0 %v1941, 15
      %v2001 = vpop.permute.xlu0 %2000
      %v2002 = vsel %vm584, %v1995, %v1999
      %v2003 = vsel %vm584, %v1997, %v2001
      %v2004 = vsel %vm584, %v1999, %v1995
      %v2005 = vsel %vm584, %v2001, %v1997
      %v2006 = vld [vmem:[%s587] ss:$8 sm:$0x3]
      %v2008 = vperm.slane %v2006, 0
      %v2009 = vperm.slane %v2006, 1
      %v2012 = vmul.f32 %v2004, %v2008
      %v2013 = vmul.f32 %v2002, %v2009
      %v2014 = vmul.f32 %v2005, %v2008
      %v2015 = vmul.f32 %v2003, %v2009
      %2016 = vst [vmem:[#allocation2 + $0x40] sm:$0xff] %v2012
      %2017 = vst [vmem:[#allocation2 + $0x48] sm:$0xff] %v2013
      %2018 = vst [vmem:[#allocation2 + $0x50] sm:$0xff] %v2014
      %2019 = vst [vmem:[#allocation2 + $0x58] sm:$0xff] %v2015
      %2020 = vrot.lane.b32.xlu0 %v1938, 1
      %v2021 = vpop.permute.xlu0 %2020
      %2022 = vrot.lane.b32.xlu0 %v1940, 1
      %v2023 = vpop.permute.xlu0 %2022
      %2024 = vrot.lane.b32.xlu0 %v1939, 1
      %v2025 = vpop.permute.xlu0 %2024
      %2026 = vrot.lane.b32.xlu0 %v1941, 1
      %v2027 = vpop.permute.xlu0 %2026
      %v2028 = vsel %vm608, %v2021, %v2025
      %v2029 = vsel %vm608, %v2023, %v2027
      %v2030 = vsel %vm608, %v2025, %v2021
      %v2031 = vsel %vm608, %v2027, %v2023
      %v2032 = vld [vmem:[%s611] ss:$8 sm:$0x3]
      %v2034 = vperm.slane %v2032, 0
      %v2035 = vperm.slane %v2032, 1
      %v2038 = vmul.f32 %v2030, %v2034
      %v2039 = vmul.f32 %v2028, %v2035
      %v2040 = vmul.f32 %v2031, %v2034
      %v2041 = vmul.f32 %v2029, %v2035
      %2042 = vst [vmem:[#allocation2 + $0x60] sm:$0xff] %v2038
      %2043 = vst [vmem:[#allocation2 + $0x68] sm:$0xff] %v2039
      %2044 = vst [vmem:[#allocation2 + $0x70] sm:$0xff] %v2040
      %2045 = vst [vmem:[#allocation2 + $0x78] sm:$0xff] %v2041
      %v2046 = vld [vmem:[%s628] ss:$8 sm:$0x3]
      %v2048 = vperm.slane %v2046, 0
      %v2049 = vperm.slane %v2046, 1
      %v2052 = vmul.f32 %v1938, %v2048
      %v2053 = vmul.f32 %v1939, %v2049
      %v2054 = vmul.f32 %v1940, %v2048
      %v2055 = vmul.f32 %v1941, %v2049
      %2056 = vst [vmem:[#allocation2 + $0x80] sm:$0xff] %v2052
      %2057 = vst [vmem:[#allocation2 + $0x88] sm:$0xff] %v2053
      %2058 = vst [vmem:[#allocation2 + $0x90] sm:$0xff] %v2054
      %2059 = vst [vmem:[#allocation2 + $0x98] sm:$0xff] %v2055
      %2060 = vrot.lane.b32.xlu0 %v1938, 127
      %v2061 = vpop.permute.xlu0 %2060
      %2062 = vrot.lane.b32.xlu0 %v1940, 127
      %v2063 = vpop.permute.xlu0 %2062
      %2064 = vrot.lane.b32.xlu0 %v1939, 127
      %v2065 = vpop.permute.xlu0 %2064
      %2066 = vrot.lane.b32.xlu0 %v1941, 127
      %v2067 = vpop.permute.xlu0 %2066
      %v2068 = vsel %vm638, %v2061, %v2065
      %v2069 = vsel %vm638, %v2063, %v2067
      %v2070 = vsel %vm638, %v2065, %v2061
      %v2071 = vsel %vm638, %v2067, %v2063
      %v2072 = vld [vmem:[%s641] ss:$8 sm:$0x3]
      %v2074 = vperm.slane %v2072, 0
      %v2075 = vperm.slane %v2072, 1
      %v2078 = vmul.f32 %v2068, %v2074
      %v2079 = vmul.f32 %v2070, %v2075
      %v2080 = vmul.f32 %v2069, %v2074
      %v2081 = vmul.f32 %v2071, %v2075
      %2082 = vst [vmem:[#allocation2 + $0xa0] sm:$0xff] %v2078
      %2083 = vst [vmem:[#allocation2 + $0xa8] sm:$0xff] %v2079
      %2084 = vst [vmem:[#allocation2 + $0xb0] sm:$0xff] %v2080
      %2085 = vst [vmem:[#allocation2 + $0xb8] sm:$0xff] %v2081
      %2086 = vrot.lane.b32.xlu0 %v1938, 113
      %v2087 = vpop.permute.xlu0 %2086
      %2088 = vrot.lane.b32.xlu0 %v1940, 113
      %v2089 = vpop.permute.xlu0 %2088
      %2090 = vrot.lane.b32.xlu0 %v1939, 113
      %v2091 = vpop.permute.xlu0 %2090
      %2092 = vrot.lane.b32.xlu0 %v1941, 113
      %v2093 = vpop.permute.xlu0 %2092
      %v2094 = vsel %vm662, %v2087, %v2091
      %v2095 = vsel %vm662, %v2089, %v2093
      %v2096 = vsel %vm662, %v2091, %v2087
      %v2097 = vsel %vm662, %v2093, %v2089
      %v2098 = vld [vmem:[%s665] ss:$8 sm:$0x3]
      %v2100 = vperm.slane %v2098, 0
      %v2101 = vperm.slane %v2098, 1
      %v2104 = vmul.f32 %v2094, %v2100
      %v2105 = vmul.f32 %v2096, %v2101
      %v2106 = vmul.f32 %v2095, %v2100
      %v2107 = vmul.f32 %v2097, %v2101
      %2108 = vst [vmem:[#allocation2 + $0xc0] sm:$0xff] %v2104
      %2109 = vst [vmem:[#allocation2 + $0xc8] sm:$0xff] %v2105
      %2110 = vst [vmem:[#allocation2 + $0xd0] sm:$0xff] %v2106
      %2111 = vst [vmem:[#allocation2 + $0xd8] sm:$0xff] %v2107
      %2112 = vrot.lane.b32.xlu0 %v1938, 112
      %v2113 = vpop.permute.xlu0 %2112
      %2114 = vrot.lane.b32.xlu0 %v1940, 112
      %v2115 = vpop.permute.xlu0 %2114
      %2116 = vrot.lane.b32.xlu0 %v1939, 112
      %v2117 = vpop.permute.xlu0 %2116
      %2118 = vrot.lane.b32.xlu0 %v1941, 112
      %v2119 = vpop.permute.xlu0 %2118
      %v2120 = vsel %vm686, %v2113, %v2117
      %v2121 = vsel %vm686, %v2115, %v2119
      %v2122 = vsel %vm686, %v2117, %v2113
      %v2123 = vsel %vm686, %v2119, %v2115
      %v2124 = vld [vmem:[%s689] ss:$8 sm:$0x3]
      %v2126 = vperm.slane %v2124, 0
      %v2127 = vperm.slane %v2124, 1
      %v2130 = vmul.f32 %v2120, %v2126
      %v2131 = vmul.f32 %v2122, %v2127
      %v2132 = vmul.f32 %v2121, %v2126
      %v2133 = vmul.f32 %v2123, %v2127
      %2134 = vst [vmem:[#allocation2 + $0xe0] sm:$0xff] %v2130
      %2135 = vst [vmem:[#allocation2 + $0xe8] sm:$0xff] %v2131
      %2136 = vst [vmem:[#allocation2 + $0xf0] sm:$0xff] %v2132
      %2137 = vst [vmem:[#allocation2 + $0xf8] sm:$0xff] %v2133
      %2138 = vrot.lane.b32.xlu0 %v1938, 111
      %v2139 = vpop.permute.xlu0 %2138
      %2140 = vrot.lane.b32.xlu0 %v1940, 111
      %v2141 = vpop.permute.xlu0 %2140
      %2142 = vrot.lane.b32.xlu0 %v1939, 111
      %v2143 = vpop.permute.xlu0 %2142
      %2144 = vrot.lane.b32.xlu0 %v1941, 111
      %v2145 = vpop.permute.xlu0 %2144
      %v2146 = vsel %vm710, %v2139, %v2143
      %v2147 = vsel %vm710, %v2141, %v2145
      %v2148 = vsel %vm710, %v2143, %v2139
      %v2149 = vsel %vm710, %v2145, %v2141
      %v2150 = vld [vmem:[%s713] ss:$8 sm:$0x3]
      %v2152 = vperm.slane %v2150, 0
      %v2153 = vperm.slane %v2150, 1
      %v2156 = vmul.f32 %v2146, %v2152
      %v2157 = vmul.f32 %v2148, %v2153
      %v2158 = vmul.f32 %v2147, %v2152
      %v2159 = vmul.f32 %v2149, %v2153
      %2160 = vst [vmem:[#allocation2 + $0x100] sm:$0xff] %v2156
      %2161 = vst [vmem:[#allocation2 + $0x108] sm:$0xff] %v2157
      %2162 = vst [vmem:[#allocation2 + $0x110] sm:$0xff] %v2158
      %2163 = vst [vmem:[#allocation2 + $0x118] sm:$0xff] %v2159
      %v2164 = vld [vmem:[%s9] sm:$0xff]
      %v2165 = vld [vmem:[%s9 + $0x8] sm:$0xff]
      %v2166 = vld [vmem:[%s9 + $0x10] sm:$0xff]
      %v2167 = vld [vmem:[%s9 + $0x18] sm:$0xff]
      %v2168 = vld [vmem:[#allocation2] sm:$0xff]
      %v2169 = vld [vmem:[#allocation2 + $0x8] sm:$0xff]
      %v2170 = vld [vmem:[#allocation2 + $0x10] sm:$0xff]
      %v2171 = vld [vmem:[#allocation2 + $0x18] sm:$0xff]
      %v2172 = vld [vmem:[#allocation2 + $0x20] sm:$0xff]
      %v2173 = vld [vmem:[#allocation2 + $0x28] sm:$0xff]
      %v2174 = vld [vmem:[#allocation2 + $0x30] sm:$0xff]
      %v2175 = vld [vmem:[#allocation2 + $0x38] sm:$0xff]
      %v2176 = vld [vmem:[#allocation2 + $0x40] sm:$0xff]
      %v2177 = vld [vmem:[#allocation2 + $0x48] sm:$0xff]
      %v2178 = vld [vmem:[#allocation2 + $0x50] sm:$0xff]
      %v2179 = vld [vmem:[#allocation2 + $0x58] sm:$0xff]
      %v2180 = vld [vmem:[#allocation2 + $0x60] sm:$0xff]
      %v2181 = vld [vmem:[#allocation2 + $0x68] sm:$0xff]
      %v2182 = vld [vmem:[#allocation2 + $0x70] sm:$0xff]
      %v2183 = vld [vmem:[#allocation2 + $0x78] sm:$0xff]
      %v2184 = vld [vmem:[#allocation2 + $0x80] sm:$0xff]
      %v2185 = vld [vmem:[#allocation2 + $0x88] sm:$0xff]
      %v2186 = vld [vmem:[#allocation2 + $0x90] sm:$0xff]
      %v2187 = vld [vmem:[#allocation2 + $0x98] sm:$0xff]
      %v2188 = vld [vmem:[#allocation2 + $0xa0] sm:$0xff]
      %v2189 = vld [vmem:[#allocation2 + $0xa8] sm:$0xff]
      %v2190 = vld [vmem:[#allocation2 + $0xb0] sm:$0xff]
      %v2191 = vld [vmem:[#allocation2 + $0xb8] sm:$0xff]
      %v2192 = vld [vmem:[#allocation2 + $0xc0] sm:$0xff]
      %v2193 = vld [vmem:[#allocation2 + $0xc8] sm:$0xff]
      %v2194 = vld [vmem:[#allocation2 + $0xd0] sm:$0xff]
      %v2195 = vld [vmem:[#allocation2 + $0xd8] sm:$0xff]
      %v2196 = vld [vmem:[#allocation2 + $0xe0] sm:$0xff]
      %v2197 = vld [vmem:[#allocation2 + $0xe8] sm:$0xff]
      %v2198 = vld [vmem:[#allocation2 + $0xf0] sm:$0xff]
      %v2199 = vld [vmem:[#allocation2 + $0xf8] sm:$0xff]
      %v2200 = vld [vmem:[#allocation2 + $0x100] sm:$0xff]
      %v2201 = vld [vmem:[#allocation2 + $0x108] sm:$0xff]
      %v2202 = vld [vmem:[#allocation2 + $0x110] sm:$0xff]
      %v2203 = vld [vmem:[#allocation2 + $0x118] sm:$0xff]
      %v2204 = vld [vmem:[%s10] sm:$0xff]
      %v2205 = vld [vmem:[%s10 + $0x8] sm:$0xff]
      %2207 = vset.pattern.permute.xlu0 0
      %2208 = vperm.xlu0 %2207, %v2204
      %v2209 = vpop.permute.xlu0 %2208
      %2212 = vset.pattern.permute.xlu0 0
      %2213 = vperm.xlu0 %2212, %v2205
      %v2214 = vpop.permute.xlu0 %2213
      %v2217 = vsel %vm1085, %v2165, 0
      %v2220 = vsel %vm1085, %v2167, 0
      %2222 = vmatpush.msra.mxu0 %v2198
      %2223 = vmatpush.msra.mxu0 %v2196
      %2224 = vmatpush.msra.mxu0 %v2194
      %2225 = vmatpush.msra.mxu0 %v2192
      %2226 = vmatpush.msra.mxu0 %v2190
      %2227 = vmatpush.msra.mxu0 %v2188
      %2228 = vmatpush.msra.mxu0 %v2186
      %2229 = vmatpush.msra.mxu0 %v2184
      %2230 = vmatpush.msra.mxu0 %v2182
      %2231 = vmatpush.msra.mxu0 %v2180
      %2232 = vmatpush.msra.mxu0 %v2178
      %2233 = vmatpush.msra.mxu0 %v2176
      %2234 = vmatpush.msra.mxu0 %v2174
      %2235 = vmatpush.msra.mxu0 %v2172
      %2236 = vmatpush.msra.mxu0 %v2170
      %2237 = vmatpush.msra.mxu0 %v2168
      %2238 = vmatmul.f32.gmra.mxu0 %v2164
      %v2239 = vpop.f32.mrf.mxu0
      %v2240 = vadd.f32 %v2209, %v2239
      %2241 = vmatmul.f32.gmra.mxu0 %v2166
      %v2242 = vpop.f32.mrf.mxu0
      %v2243 = vadd.f32 %v2214, %v2242
      %2244 = vdwg.mxu0
      %2245 = vmatpush.msra.mxu0 0.0
      %2246 = vmatpush.msra.mxu0 0.0
      %2247 = vmatpush.msra.mxu0 0.0
      %2248 = vmatpush.msra.mxu0 0.0
      %2249 = vmatpush.msra.mxu0 0.0
      %2250 = vmatpush.msra.mxu0 0.0
      %2251 = vmatpush.msra.mxu0 0.0
      %2252 = vmatpush.msra.mxu0 0.0
      %2253 = vmatpush.msra.mxu0 0.0
      %2254 = vmatpush.msra.mxu0 0.0
      %2255 = vmatpush.msra.mxu0 0.0
      %2256 = vmatpush.msra.mxu0 0.0
      %2257 = vmatpush.msra.mxu0 0.0
      %2258 = vmatpush.msra.mxu0 0.0
      %2259 = vmatpush.msra.mxu0 %v2202
      %2260 = vmatpush.msra.mxu0 %v2200
      %2261 = vmatmul.f32.gmra.mxu0 %v2217
      %v2262 = vpop.f32.mrf.mxu0
      %v2263 = vadd.f32 %v2240, %v2262
      %2264 = vmatmul.f32.gmra.mxu0 %v2220
      %v2265 = vpop.f32.mrf.mxu0
      %v2266 = vadd.f32 %v2243, %v2265
      %2267 = vdwg.mxu0
      %2268 = vmatpush.msra.mxu0 %v2199
      %2269 = vmatpush.msra.mxu0 %v2197
      %2270 = vmatpush.msra.mxu0 %v2195
      %2271 = vmatpush.msra.mxu0 %v2193
      %2272 = vmatpush.msra.mxu0 %v2191
      %2273 = vmatpush.msra.mxu0 %v2189
      %2274 = vmatpush.msra.mxu0 %v2187
      %2275 = vmatpush.msra.mxu0 %v2185
      %2276 = vmatpush.msra.mxu0 %v2183
      %2277 = vmatpush.msra.mxu0 %v2181
      %2278 = vmatpush.msra.mxu0 %v2179
      %2279 = vmatpush.msra.mxu0 %v2177
      %2280 = vmatpush.msra.mxu0 %v2175
      %2281 = vmatpush.msra.mxu0 %v2173
      %2282 = vmatpush.msra.mxu0 %v2171
      %2283 = vmatpush.msra.mxu0 %v2169
      %2284 = vmatmul.f32.gmra.mxu0 %v2164
      %v2285 = vpop.f32.mrf.mxu0
      %v2286 = vadd.f32 %v2209, %v2285
      %2287 = vmatmul.f32.gmra.mxu0 %v2166
      %v2288 = vpop.f32.mrf.mxu0
      %v2289 = vadd.f32 %v2214, %v2288
      %2290 = vdwg.mxu0
      %2291 = vmatpush.msra.mxu0 0.0
      %2292 = vmatpush.msra.mxu0 0.0
      %2293 = vmatpush.msra.mxu0 0.0
      %2294 = vmatpush.msra.mxu0 0.0
      %2295 = vmatpush.msra.mxu0 0.0
      %2296 = vmatpush.msra.mxu0 0.0
      %2297 = vmatpush.msra.mxu0 0.0
      %2298 = vmatpush.msra.mxu0 0.0
      %2299 = vmatpush.msra.mxu0 0.0
      %2300 = vmatpush.msra.mxu0 0.0
      %2301 = vmatpush.msra.mxu0 0.0
      %2302 = vmatpush.msra.mxu0 0.0
      %2303 = vmatpush.msra.mxu0 0.0
      %2304 = vmatpush.msra.mxu0 0.0
      %2305 = vmatpush.msra.mxu0 %v2203
      %2306 = vmatpush.msra.mxu0 %v2201
      %2307 = vmatmul.f32.gmra.mxu0 %v2217
      %v2308 = vpop.f32.mrf.mxu0
      %v2309 = vadd.f32 %v2286, %v2308
      %2310 = vmatmul.f32.gmra.mxu0 %v2220
      %v2311 = vpop.f32.mrf.mxu0
      %v2312 = vadd.f32 %v2289, %v2311
      %2313 = vdwg.mxu0
      %v2314 = vmax.f32 %v2263, 0.0
      %v2315 = vmax.f32 %v2309, 0.0
      %v2316 = vmax.f32 %v2266, 0.0
      %v2317 = vmax.f32 %v2312, 0.0
      %2318 = vrot.lane.b32.xlu0 %v2314, 17
      %v2319 = vpop.permute.xlu0 %2318
      %2320 = vrot.lane.b32.xlu0 %v2316, 17
      %v2321 = vpop.permute.xlu0 %2320
      %2322 = vrot.lane.b32.xlu0 %v2315, 17
      %v2323 = vpop.permute.xlu0 %2322
      %2324 = vrot.lane.b32.xlu0 %v2317, 17
      %v2325 = vpop.permute.xlu0 %2324
      %v2326 = vsel %vm533, %v2319, %v2323
      %v2327 = vsel %vm533, %v2321, %v2325
      %v2328 = vsel %vm533, %v2323, %v2319
      %v2329 = vsel %vm533, %v2325, %v2321
      %v2330 = vld [vmem:[%s13] ss:$8 sm:$0x3]
      %v2332 = vperm.slane %v2330, 0
      %v2333 = vperm.slane %v2330, 1
      %v2336 = vmul.f32 %v2328, %v2332
      %v2337 = vmul.f32 %v2326, %v2333
      %v2338 = vmul.f32 %v2329, %v2332
      %v2339 = vmul.f32 %v2327, %v2333
      %2340 = vst [vmem:[#allocation2] sm:$0xff] %v2336
      %2341 = vst [vmem:[#allocation2 + $0x8] sm:$0xff] %v2337
      %2342 = vst [vmem:[#allocation2 + $0x10] sm:$0xff] %v2338
      %2343 = vst [vmem:[#allocation2 + $0x18] sm:$0xff] %v2339
      %2344 = vrot.lane.b32.xlu0 %v2314, 16
      %v2345 = vpop.permute.xlu0 %2344
      %2346 = vrot.lane.b32.xlu0 %v2316, 16
      %v2347 = vpop.permute.xlu0 %2346
      %2348 = vrot.lane.b32.xlu0 %v2315, 16
      %v2349 = vpop.permute.xlu0 %2348
      %2350 = vrot.lane.b32.xlu0 %v2317, 16
      %v2351 = vpop.permute.xlu0 %2350
      %v2352 = vsel %vm560, %v2345, %v2349
      %v2353 = vsel %vm560, %v2347, %v2351
      %v2354 = vsel %vm560, %v2349, %v2345
      %v2355 = vsel %vm560, %v2351, %v2347
      %v2356 = vld [vmem:[%s563] ss:$8 sm:$0x3]
      %v2358 = vperm.slane %v2356, 0
      %v2359 = vperm.slane %v2356, 1
      %v2362 = vmul.f32 %v2354, %v2358
      %v2363 = vmul.f32 %v2352, %v2359
      %v2364 = vmul.f32 %v2355, %v2358
      %v2365 = vmul.f32 %v2353, %v2359
      %2366 = vst [vmem:[#allocation2 + $0x20] sm:$0xff] %v2362
      %2367 = vst [vmem:[#allocation2 + $0x28] sm:$0xff] %v2363
      %2368 = vst [vmem:[#allocation2 + $0x30] sm:$0xff] %v2364
      %2369 = vst [vmem:[#allocation2 + $0x38] sm:$0xff] %v2365
      %2370 = vrot.lane.b32.xlu0 %v2314, 15
      %v2371 = vpop.permute.xlu0 %2370
      %2372 = vrot.lane.b32.xlu0 %v2316, 15
      %v2373 = vpop.permute.xlu0 %2372
      %2374 = vrot.lane.b32.xlu0 %v2315, 15
      %v2375 = vpop.permute.xlu0 %2374
      %2376 = vrot.lane.b32.xlu0 %v2317, 15
      %v2377 = vpop.permute.xlu0 %2376
      %v2378 = vsel %vm584, %v2371, %v2375
      %v2379 = vsel %vm584, %v2373, %v2377
      %v2380 = vsel %vm584, %v2375, %v2371
      %v2381 = vsel %vm584, %v2377, %v2373
      %v2382 = vld [vmem:[%s587] ss:$8 sm:$0x3]
      %v2384 = vperm.slane %v2382, 0
      %v2385 = vperm.slane %v2382, 1
      %v2388 = vmul.f32 %v2380, %v2384
      %v2389 = vmul.f32 %v2378, %v2385
      %v2390 = vmul.f32 %v2381, %v2384
      %v2391 = vmul.f32 %v2379, %v2385
      %2392 = vst [vmem:[#allocation2 + $0x40] sm:$0xff] %v2388
      %2393 = vst [vmem:[#allocation2 + $0x48] sm:$0xff] %v2389
      %2394 = vst [vmem:[#allocation2 + $0x50] sm:$0xff] %v2390
      %2395 = vst [vmem:[#allocation2 + $0x58] sm:$0xff] %v2391
      %2396 = vrot.lane.b32.xlu0 %v2314, 1
      %v2397 = vpop.permute.xlu0 %2396
      %2398 = vrot.lane.b32.xlu0 %v2316, 1
      %v2399 = vpop.permute.xlu0 %2398
      %2400 = vrot.lane.b32.xlu0 %v2315, 1
      %v2401 = vpop.permute.xlu0 %2400
      %2402 = vrot.lane.b32.xlu0 %v2317, 1
      %v2403 = vpop.permute.xlu0 %2402
      %v2404 = vsel %vm608, %v2397, %v2401
      %v2405 = vsel %vm608, %v2399, %v2403
      %v2406 = vsel %vm608, %v2401, %v2397
      %v2407 = vsel %vm608, %v2403, %v2399
      %v2408 = vld [vmem:[%s611] ss:$8 sm:$0x3]
      %v2410 = vperm.slane %v2408, 0
      %v2411 = vperm.slane %v2408, 1
      %v2414 = vmul.f32 %v2406, %v2410
      %v2415 = vmul.f32 %v2404, %v2411
      %v2416 = vmul.f32 %v2407, %v2410
      %v2417 = vmul.f32 %v2405, %v2411
      %2418 = vst [vmem:[#allocation2 + $0x60] sm:$0xff] %v2414
      %2419 = vst [vmem:[#allocation2 + $0x68] sm:$0xff] %v2415
      %2420 = vst [vmem:[#allocation2 + $0x70] sm:$0xff] %v2416
      %2421 = vst [vmem:[#allocation2 + $0x78] sm:$0xff] %v2417
      %v2422 = vld [vmem:[%s628] ss:$8 sm:$0x3]
      %v2424 = vperm.slane %v2422, 0
      %v2425 = vperm.slane %v2422, 1
      %v2428 = vmul.f32 %v2314, %v2424
      %v2429 = vmul.f32 %v2315, %v2425
      %v2430 = vmul.f32 %v2316, %v2424
      %v2431 = vmul.f32 %v2317, %v2425
      %2432 = vst [vmem:[#allocation2 + $0x80] sm:$0xff] %v2428
      %2433 = vst [vmem:[#allocation2 + $0x88] sm:$0xff] %v2429
      %2434 = vst [vmem:[#allocation2 + $0x90] sm:$0xff] %v2430
      %2435 = vst [vmem:[#allocation2 + $0x98] sm:$0xff] %v2431
      %2436 = vrot.lane.b32.xlu0 %v2314, 127
      %v2437 = vpop.permute.xlu0 %2436
      %2438 = vrot.lane.b32.xlu0 %v2316, 127
      %v2439 = vpop.permute.xlu0 %2438
      %2440 = vrot.lane.b32.xlu0 %v2315, 127
      %v2441 = vpop.permute.xlu0 %2440
      %2442 = vrot.lane.b32.xlu0 %v2317, 127
      %v2443 = vpop.permute.xlu0 %2442
      %v2444 = vsel %vm638, %v2437, %v2441
      %v2445 = vsel %vm638, %v2439, %v2443
      %v2446 = vsel %vm638, %v2441, %v2437
      %v2447 = vsel %vm638, %v2443, %v2439
      %v2448 = vld [vmem:[%s641] ss:$8 sm:$0x3]
      %v2450 = vperm.slane %v2448, 0
      %v2451 = vperm.slane %v2448, 1
      %v2454 = vmul.f32 %v2444, %v2450
      %v2455 = vmul.f32 %v2446, %v2451
      %v2456 = vmul.f32 %v2445, %v2450
      %v2457 = vmul.f32 %v2447, %v2451
      %2458 = vst [vmem:[#allocation2 + $0xa0] sm:$0xff] %v2454
      %2459 = vst [vmem:[#allocation2 + $0xa8] sm:$0xff] %v2455
      %2460 = vst [vmem:[#allocation2 + $0xb0] sm:$0xff] %v2456
      %2461 = vst [vmem:[#allocation2 + $0xb8] sm:$0xff] %v2457
      %2462 = vrot.lane.b32.xlu0 %v2314, 113
      %v2463 = vpop.permute.xlu0 %2462
      %2464 = vrot.lane.b32.xlu0 %v2316, 113
      %v2465 = vpop.permute.xlu0 %2464
      %2466 = vrot.lane.b32.xlu0 %v2315, 113
      %v2467 = vpop.permute.xlu0 %2466
      %2468 = vrot.lane.b32.xlu0 %v2317, 113
      %v2469 = vpop.permute.xlu0 %2468
      %v2470 = vsel %vm662, %v2463, %v2467
      %v2471 = vsel %vm662, %v2465, %v2469
      %v2472 = vsel %vm662, %v2467, %v2463
      %v2473 = vsel %vm662, %v2469, %v2465
      %v2474 = vld [vmem:[%s665] ss:$8 sm:$0x3]
      %v2476 = vperm.slane %v2474, 0
      %v2477 = vperm.slane %v2474, 1
      %v2480 = vmul.f32 %v2470, %v2476
      %v2481 = vmul.f32 %v2472, %v2477
      %v2482 = vmul.f32 %v2471, %v2476
      %v2483 = vmul.f32 %v2473, %v2477
      %2484 = vst [vmem:[#allocation2 + $0xc0] sm:$0xff] %v2480
      %2485 = vst [vmem:[#allocation2 + $0xc8] sm:$0xff] %v2481
      %2486 = vst [vmem:[#allocation2 + $0xd0] sm:$0xff] %v2482
      %2487 = vst [vmem:[#allocation2 + $0xd8] sm:$0xff] %v2483
      %2488 = vrot.lane.b32.xlu0 %v2314, 112
      %v2489 = vpop.permute.xlu0 %2488
      %2490 = vrot.lane.b32.xlu0 %v2316, 112
      %v2491 = vpop.permute.xlu0 %2490
      %2492 = vrot.lane.b32.xlu0 %v2315, 112
      %v2493 = vpop.permute.xlu0 %2492
      %2494 = vrot.lane.b32.xlu0 %v2317, 112
      %v2495 = vpop.permute.xlu0 %2494
      %v2496 = vsel %vm686, %v2489, %v2493
      %v2497 = vsel %vm686, %v2491, %v2495
      %v2498 = vsel %vm686, %v2493, %v2489
      %v2499 = vsel %vm686, %v2495, %v2491
      %v2500 = vld [vmem:[%s689] ss:$8 sm:$0x3]
      %v2502 = vperm.slane %v2500, 0
      %v2503 = vperm.slane %v2500, 1
      %v2506 = vmul.f32 %v2496, %v2502
      %v2507 = vmul.f32 %v2498, %v2503
      %v2508 = vmul.f32 %v2497, %v2502
      %v2509 = vmul.f32 %v2499, %v2503
      %2510 = vst [vmem:[#allocation2 + $0xe0] sm:$0xff] %v2506
      %2511 = vst [vmem:[#allocation2 + $0xe8] sm:$0xff] %v2507
      %2512 = vst [vmem:[#allocation2 + $0xf0] sm:$0xff] %v2508
      %2513 = vst [vmem:[#allocation2 + $0xf8] sm:$0xff] %v2509
      %2514 = vrot.lane.b32.xlu0 %v2314, 111
      %v2515 = vpop.permute.xlu0 %2514
      %2516 = vrot.lane.b32.xlu0 %v2316, 111
      %v2517 = vpop.permute.xlu0 %2516
      %2518 = vrot.lane.b32.xlu0 %v2315, 111
      %v2519 = vpop.permute.xlu0 %2518
      %2520 = vrot.lane.b32.xlu0 %v2317, 111
      %v2521 = vpop.permute.xlu0 %2520
      %v2522 = vsel %vm710, %v2515, %v2519
      %v2523 = vsel %vm710, %v2517, %v2521
      %v2524 = vsel %vm710, %v2519, %v2515
      %v2525 = vsel %vm710, %v2521, %v2517
      %v2526 = vld [vmem:[%s713] ss:$8 sm:$0x3]
      %v2528 = vperm.slane %v2526, 0
      %v2529 = vperm.slane %v2526, 1
      %v2532 = vmul.f32 %v2522, %v2528
      %v2533 = vmul.f32 %v2524, %v2529
      %v2534 = vmul.f32 %v2523, %v2528
      %v2535 = vmul.f32 %v2525, %v2529
      %2536 = vst [vmem:[#allocation2 + $0x100] sm:$0xff] %v2532
      %2537 = vst [vmem:[#allocation2 + $0x108] sm:$0xff] %v2533
      %2538 = vst [vmem:[#allocation2 + $0x110] sm:$0xff] %v2534
      %2539 = vst [vmem:[#allocation2 + $0x118] sm:$0xff] %v2535
      %v2540 = vld [vmem:[%s11] sm:$0x3]
      %v2541 = vld [vmem:[#allocation2] sm:$0xff]
      %v2542 = vld [vmem:[#allocation2 + $0x8] sm:$0xff]
      %v2543 = vld [vmem:[#allocation2 + $0x10] sm:$0xff]
      %v2544 = vld [vmem:[#allocation2 + $0x18] sm:$0xff]
      %v2545 = vld [vmem:[#allocation2 + $0x20] sm:$0xff]
      %v2546 = vld [vmem:[#allocation2 + $0x28] sm:$0xff]
      %v2547 = vld [vmem:[#allocation2 + $0x30] sm:$0xff]
      %v2548 = vld [vmem:[#allocation2 + $0x38] sm:$0xff]
      %v2549 = vld [vmem:[#allocation2 + $0x40] sm:$0xff]
      %v2550 = vld [vmem:[#allocation2 + $0x48] sm:$0xff]
      %v2551 = vld [vmem:[#allocation2 + $0x50] sm:$0xff]
      %v2552 = vld [vmem:[#allocation2 + $0x58] sm:$0xff]
      %v2553 = vld [vmem:[#allocation2 + $0x60] sm:$0xff]
      %v2554 = vld [vmem:[#allocation2 + $0x68] sm:$0xff]
      %v2555 = vld [vmem:[#allocation2 + $0x70] sm:$0xff]
      %v2556 = vld [vmem:[#allocation2 + $0x78] sm:$0xff]
      %v2557 = vld [vmem:[#allocation2 + $0x80] sm:$0xff]
      %v2558 = vld [vmem:[#allocation2 + $0x88] sm:$0xff]
      %v2559 = vld [vmem:[#allocation2 + $0x90] sm:$0xff]
      %v2560 = vld [vmem:[#allocation2 + $0x98] sm:$0xff]
      %v2561 = vld [vmem:[#allocation2 + $0xa0] sm:$0xff]
      %v2562 = vld [vmem:[#allocation2 + $0xa8] sm:$0xff]
      %v2563 = vld [vmem:[#allocation2 + $0xb0] sm:$0xff]
      %v2564 = vld [vmem:[#allocation2 + $0xb8] sm:$0xff]
      %v2565 = vld [vmem:[#allocation2 + $0xc0] sm:$0xff]
      %v2566 = vld [vmem:[#allocation2 + $0xc8] sm:$0xff]
      %v2567 = vld [vmem:[#allocation2 + $0xd0] sm:$0xff]
      %v2568 = vld [vmem:[#allocation2 + $0xd8] sm:$0xff]
      %v2569 = vld [vmem:[#allocation2 + $0xe0] sm:$0xff]
      %v2570 = vld [vmem:[#allocation2 + $0xe8] sm:$0xff]
      %v2571 = vld [vmem:[#allocation2 + $0xf0] sm:$0xff]
      %v2572 = vld [vmem:[#allocation2 + $0xf8] sm:$0xff]
      %v2573 = vld [vmem:[#allocation2 + $0x100] sm:$0xff]
      %v2574 = vld [vmem:[#allocation2 + $0x108] sm:$0xff]
      %v2575 = vld [vmem:[#allocation2 + $0x110] sm:$0xff]
      %v2576 = vld [vmem:[#allocation2 + $0x118] sm:$0xff]
      %v2577 = vld [vmem:[#allocation4] sm:$0x1]
      %2579 = vset.pattern.permute.xlu0 0
      %2580 = vperm.xlu0 %2579, %v2577
      %v2581 = vpop.permute.xlu0 %2580
      %v2583 = vperm.slane %v2581, 0
      %v2585 = vperm.slane %v2540, 0
      %v2586 = vperm.slane %v2540, 1
      %v2588 = vsel %vm1085, %v2586, 0
      %2590 = vmatpush.msra.mxu0 %v2571
      %2591 = vmatpush.msra.mxu0 %v2569
      %2592 = vmatpush.msra.mxu0 %v2567
      %2593 = vmatpush.msra.mxu0 %v2565
      %2594 = vmatpush.msra.mxu0 %v2563
      %2595 = vmatpush.msra.mxu0 %v2561
      %2596 = vmatpush.msra.mxu0 %v2559
      %2597 = vmatpush.msra.mxu0 %v2557
      %2598 = vmatpush.msra.mxu0 %v2555
      %2599 = vmatpush.msra.mxu0 %v2553
      %2600 = vmatpush.msra.mxu0 %v2551
      %2601 = vmatpush.msra.mxu0 %v2549
      %2602 = vmatpush.msra.mxu0 %v2547
      %2603 = vmatpush.msra.mxu0 %v2545
      %2604 = vmatpush.msra.mxu0 %v2543
      %2605 = vmatpush.msra.mxu0 %v2541
      %2606 = vmatmul.f32.gmra.mxu0 %v2585
      %v2607 = vpop.f32.mrf.mxu0
      %v2608 = vadd.f32 %v2583, %v2607
      %2609 = vdwg.mxu0
      %2610 = vmatpush.msra.mxu0 0.0
      %2611 = vmatpush.msra.mxu0 0.0
      %2612 = vmatpush.msra.mxu0 0.0
      %2613 = vmatpush.msra.mxu0 0.0
      %2614 = vmatpush.msra.mxu0 0.0
      %2615 = vmatpush.msra.mxu0 0.0
      %2616 = vmatpush.msra.mxu0 0.0
      %2617 = vmatpush.msra.mxu0 0.0
      %2618 = vmatpush.msra.mxu0 0.0
      %2619 = vmatpush.msra.mxu0 0.0
      %2620 = vmatpush.msra.mxu0 0.0
      %2621 = vmatpush.msra.mxu0 0.0
      %2622 = vmatpush.msra.mxu0 0.0
      %2623 = vmatpush.msra.mxu0 0.0
      %2624 = vmatpush.msra.mxu0 %v2575
      %2625 = vmatpush.msra.mxu0 %v2573
      %2626 = vmatmul.f32.gmra.mxu0 %v2588
      %v2627 = vpop.f32.mrf.mxu0
      %v2628 = vadd.f32 %v2608, %v2627
      %2629 = vdwg.mxu0
      %2630 = vmatpush.msra.mxu0 %v2572
      %2631 = vmatpush.msra.mxu0 %v2570
      %2632 = vmatpush.msra.mxu0 %v2568
      %2633 = vmatpush.msra.mxu0 %v2566
      %2634 = vmatpush.msra.mxu0 %v2564
      %2635 = vmatpush.msra.mxu0 %v2562
      %2636 = vmatpush.msra.mxu0 %v2560
      %2637 = vmatpush.msra.mxu0 %v2558
      %2638 = vmatpush.msra.mxu0 %v2556
      %2639 = vmatpush.msra.mxu0 %v2554
      %2640 = vmatpush.msra.mxu0 %v2552
      %2641 = vmatpush.msra.mxu0 %v2550
      %2642 = vmatpush.msra.mxu0 %v2548
      %2643 = vmatpush.msra.mxu0 %v2546
      %2644 = vmatpush.msra.mxu0 %v2544
      %2645 = vmatpush.msra.mxu0 %v2542
      %2646 = vmatmul.f32.gmra.mxu0 %v2585
      %v2647 = vpop.f32.mrf.mxu0
      %v2648 = vadd.f32 %v2583, %v2647
      %2649 = vdwg.mxu0
      %2650 = vmatpush.msra.mxu0 0.0
      %2651 = vmatpush.msra.mxu0 0.0
      %2652 = vmatpush.msra.mxu0 0.0
      %2653 = vmatpush.msra.mxu0 0.0
      %2654 = vmatpush.msra.mxu0 0.0
      %2655 = vmatpush.msra.mxu0 0.0
      %2656 = vmatpush.msra.mxu0 0.0
      %2657 = vmatpush.msra.mxu0 0.0
      %2658 = vmatpush.msra.mxu0 0.0
      %2659 = vmatpush.msra.mxu0 0.0
      %2660 = vmatpush.msra.mxu0 0.0
      %2661 = vmatpush.msra.mxu0 0.0
      %2662 = vmatpush.msra.mxu0 0.0
      %2663 = vmatpush.msra.mxu0 0.0
      %2664 = vmatpush.msra.mxu0 %v2576
      %2665 = vmatpush.msra.mxu0 %v2574
      %2666 = vmatmul.f32.gmra.mxu0 %v2588
      %v2667 = vpop.f32.mrf.mxu0
      %v2668 = vadd.f32 %v2648, %v2667
      %2669 = vdwg.mxu0
      %v2672 = vrot.slane %v2668, 7
      %v2673 = vsel %vm547, %v2628, %v2672
      %2675 = vst.msk [vmem:[%s520] sm:$0x3] %vm553, %v2673
      %p2676 = scmp.lt.s32.totalorder %s31, 1
      %s2677 = scalar_select %p2676, %s31, 1
      %s2678 = smul.addr %s2677, 2
      %s2679 = scalar_lea.vmem %s16, %s2678
      // Predicated region
      $region85: #{cae_forward.1} parent=83 // pred_check
        %p2680 = pneg %p390
      $region86: #{cae_forward.1} parent=83 // pred_check_branch
        %2682 = sbr.rel (%p2680) target = $region88
      $region87: #{cae_forward.1} parent=83 // pred_region
        _
      $region88: #{cae_forward.1} parent=83 // pred_fallthru
        _
    $region84: #{cae_forward.1} parent=5 // pred_fallthru
      _
    %p2683 = scmp.le.s32.totalorder 2, %s26
    // Predicated region
    $region89: #{cae_forward.1} parent=5 // pred_check
      %p2684 = pneg %p2683
    $region90: #{cae_forward.1} parent=5 // pred_check_branch
      %2686 = sbr.rel (%p2684) target = $region92
    $region91: #{cae_forward.1} parent=5 // pred_region
      %s2687 = ssub.s32 %s26, 2
      // Predicated region
      $region93: #{cae_forward.1} parent=91 // pred_check
        %p2688 = pneg %p396
      $region94: #{cae_forward.1} parent=91 // pred_check_branch
        %2690 = sbr.rel (%p2688) target = $region96
      $region95: #{cae_forward.1} parent=91 // pred_region
        %p2691 = scmp.lt.s32.totalorder %s32, 1
        %s2692 = scalar_select %p2691, %s32, 1
        %s2693 = smul.addr %s2692, 2
        %s2694 = scalar_lea.vmem %s16, %s2693
      $region96: #{cae_forward.1} parent=91 // pred_fallthru
        _
    $region92: #{cae_forward.1} parent=5 // pred_fallthru
      _
  $region6: #{cae_forward.1} parent=0 // loop_footer
    %s30 = sadd.s32 1, %s26
  $region7: #{cae_forward.1} parent=0 // loop_footer_branch
    %25 = sbr.rel target = $region3
  $region8: #{cae_forward.1} parent=0 // loop_exit
    _

</llo_original>
